<compile_context>
chip_gen: v7x
topology: tpu7x:2x2x1
jax: 0.10.0
libtpu: 0.0.40
codegen_flags: <defaults>
</compile_context>

<pallas_src>
import functools

import jax
import jax.numpy as jnp
from jax.experimental import pallas as pl
from jax.experimental.pallas import tpu as pltpu

_W_DTYPE = jnp.bfloat16  # storage dtype for matmul weights (fp32 accumulation everywhere)


def _vmem_capacity_bytes():
    try:
        return int(pltpu.get_tpu_info().vmem_capacity_bytes)
    except Exception:
        return 64 * 1024 * 1024  # conservative (v7x per-TC VMEM)


_VMEM_CAP = _vmem_capacity_bytes()
_BIG_VMEM = _VMEM_CAP >= (100 << 20)          # v5e / v6e: 128 MiB; v7x: 64 MiB
_TM_TARGET = 512 if _BIG_VMEM else 256
_TN_TARGET = 512 if _BIG_VMEM else 256
_TK_TARGET = 1024 if _BIG_VMEM else 512
_VMEM_LIMIT = (64 << 20) if _BIG_VMEM else (40 << 20)


def _round_up(x, m):
    return (x + m - 1) // m * m


def _pick_tile(dim, target, base):
    """Largest tile <= target that is a multiple of `base` and divides `dim`;
    falls back to the full dim (legal: block == full array dim)."""
    if dim <= target:
        return dim
    t = (target // base) * base
    while t >= base:
        if dim % t == 0:
            return t
        t -= base
    return dim


def _heads_per_step(num_heads, head_dim):
    """Smallest head group whose width (hp*Dh) is a multiple of 128 lanes; else all heads
    (then hp*Dh == D == full dim, which is also a legal block width)."""
    for hp in range(1, num_heads + 1):
        if num_heads % hp == 0 and (hp * head_dim) % 128 == 0:
            return hp
    return num_heads


# ----------------------------- Pallas kernels ------------------------------

def _linear_kernel(*refs, activation, has_scale, has_residual, has_pro_ln, has_epi_ln,
                   pro_eps, epi_eps):
    refs = list(refs)
    x_ref = refs.pop(0)
    w_ref = refs.pop(0)
    b_ref = refs.pop(0)
    pg_ref = refs.pop(0) if has_pro_ln else None
    pb_ref = refs.pop(0) if has_pro_ln else None
    scale_ref = refs.pop(0) if has_scale else None
    res_ref = refs.pop(0) if has_residual else None
    eg_ref = refs.pop(0) if has_epi_ln else None
    eb_ref = refs.pop(0) if has_epi_ln else None
    o_ref, acc_ref = refs

    @pl.when(pl.program_id(2) == 0)
    def _():
        acc_ref[...] = jnp.zeros_like(acc_ref)

    x = x_ref[...].astype(jnp.float32)
    if has_pro_ln:
        # fused pre-norm LayerNorm (requires the full K per step; enforced by the wrapper)
        mean = jnp.mean(x, axis=-1, keepdims=True)
        xc = x - mean
        var = jnp.mean(xc * xc, axis=-1, keepdims=True)
        x = xc * jax.lax.rsqrt(var + pro_eps) * pg_ref[...].astype(jnp.float32) \
            + pb_ref[...].astype(jnp.float32)

    acc_ref[...] += jnp.dot(x.astype(jnp.bfloat16), w_ref[...].astype(jnp.bfloat16),
                            preferred_element_type=jnp.float32)

    @pl.when(pl.program_id(2) == pl.num_programs(2) - 1)
    def _():
        y = acc_ref[...] + b_ref[...].astype(jnp.float32)
        if activation == "gelu":
            # exact (erf) GELU to match torch.nn.functional.gelu default
            y = 0.5 * y * (1.0 + jax.lax.erf(y * 0.7071067811865476))
        if has_scale:                      # LayerScale
            y = y * scale_ref[...].astype(jnp.float32)
        if has_residual:                   # fused residual add
            y = y + res_ref[...].astype(jnp.float32)
        if has_epi_ln:
            # fused post-norm LayerNorm (requires the full N per step; enforced by wrapper)
            mean = jnp.mean(y, axis=-1, keepdims=True)
            yc = y - mean
            var = jnp.mean(yc * yc, axis=-1, keepdims=True)
            y = yc * jax.lax.rsqrt(var + epi_eps) * eg_ref[...].astype(jnp.float32) \
                + eb_ref[...].astype(jnp.float32)
        o_ref[...] = y.astype(o_ref.dtype)


def pallas_linear(x2d, w, b, activation=None, scale=None, residual=None,
                  ln_prologue=None, ln_epilogue=None):
    """y = [LN_epi]( act([LN_pro(x)] @ w + b) [* scale] [+ residual] ).  w is (in, out)."""
    M, K = x2d.shape
    N = w.shape[1]

    tm = min(_TM_TARGET, _round_up(M, 8))
    Mp = _round_up(M, tm)                         # pad M so tiles stay small and aligned
    tn = N if ln_epilogue is not None else _pick_tile(N, _TN_TARGET, 128)
    tk = K if ln_prologue is not None else _pick_tile(K, _TK_TARGET, 128)

    if Mp != M:
        x2d = jnp.pad(x2d, ((0, Mp - M), (0, 0)))
        if residual is not None:
            residual = jnp.pad(residual, ((0, Mp - M), (0, 0)))

    grid = (Mp // tm, N // tn, K // tk)

    in_specs = [
        pl.BlockSpec((tm, tk), lambda i, j, k: (i, k)),
        pl.BlockSpec((tk, tn), lambda i, j, k: (k, j)),
        pl.BlockSpec((1, tn), lambda i, j, k: (0, j)),
    ]
    args = [x2d, w, b.reshape(1, N)]
    if ln_prologue is not None:
        pg, pb, pro_eps = ln_prologue
        in_specs.append(pl.BlockSpec((1, tk), lambda i, j, k: (0, k)))
        in_specs.append(pl.BlockSpec((1, tk), lambda i, j, k: (0, k)))
        args += [pg.reshape(1, K), pb.reshape(1, K)]
    else:
        pro_eps = 0.0
    if scale is not None:
        in_specs.append(pl.BlockSpec((1, tn), lambda i, j, k: (0, j)))
        args.append(scale.reshape(1, N))
    if residual is not None:
        in_specs.append(pl.BlockSpec((tm, tn), lambda i, j, k: (i, j)))
        args.append(residual)
    if ln_epilogue is not None:
        eg, eb, epi_eps = ln_epilogue
        in_specs.append(pl.BlockSpec((1, tn), lambda i, j, k: (0, j)))
        in_specs.append(pl.BlockSpec((1, tn), lambda i, j, k: (0, j)))
        args += [eg.reshape(1, N), eb.reshape(1, N)]
    else:
        epi_eps = 0.0

    kernel = functools.partial(
        _linear_kernel, activation=activation,
        has_scale=scale is not None, has_residual=residual is not None,
        has_pro_ln=ln_prologue is not None, has_epi_ln=ln_epilogue is not None,
        pro_eps=pro_eps, epi_eps=epi_eps)

    out = pl.pallas_call(
        kernel,
        out_shape=jax.ShapeDtypeStruct((Mp, N), jnp.float32),
        grid=grid,
        in_specs=in_specs,
        out_specs=pl.BlockSpec((tm, tn), lambda i, j, k: (i, j)),
        scratch_shapes=[pltpu.VMEM((tm, tn), jnp.float32)],
        compiler_params=pltpu.CompilerParams(
            dimension_semantics=("parallel", "parallel", "arbitrary"),
            vmem_limit_bytes=_VMEM_LIMIT),
        cost_estimate=pl.CostEstimate(
            flops=2 * Mp * N * K,
            transcendentals=Mp * N if activation == "gelu" else 0,
            bytes_accessed=4 * Mp * K + 2 * K * N + 4 * Mp * N
                           + (4 * Mp * N if residual is not None else 0)),
    )(*args)
    return out if Mp == M else out[:M]


def _layernorm_kernel(x_ref, g_ref, b_ref, o_ref, *, eps):
    x = x_ref[...].astype(jnp.float32)
    mean = jnp.mean(x, axis=-1, keepdims=True)
    xc = x - mean
    var = jnp.mean(xc * xc, axis=-1, keepdims=True)
    y = xc * jax.lax.rsqrt(var + eps)
    o_ref[...] = (y * g_ref[...] + b_ref[...]).astype(o_ref.dtype)


def pallas_layernorm(x2d, gamma, beta, eps):
    M, D = x2d.shape
    tm = min(_TM_TARGET, _round_up(M, 8))
    Mp = _round_up(M, tm)
    if Mp != M:
        x2d = jnp.pad(x2d, ((0, Mp - M), (0, 0)))
    kernel = functools.partial(_layernorm_kernel, eps=eps)
    out = pl.pallas_call(
        kernel,
        out_shape=jax.ShapeDtypeStruct((Mp, D), jnp.float32),
        grid=(Mp // tm,),
        in_specs=[
            pl.BlockSpec((tm, D), lambda i: (i, 0)),
            pl.BlockSpec((1, D), lambda i: (0, 0)),
            pl.BlockSpec((1, D), lambda i: (0, 0)),
        ],
        out_specs=pl.BlockSpec((tm, D), lambda i: (i, 0)),
        compiler_params=pltpu.CompilerParams(
            dimension_semantics=("parallel",),
            vmem_limit_bytes=_VMEM_LIMIT),
        cost_estimate=pl.CostEstimate(
            flops=8 * Mp * D, transcendentals=Mp,
            bytes_accessed=4 * (2 * Mp * D + 2 * D)),
    )(x2d, gamma.reshape(1, D), beta.reshape(1, D))
    return out if Mp == M else out[:M]


def _mha_kernel(q_ref, k_ref, v_ref, *rest, scale, masked):
    # One (batch, head-group) tile per grid step.  q/k/v refs: (1, hp, S, Dh).
    if masked:
        mask_ref, o_ref = rest
    else:
        (o_ref,) = rest
    q = q_ref[0].astype(jnp.bfloat16)               # (hp, S, Dh)
    k = k_ref[0].astype(jnp.bfloat16)
    v = v_ref[0].astype(jnp.bfloat16)
    s = jnp.einsum("hqd,hkd->hqk", q, k,
                   preferred_element_type=jnp.float32) * scale      # (hp, S, S)
    if masked:
        # additive key mask built in-kernel from the (1, S) 0/1 mask (no (S, S) DMA);
        # -1e30 instead of finfo.min avoids -inf saturation before the max-subtraction
        s = s + (1.0 - mask_ref[0]) * (-1e30)
    s = s - jnp.max(s, axis=-1, keepdims=True)
    e = jnp.exp(s)
    p = (e / jnp.sum(e, axis=-1, keepdims=True)).astype(jnp.bfloat16)
    ctx = jnp.einsum("hqk,hkd->hqd", p, v,
                     preferred_element_type=jnp.float32)             # (hp, S, Dh)
    hp, _, dh = ctx.shape
    # write each head directly into its column slab of the (S, hp*Dh) output block
    for j in range(hp):
        o_ref[0, :, j * dh:(j + 1) * dh] = ctx[j].astype(o_ref.dtype)


def pallas_mha(qkv, key_mask, num_heads, head_dim):
    """qkv: (B, 3*H, S, Dh) laid out as [Q heads | K heads | V heads]; returns (B, S, D)."""
    # TODO(synk): for long sequences convert to a flash-style KV-tiled online softmax.
    B, _, S, Dh = qkv.shape
    H = num_heads
    D = H * Dh
    hp = _heads_per_step(H, Dh)
    n_groups = H // hp
    masked = key_mask is not None

    kernel = functools.partial(_mha_kernel, scale=Dh ** -0.5, masked=masked)
    in_specs = [
        pl.BlockSpec((1, hp, S, Dh), lambda b, g: (b, g, 0, 0)),                 # Q group
        pl.BlockSpec((1, hp, S, Dh), lambda b, g: (b, n_groups + g, 0, 0)),      # K group
        pl.BlockSpec((1, hp, S, Dh), lambda b, g: (b, 2 * n_groups + g, 0, 0)),  # V group
    ]
    args = [qkv, qkv, qkv]
    if masked:
        in_specs.append(pl.BlockSpec((1, 1, S), lambda b, g: (b, 0, 0)))
        args.append(key_mask)

    return pl.pallas_call(
        kernel,
        out_shape=jax.ShapeDtypeStruct((B, S, D), jnp.float32),
        grid=(B, n_groups),
        in_specs=in_specs,
        out_specs=pl.BlockSpec((1, S, hp * Dh), lambda b, g: (b, 0, g)),
        compiler_params=pltpu.CompilerParams(
            dimension_semantics=("parallel", "parallel"),
            vmem_limit_bytes=_VMEM_LIMIT),
        cost_estimate=pl.CostEstimate(
            flops=4 * B * H * S * S * Dh,
            transcendentals=B * H * S * S,
            bytes_accessed=4 * (3 * B * H * S * Dh + B * S * D) + (4 * B * S if masked else 0)),
    )(*args)


# ----------------------------- model (JAX glue + Pallas hot path) ----------

def attention_core(x, p, num_heads, key_mask=None, ln_prologue=None):
    """Fused (LN+)QKV projection + softmax attention; returns pre-out-proj context."""
    B, S, D = x.shape
    Dh = D // num_heads
    qkv = pallas_linear(x.reshape(B * S, D), p["wqkv"], p["bqkv"],
                        ln_prologue=ln_prologue)                       # (B*S, 3D)
    # one cheap XLA transpose so per-head Q/K/V tiles are DMA-selectable via BlockSpec
    qkv4 = qkv.reshape(B, S, 3 * num_heads, Dh).transpose(0, 2, 1, 3)  # (B, 3H, S, Dh)
    o = pallas_mha(qkv4, key_mask, num_heads, Dh)                      # (B, S, D)
    return o.reshape(B * S, D)


def visual_block(x, p, num_heads):
    # pre-norm ViT block: x = x + ls1*attn(LN(x)); x = x + ls2*mlp(LN(x))
    B, S, D = x.shape
    x2 = x.reshape(B * S, D)
    # LN1 fused into the QKV matmul prologue
    ctx = attention_core(x, p["attn"], num_heads, None,
                         ln_prologue=(p["norm1_g"], p["norm1_b"], 1e-6))
    # out-projection with fused LayerScale + residual
    x2 = pallas_linear(ctx, p["attn"]["wo"], p["attn"]["bo"], scale=p["ls1"], residual=x2)
    # LN2 fused into the MLP-in matmul prologue
    h1 = pallas_linear(x2, p["mlp"]["w1"], p["mlp"]["b1"], activation="gelu",
                       ln_prologue=(p["norm2_g"], p["norm2_b"], 1e-6))
    x2 = pallas_linear(h1, p["mlp"]["w2"], p["mlp"]["b2"], scale=p["ls2"], residual=x2)
    return x2.reshape(B, S, D)


def text_block(x, p, num_heads, key_mask):
    # BERT-style post-norm: x = LN(x + attn(x)); x = LN(x + mlp(x))  (dropout = identity)
    B, S, D = x.shape
    x2 = x.reshape(B * S, D)
    ctx = attention_core(x, p["attn"], num_heads, key_mask)
    # out-proj + residual with the post-norm LN fused into the epilogue
    x2 = pallas_linear(ctx, p["attn"]["wo"], p["attn"]["bo"], residual=x2,
                       ln_epilogue=(p["norm_attn_g"], p["norm_attn_b"], 1e-12))
    h1 = pallas_linear(x2, p["mlp"]["w1"], p["mlp"]["b1"], activation="gelu")
    x2 = pallas_linear(h1, p["mlp"]["w2"], p["mlp"]["b2"], residual=x2,
                       ln_epilogue=(p["norm_mlp_g"], p["norm_mlp_b"], 1e-12))
    return x2.reshape(B, S, D)


def image_encoder_forward(images, p, cfg):
    # images: NCHW (B, 3, H, W)
    B = images.shape[0]
    ps, D = cfg["patch_size"], cfg["dim"]
    Hp = cfg["image_size"] // ps
    seq = Hp * Hp
    # im2col: non-overlapping patches, flattened in (channel, kh, kw) order == conv weight order
    x = images.reshape(B, 3, Hp, ps, Hp, ps).transpose(0, 2, 4, 1, 3, 5)
    x = x.reshape(B * seq, 3 * ps * ps)
    # patch-embed matmul with the positional-embedding add fused into the epilogue
    pos = jnp.broadcast_to(p["pos_embed"], (B, seq, D)).reshape(B * seq, D)
    x = pallas_linear(x, p["patch_w"], p["patch_b"], residual=pos).reshape(B, seq, D)
    cls = jnp.broadcast_to(p["cls_token"], (B, 1, D))
    x = jnp.concatenate([cls, x], axis=1)
    for bp in p["blocks"]:
        x = visual_block(x, bp, cfg["num_heads"])
    S = x.shape[1]
    features = pallas_layernorm(x.reshape(-1, D), p["norm_g"], p["norm_b"], 1e-6).reshape(B, S, D)
    pooled = features[:, 0] if cfg["pooling"] == "cls" else features.mean(axis=1)
    emb = pallas_linear(pooled, p["proj_w"], jnp.zeros((cfg["embedding_dim"],), jnp.float32))
    return features, emb


def text_encoder_forward(input_ids, attention_mask, p, cfg):
    B, S = input_ids.shape
    D = cfg["dim"]
    # embed_text: word + positional ('bert' position ids = arange), then LayerNorm
    x = p["word_emb"][input_ids] + p["pos_emb"][jnp.arange(S)][None]
    x = pallas_layernorm(x.reshape(-1, D), p["ln_g"], p["ln_b"], 1e-12).reshape(B, S, D)
    # key mask (B, 1, S); the additive mask bias is built inside the MHA kernel
    key_mask = attention_mask.astype(jnp.float32)[:, None, :]
    for bp in p["blocks"]:
        x = text_block(x, bp, cfg["num_heads"], key_mask)
    features = x
    pooled = features[:, 0]  # pooling == 'cls'
    emb = pallas_linear(pooled, p["proj_w"], jnp.zeros((cfg["embedding_dim"],), jnp.float32))
    return features, emb


def vlm_forward(images, texts, params, cfg):
    _, embs_imgs = image_encoder_forward(images, params["image"], cfg["image_encoder"])
    _, embs_txts = text_encoder_forward(texts["input_ids"], texts["attention_mask"],
                                        params["text"], cfg["text_encoder"])
    return embs_imgs, embs_txts


# ----------------------------- deterministic init --------------------------

def init_params(key, img_cfg, txt_cfg):
    keys = iter(jax.random.split(key, 512))

    def nrm(shape, s=0.02):
        return (jax.random.normal(next(keys), shape, jnp.float32) * s).astype(jnp.float32)

    def wmat(shape, s=0.02):
        # matmul weights stored in bf16 (MXU-native); fp32 accumulation inside kernels
        return nrm(shape, s).astype(_W_DTYPE)

    def init_attn(D):
        # separate q/k/v params (like torch), concatenated once into a fused QKV weight
        wq, wk, wv = wmat((D, D)), wmat((D, D)), wmat((D, D))
        bq, bk, bv = nrm((D,)), nrm((D,)), nrm((D,))
        return {"wqkv": jnp.concatenate([wq, wk, wv], axis=1),
                "bqkv": jnp.concatenate([bq, bk, bv], axis=0),
                "wo": wmat((D, D)), "bo": nrm((D,))}

    def init_mlp(D, f=4):
        return {"w1": wmat((D, D * f)), "b1": nrm((D * f,)),
                "w2": wmat((D * f, D)), "b2": nrm((D,))}

    # image encoder
    D = img_cfg["dim"]
    ps = img_cfg["patch_size"]
    seq_len = (img_cfg["image_size"] // ps) ** 2
    img = {
        "patch_w": wmat((3 * ps * ps, D)),
        "patch_b": nrm((D,)),
        "pos_embed": nrm((1, seq_len, D)),
        "cls_token": jnp.zeros((1, 1, D), jnp.float32),
        "norm_g": jnp.ones((D,), jnp.float32),
        "norm_b": jnp.zeros((D,), jnp.float32),
        "proj_w": wmat((D, img_cfg["embedding_dim"])),
        "blocks": [],
    }
    for _ in range(img_cfg["num_layers"]):
        img["blocks"].append({
            "norm1_g": jnp.ones((D,), jnp.float32), "norm1_b": jnp.zeros((D,), jnp.float32),
            "attn": init_attn(D),
            "ls1": jnp.full((D,), 1e-5, jnp.float32),
            "norm2_g": jnp.ones((D,), jnp.float32), "norm2_b": jnp.zeros((D,), jnp.float32),
            "mlp": init_mlp(D),
            "ls2": jnp.full((D,), 1e-5, jnp.float32),
        })

    # text encoder
    D = txt_cfg["dim"]
    word_emb = nrm((txt_cfg["vocab_size"], D))
    word_emb = word_emb.at[txt_cfg["padding_idx"]].set(0.0)  # nn.Embedding padding_idx row
    txt = {
        "word_emb": word_emb,
        "pos_emb": nrm((txt_cfg["max_position_embeddings"], D)),
        "ln_g": jnp.ones((D,), jnp.float32), "ln_b": jnp.zeros((D,), jnp.float32),
        "proj_w": wmat((D, txt_cfg["embedding_dim"])),
        "blocks": [],
    }
    for _ in range(txt_cfg["num_layers"]):
        # multimodal_layers_ids == () -> no cross-attention blocks are used in forward()
        txt["blocks"].append({
            "norm_attn_g": jnp.ones((D,), jnp.float32), "norm_attn_b": jnp.zeros((D,), jnp.float32),
            "attn": init_attn(D),
            "norm_mlp_g": jnp.ones((D,), jnp.float32), "norm_mlp_b": jnp.zeros((D,), jnp.float32),
            "mlp": init_mlp(D),
        })
    return {"image": img, "text": txt}


# ----------------------------- main -----------------------------------------

if __name__ == "__main__":
    cfg = {
        "image_encoder": dict(dim=32, patch_size=8, image_size=16, num_layers=2,
                              num_heads=4, embedding_dim=32, pooling="cls"),
        "text_encoder": dict(model_type="bert", dim=32, context_dim=32, vocab_size=64,
                             padding_idx=0, num_layers=2, num_heads=4, embedding_dim=32,
                             multimodal_layers_ids=(), head_one_neuron=False,
                             pooling="cls", max_position_embeddings=8, dropout_prob=0.0),
    }
    # TODO(synk): tokenizer / PIL image preprocessing (preprocess_text / preprocess_image)
    # are host-side data plumbing and have no Pallas equivalent; inputs are pre-tokenized.

    root = jax.random.PRNGKey(0)
    k_params, k_img, k_ids = jax.random.split(root, 3)
    params = init_params(k_params, cfg["image_encoder"], cfg["text_encoder"])

    images = jax.random.normal(k_img, (2, 3, 16, 16), jnp.float32)  # NCHW, like PyTorch
    input_ids = jax.random.randint(k_ids, (2, 8), 1, cfg["text_encoder"]["vocab_size"]).astype(jnp.int32)
    attention_mask = jnp.array([[1, 1, 1, 1, 1, 0, 0, 0],
                                [1, 1, 1, 1, 1, 1, 1, 1]], jnp.int32)
    texts = {"input_ids": input_ids, "attention_mask": attention_mask}

    fwd = jax.jit(lambda imgs, ids, am, prms: vlm_forward(
        imgs, {"input_ids": ids, "attention_mask": am}, prms, cfg))
    embs_imgs, embs_txts = fwd(images, input_ids, attention_mask, params)
    jax.block_until_ready((embs_imgs, embs_txts))
    assert embs_imgs.shape == (2, cfg["image_encoder"]["embedding_dim"])
    assert embs_txts.shape == (2, cfg["text_encoder"]["embedding_dim"])
    print("KERNEL_OK")
</pallas_src>

<mosaic_0001>
module attributes {stable_mosaic.version = 11 : i64} {
  func.func @_linear_kernel(%arg0: i32, %arg1: i32, %arg2: i32, %arg3: memref<16x32xf32, #tpu.memory_space<vmem>>, %arg4: memref<32x96xbf16, #tpu.memory_space<vmem>>, %arg5: memref<1x96xf32, #tpu.memory_space<vmem>>, %arg6: memref<16x96xf32, #tpu.memory_space<vmem>>, %arg7: memref<16x96xf32, #tpu.memory_space<vmem>>) attributes {dimension_semantics = [#tpu.dimension_semantics<parallel>, #tpu.dimension_semantics<parallel>, #tpu.dimension_semantics<arbitrary>], iteration_bounds = array<i64: 1, 1, 1>, scalar_prefetch = 0 : i64, scratch_operands = 1 : i64, tpu.core_type = #tpu.core_type<tc>, window_params = [{transform_indices = @transform_0, window_bounds = array<i64: 16, 32>}, {transform_indices = @transform_1, window_bounds = array<i64: 32, 96>}, {transform_indices = @transform_2, window_bounds = array<i64: 1, 96>}, {transform_indices = @transform_3, window_bounds = array<i64: 16, 96>}]} {
    %c0_i32 = arith.constant 0 : i32
    %0 = arith.cmpi eq, %arg2, %c0_i32 : i32
    %1 = arith.extui %0 : i1 to i32
    %c0_i32_0 = arith.constant 0 : i32
    %2 = arith.cmpi ne, %1, %c0_i32_0 : i32
    scf.if %2 {
      %cst_10 = arith.constant 0.000000e+00 : f32
      %13 = vector.broadcast %cst_10 : f32 to vector<16x96xf32>
      %c0_11 = arith.constant 0 : index
      %c0_12 = arith.constant 0 : index
      %14 = vector.load %arg7[%c0_11, %c0_12] : memref<16x96xf32, #tpu.memory_space<vmem>>, vector<16x96xf32>
      tpu.vector_store %arg7[%c0_11, %c0_12], %13 {strides = array<i32>} : memref<16x96xf32, #tpu.memory_space<vmem>>, vector<16x96xf32>,
    } else {
    }
    %c0 = arith.constant 0 : index
    %c0_1 = arith.constant 0 : index
    %3 = vector.load %arg3[%c0, %c0_1] : memref<16x32xf32, #tpu.memory_space<vmem>>, vector<16x32xf32>
    %c0_2 = arith.constant 0 : index
    %c0_3 = arith.constant 0 : index
    %4 = vector.load %arg7[%c0_2, %c0_3] : memref<16x96xf32, #tpu.memory_space<vmem>>, vector<16x96xf32>
    %5 = arith.truncf %3 : vector<16x32xf32> to vector<16x32xbf16>
    %c0_4 = arith.constant 0 : index
    %c0_5 = arith.constant 0 : index
    %6 = vector.load %arg4[%c0_4, %c0_5] : memref<32x96xbf16, #tpu.memory_space<vmem>>, vector<32x96xbf16>
    %cst = arith.constant dense<0.000000e+00> : vector<16x96xf32>
    %7 = tpu.matmul %5, %6, %cst {dimension_numbers = #tpu.dot_dimension_numbers<[1], [0], [0], [1], [0, 0, 1, 1], [], []>} : vector<16x32xbf16>, vector<32x96xbf16>, vector<16x96xf32> -> vector<16x96xf32>
    %8 = arith.addf %4, %7 : vector<16x96xf32>
    %c0_6 = arith.constant 0 : index
    %c0_7 = arith.constant 0 : index
    %9 = vector.load %arg7[%c0_6, %c0_7] : memref<16x96xf32, #tpu.memory_space<vmem>>, vector<16x96xf32>
    tpu.vector_store %arg7[%c0_6, %c0_7], %8 {strides = array<i32>} : memref<16x96xf32, #tpu.memory_space<vmem>>, vector<16x96xf32>,
    %c0_i32_8 = arith.constant 0 : i32
    %10 = arith.cmpi eq, %arg2, %c0_i32_8 : i32
    %11 = arith.extui %10 : i1 to i32
    %c0_i32_9 = arith.constant 0 : i32
    %12 = arith.cmpi ne, %11, %c0_i32_9 : i32
    scf.if %12 {
      %c0_10 = arith.constant 0 : index
      %c0_11 = arith.constant 0 : index
      %13 = vector.load %arg7[%c0_10, %c0_11] : memref<16x96xf32, #tpu.memory_space<vmem>>, vector<16x96xf32>
      %c0_12 = arith.constant 0 : index
      %c0_13 = arith.constant 0 : index
      %14 = vector.load %arg5[%c0_12, %c0_13] : memref<1x96xf32, #tpu.memory_space<vmem>>, vector<1x96xf32>
      %15 = vector.broadcast %14 : vector<1x96xf32> to vector<16x96xf32>
      %16 = arith.addf %13, %15 : vector<16x96xf32>
      %c0_14 = arith.constant 0 : index
      %c0_15 = arith.constant 0 : index
      %17 = vector.load %arg6[%c0_14, %c0_15] : memref<16x96xf32, #tpu.memory_space<vmem>>, vector<16x96xf32>
      tpu.vector_store %arg6[%c0_14, %c0_15], %16 {strides = array<i32>} : memref<16x96xf32, #tpu.memory_space<vmem>>, vector<16x96xf32>,
    } else {
    }
    return
  }
  func.func @transform_0(%arg0: i32, %arg1: i32, %arg2: i32) -> (i32, i32) {
    %c0_i32 = arith.constant 0 : i32
    return %arg0, %arg2 : i32, i32
  }
  func.func @transform_1(%arg0: i32, %arg1: i32, %arg2: i32) -> (i32, i32) {
    %c0_i32 = arith.constant 0 : i32
    return %arg2, %arg1 : i32, i32
  }
  func.func @transform_2(%arg0: i32, %arg1: i32, %arg2: i32) -> (i32, i32) {
    %c0_i32 = arith.constant 0 : i32
    %c0_i32_0 = arith.constant 0 : i32
    return %c0_i32, %arg1 : i32, i32
  }
  func.func @transform_3(%arg0: i32, %arg1: i32, %arg2: i32) -> (i32, i32) {
    %c0_i32 = arith.constant 0 : i32
    return %arg0, %arg1 : i32, i32
  }
}

module attributes {stable_mosaic.version = 11 : i64} {
  func.func @_layernorm_kernel(%arg0: i32, %arg1: memref<16x32xf32, #tpu.memory_space<vmem>>, %arg2: memref<1x32xf32, #tpu.memory_space<vmem>>, %arg3: memref<1x32xf32, #tpu.memory_space<vmem>>, %arg4: memref<16x32xf32, #tpu.memory_space<vmem>>) attributes {dimension_semantics = [#tpu.dimension_semantics<parallel>], iteration_bounds = array<i64: 1>, scalar_prefetch = 0 : i64, scratch_operands = 0 : i64, tpu.core_type = #tpu.core_type<tc>, window_params = [{transform_indices = @transform_0, window_bounds = array<i64: 16, 32>}, {pipeline_mode = #tpu.pipeline_mode<synchronous>, transform_indices = @transform_1, window_bounds = array<i64: 1, 32>}, {pipeline_mode = #tpu.pipeline_mode<synchronous>, transform_indices = @transform_2, window_bounds = array<i64: 1, 32>}, {transform_indices = @transform_3, window_bounds = array<i64: 16, 32>}]} {
    %c0 = arith.constant 0 : index
    %c0_0 = arith.constant 0 : index
    %0 = vector.load %arg1[%c0, %c0_0] : memref<16x32xf32, #tpu.memory_space<vmem>>, vector<16x32xf32>
    %cst = arith.constant dense<0.000000e+00> : vector<16xf32>
    %1 = vector.multi_reduction <add>, %0, %cst [1] : vector<16x32xf32> to vector<16xf32>
    %2 = vector.shape_cast %1 : vector<16xf32> to vector<16x1xf32>
    %cst_1 = arith.constant 3.200000e+01 : f32
    %3 = vector.broadcast %cst_1 : f32 to vector<16x1xf32>
    %4 = arith.divf %2, %3 : vector<16x1xf32>
    %5 = vector.broadcast %4 : vector<16x1xf32> to vector<16x32xf32>
    %6 = arith.subf %0, %5 : vector<16x32xf32>
    %7 = arith.mulf %6, %6 : vector<16x32xf32>
    %cst_2 = arith.constant dense<0.000000e+00> : vector<16xf32>
    %8 = vector.multi_reduction <add>, %7, %cst_2 [1] : vector<16x32xf32> to vector<16xf32>
    %9 = vector.shape_cast %8 : vector<16xf32> to vector<16x1xf32>
    %cst_3 = arith.constant 3.200000e+01 : f32
    %10 = vector.broadcast %cst_3 : f32 to vector<16x1xf32>
    %11 = arith.divf %9, %10 : vector<16x1xf32>
    %cst_4 = arith.constant 9.99999996E-13 : f32
    %12 = vector.broadcast %cst_4 : f32 to vector<16x1xf32>
    %13 = arith.addf %11, %12 : vector<16x1xf32>
    %14 = math.rsqrt %13 : vector<16x1xf32>
    %15 = vector.broadcast %14 : vector<16x1xf32> to vector<16x32xf32>
    %16 = arith.mulf %6, %15 : vector<16x32xf32>
    %c0_5 = arith.constant 0 : index
    %c0_6 = arith.constant 0 : index
    %17 = vector.load %arg2[%c0_5, %c0_6] : memref<1x32xf32, #tpu.memory_space<vmem>>, vector<1x32xf32>
    %18 = vector.broadcast %17 : vector<1x32xf32> to vector<16x32xf32>
    %19 = arith.mulf %16, %18 : vector<16x32xf32>
    %c0_7 = arith.constant 0 : index
    %c0_8 = arith.constant 0 : index
    %20 = vector.load %arg3[%c0_7, %c0_8] : memref<1x32xf32, #tpu.memory_space<vmem>>, vector<1x32xf32>
    %21 = vector.broadcast %20 : vector<1x32xf32> to vector<16x32xf32>
    %22 = arith.addf %19, %21 : vector<16x32xf32>
    %c0_9 = arith.constant 0 : index
    %c0_10 = arith.constant 0 : index
    %23 = vector.load %arg4[%c0_9, %c0_10] : memref<16x32xf32, #tpu.memory_space<vmem>>, vector<16x32xf32>
    tpu.vector_store %arg4[%c0_9, %c0_10], %22 {strides = array<i32>} : memref<16x32xf32, #tpu.memory_space<vmem>>, vector<16x32xf32>,
    return
  }
  func.func @transform_0(%arg0: i32) -> (i32, i32) {
    %c0_i32 = arith.constant 0 : i32
    %c0_i32_0 = arith.constant 0 : i32
    return %arg0, %c0_i32 : i32, i32
  }
  func.func @transform_1(%arg0: i32) -> (i32, i32) {
    %c0_i32 = arith.constant 0 : i32
    %c0_i32_0 = arith.constant 0 : i32
    %c0_i32_1 = arith.constant 0 : i32
    return %c0_i32, %c0_i32_0 : i32, i32
  }
  func.func @transform_2(%arg0: i32) -> (i32, i32) {
    %c0_i32 = arith.constant 0 : i32
    %c0_i32_0 = arith.constant 0 : i32
    %c0_i32_1 = arith.constant 0 : i32
    return %c0_i32, %c0_i32_0 : i32, i32
  }
  func.func @transform_3(%arg0: i32) -> (i32, i32) {
    %c0_i32 = arith.constant 0 : i32
    %c0_i32_0 = arith.constant 0 : i32
    return %arg0, %c0_i32 : i32, i32
  }
}

module attributes {stable_mosaic.version = 11 : i64} {
  func.func @_mha_kernel(%arg0: i32, %arg1: i32, %arg2: memref<1x4x8x8xf32, #tpu.memory_space<vmem>>, %arg3: memref<1x4x8x8xf32, #tpu.memory_space<vmem>>, %arg4: memref<1x4x8x8xf32, #tpu.memory_space<vmem>>, %arg5: memref<1x1x8xf32, #tpu.memory_space<vmem>>, %arg6: memref<1x8x32xf32, #tpu.memory_space<vmem>>) attributes {dimension_semantics = [#tpu.dimension_semantics<parallel>, #tpu.dimension_semantics<parallel>], iteration_bounds = array<i64: 2, 1>, scalar_prefetch = 0 : i64, scratch_operands = 0 : i64, tpu.core_type = #tpu.core_type<tc>, window_params = [{transform_indices = @transform_0, window_bounds = array<i64: 1, 4, 8, 8>}, {transform_indices = @transform_1, window_bounds = array<i64: 1, 4, 8, 8>}, {transform_indices = @transform_2, window_bounds = array<i64: 1, 4, 8, 8>}, {transform_indices = @transform_3, window_bounds = array<i64: 1, 1, 8>}, {transform_indices = @transform_4, window_bounds = array<i64: 1, 8, 32>}]} {
    %c0 = arith.constant 0 : index
    %c0_0 = arith.constant 0 : index
    %c0_1 = arith.constant 0 : index
    %c0_2 = arith.constant 0 : index
    %0 = vector.load %arg2[%c0, %c0_0, %c0_1, %c0_2] : memref<1x4x8x8xf32, #tpu.memory_space<vmem>>, vector<1x4x8x8xf32>
    %1 = vector.shape_cast %0 : vector<1x4x8x8xf32> to vector<4x8x8xf32>
    %2 = arith.truncf %1 : vector<4x8x8xf32> to vector<4x8x8xbf16>
    %c0_3 = arith.constant 0 : index
    %c0_4 = arith.constant 0 : index
    %c0_5 = arith.constant 0 : index
    %c0_6 = arith.constant 0 : index
    %3 = vector.load %arg3[%c0_3, %c0_4, %c0_5, %c0_6] : memref<1x4x8x8xf32, #tpu.memory_space<vmem>>, vector<1x4x8x8xf32>
    %4 = vector.shape_cast %3 : vector<1x4x8x8xf32> to vector<4x8x8xf32>
    %5 = arith.truncf %4 : vector<4x8x8xf32> to vector<4x8x8xbf16>
    %c0_7 = arith.constant 0 : index
    %c0_8 = arith.constant 0 : index
    %c0_9 = arith.constant 0 : index
    %c0_10 = arith.constant 0 : index
    %6 = vector.load %arg4[%c0_7, %c0_8, %c0_9, %c0_10] : memref<1x4x8x8xf32, #tpu.memory_space<vmem>>, vector<1x4x8x8xf32>
    %7 = vector.shape_cast %6 : vector<1x4x8x8xf32> to vector<4x8x8xf32>
    %8 = arith.truncf %7 : vector<4x8x8xf32> to vector<4x8x8xbf16>
    "tpu.trace_start"() <{level = 10 : i32, message = "hqd,hkd->hqk"}> : () -> ()
    %cst = arith.constant dense<0.000000e+00> : vector<4x8x8xf32>
    %9 = tpu.matmul %2, %5, %cst {dimension_numbers = #tpu.dot_dimension_numbers<[2], [2], [1], [1], [0, 0, 0, 1, 1, 1], [0], [0]>} : vector<4x8x8xbf16>, vector<4x8x8xbf16>, vector<4x8x8xf32> -> vector<4x8x8xf32>
    "tpu.trace_stop"() : () -> ()
    %cst_11 = arith.constant 0.353553385 : f32
    %10 = vector.broadcast %cst_11 : f32 to vector<4x8x8xf32>
    %11 = arith.mulf %9, %10 : vector<4x8x8xf32>
    %c0_12 = arith.constant 0 : index
    %c0_13 = arith.constant 0 : index
    %c0_14 = arith.constant 0 : index
    %12 = vector.load %arg5[%c0_12, %c0_13, %c0_14] : memref<1x1x8xf32, #tpu.memory_space<vmem>>, vector<1x1x8xf32>
    %13 = vector.shape_cast %12 : vector<1x1x8xf32> to vector<1x8xf32>
    %cst_15 = arith.constant 1.000000e+00 : f32
    %14 = vector.broadcast %cst_15 : f32 to vector<1x8xf32>
    %15 = arith.subf %14, %13 : vector<1x8xf32>
    %cst_16 = arith.constant -1.000000e+30 : f32
    %16 = vector.broadcast %cst_16 : f32 to vector<1x8xf32>
    %17 = arith.mulf %15, %16 : vector<1x8xf32>
    %18 = vector.shape_cast %17 : vector<1x8xf32> to vector<1x1x8xf32>
    %19 = vector.broadcast %18 : vector<1x1x8xf32> to vector<4x8x8xf32>
    %20 = arith.addf %11, %19 : vector<4x8x8xf32>
    %cst_17 = arith.constant dense<0xFF800000> : vector<4x8xf32>
    %21 = vector.multi_reduction <maximumf>, %20, %cst_17 [2] : vector<4x8x8xf32> to vector<4x8xf32>
    %22 = vector.shape_cast %21 : vector<4x8xf32> to vector<4x8x1xf32>
    %23 = vector.broadcast %22 : vector<4x8x1xf32> to vector<4x8x8xf32>
    %24 = arith.subf %20, %23 : vector<4x8x8xf32>
    %25 = math.exp %24 : vector<4x8x8xf32>
    %cst_18 = arith.constant dense<0.000000e+00> : vector<4x8xf32>
    %26 = vector.multi_reduction <add>, %25, %cst_18 [2] : vector<4x8x8xf32> to vector<4x8xf32>
    %27 = vector.shape_cast %26 : vector<4x8xf32> to vector<4x8x1xf32>
    %28 = vector.broadcast %27 : vector<4x8x1xf32> to vector<4x8x8xf32>
    %29 = arith.divf %25, %28 : vector<4x8x8xf32>
    %30 = arith.truncf %29 : vector<4x8x8xf32> to vector<4x8x8xbf16>
    "tpu.trace_start"() <{level = 10 : i32, message = "hqk,hkd->hqd"}> : () -> ()
    %cst_19 = arith.constant dense<0.000000e+00> : vector<4x8x8xf32>
    %31 = tpu.matmul %30, %8, %cst_19 {dimension_numbers = #tpu.dot_dimension_numbers<[2], [1], [1], [2], [0, 0, 0, 1, 1, 2], [0], [0]>} : vector<4x8x8xbf16>, vector<4x8x8xbf16>, vector<4x8x8xf32> -> vector<4x8x8xf32>
    "tpu.trace_stop"() : () -> ()
    %32 = vector.extract_strided_slice %31 {offsets = [0, 0, 0], sizes = [1, 8, 8], strides = [1, 1, 1]} : vector<4x8x8xf32> to vector<1x8x8xf32>
    %33 = vector.shape_cast %32 : vector<1x8x8xf32> to vector<8x8xf32>
    %c0_20 = arith.constant 0 : index
    %c0_21 = arith.constant 0 : index
    %c0_22 = arith.constant 0 : index
    %34 = vector.load %arg6[%c0_20, %c0_21, %c0_22] : memref<1x8x32xf32, #tpu.memory_space<vmem>>, vector<1x8x8xf32>
    %35 = vector.shape_cast %34 : vector<1x8x8xf32> to vector<8x8xf32>
    %36 = vector.shape_cast %33 : vector<8x8xf32> to vector<1x8x8xf32>
    tpu.vector_store %arg6[%c0_20, %c0_21, %c0_22], %36 {strides = array<i32>} : memref<1x8x32xf32, #tpu.memory_space<vmem>>, vector<1x8x8xf32>,
    %37 = vector.extract_strided_slice %31 {offsets = [1, 0, 0], sizes = [1, 8, 8], strides = [1, 1, 1]} : vector<4x8x8xf32> to vector<1x8x8xf32>
    %38 = vector.shape_cast %37 : vector<1x8x8xf32> to vector<8x8xf32>
    %c0_23 = arith.constant 0 : index
    %c0_24 = arith.constant 0 : index
    %c8 = arith.constant 8 : index
    %39 = vector.load %arg6[%c0_23, %c0_24, %c8] : memref<1x8x32xf32, #tpu.memory_space<vmem>>, vector<1x8x8xf32>
    %40 = vector.shape_cast %39 : vector<1x8x8xf32> to vector<8x8xf32>
    %41 = vector.shape_cast %38 : vector<8x8xf32> to vector<1x8x8xf32>
    tpu.vector_store %arg6[%c0_23, %c0_24, %c8], %41 {strides = array<i32>} : memref<1x8x32xf32, #tpu.memory_space<vmem>>, vector<1x8x8xf32>,
    %42 = vector.extract_strided_slice %31 {offsets = [2, 0, 0], sizes = [1, 8, 8], strides = [1, 1, 1]} : vector<4x8x8xf32> to vector<1x8x8xf32>
    %43 = vector.shape_cast %42 : vector<1x8x8xf32> to vector<8x8xf32>
    %c0_25 = arith.constant 0 : index
    %c0_26 = arith.constant 0 : index
    %c16 = arith.constant 16 : index
    %44 = vector.load %arg6[%c0_25, %c0_26, %c16] : memref<1x8x32xf32, #tpu.memory_space<vmem>>, vector<1x8x8xf32>
    %45 = vector.shape_cast %44 : vector<1x8x8xf32> to vector<8x8xf32>
    %46 = vector.shape_cast %43 : vector<8x8xf32> to vector<1x8x8xf32>
    tpu.vector_store %arg6[%c0_25, %c0_26, %c16], %46 {strides = array<i32>} : memref<1x8x32xf32, #tpu.memory_space<vmem>>, vector<1x8x8xf32>,
    %47 = vector.extract_strided_slice %31 {offsets = [3, 0, 0], sizes = [1, 8, 8], strides = [1, 1, 1]} : vector<4x8x8xf32> to vector<1x8x8xf32>
    %48 = vector.shape_cast %47 : vector<1x8x8xf32> to vector<8x8xf32>
    %c0_27 = arith.constant 0 : index
    %c0_28 = arith.constant 0 : index
    %c24 = arith.constant 24 : index
    %49 = vector.load %arg6[%c0_27, %c0_28, %c24] : memref<1x8x32xf32, #tpu.memory_space<vmem>>, vector<1x8x8xf32>
    %50 = vector.shape_cast %49 : vector<1x8x8xf32> to vector<8x8xf32>
    %51 = vector.shape_cast %48 : vector<8x8xf32> to vector<1x8x8xf32>
    tpu.vector_store %arg6[%c0_27, %c0_28, %c24], %51 {strides = array<i32>} : memref<1x8x32xf32, #tpu.memory_space<vmem>>, vector<1x8x8xf32>,
    return
  }
  func.func @transform_0(%arg0: i32, %arg1: i32) -> (i32, i32, i32, i32) {
    %c0_i32 = arith.constant 0 : i32
    %c0_i32_0 = arith.constant 0 : i32
    %c0_i32_1 = arith.constant 0 : i32
    return %arg0, %arg1, %c0_i32, %c0_i32_0 : i32, i32, i32, i32
  }
  func.func @transform_1(%arg0: i32, %arg1: i32) -> (i32, i32, i32, i32) {
    %c1_i32 = arith.constant 1 : i32
    %0 = arith.addi %c1_i32, %arg1 : i32
    %c0_i32 = arith.constant 0 : i32
    %c0_i32_0 = arith.constant 0 : i32
    %c0_i32_1 = arith.constant 0 : i32
    return %arg0, %0, %c0_i32, %c0_i32_0 : i32, i32, i32, i32
  }
  func.func @transform_2(%arg0: i32, %arg1: i32) -> (i32, i32, i32, i32) {
    %c2_i32 = arith.constant 2 : i32
    %0 = arith.addi %c2_i32, %arg1 : i32
    %c0_i32 = arith.constant 0 : i32
    %c0_i32_0 = arith.constant 0 : i32
    %c0_i32_1 = arith.constant 0 : i32
    return %arg0, %0, %c0_i32, %c0_i32_0 : i32, i32, i32, i32
  }
  func.func @transform_3(%arg0: i32, %arg1: i32) -> (i32, i32, i32) {
    %c0_i32 = arith.constant 0 : i32
    %c0_i32_0 = arith.constant 0 : i32
    %c0_i32_1 = arith.constant 0 : i32
    return %arg0, %c0_i32, %c0_i32_0 : i32, i32, i32
  }
  func.func @transform_4(%arg0: i32, %arg1: i32) -> (i32, i32, i32) {
    %c0_i32 = arith.constant 0 : i32
    %c0_i32_0 = arith.constant 0 : i32
    return %arg0, %c0_i32, %arg1 : i32, i32, i32
  }
}

module attributes {stable_mosaic.version = 11 : i64} {
  func.func @_linear_kernel(%arg0: i32, %arg1: i32, %arg2: i32, %arg3: memref<16x32xf32, #tpu.memory_space<vmem>>, %arg4: memref<32x32xbf16, #tpu.memory_space<vmem>>, %arg5: memref<1x32xf32, #tpu.memory_space<vmem>>, %arg6: memref<16x32xf32, #tpu.memory_space<vmem>>, %arg7: memref<1x32xf32, #tpu.memory_space<vmem>>, %arg8: memref<1x32xf32, #tpu.memory_space<vmem>>, %arg9: memref<16x32xf32, #tpu.memory_space<vmem>>, %arg10: memref<16x32xf32, #tpu.memory_space<vmem>>) attributes {dimension_semantics = [#tpu.dimension_semantics<parallel>, #tpu.dimension_semantics<parallel>, #tpu.dimension_semantics<arbitrary>], iteration_bounds = array<i64: 1, 1, 1>, scalar_prefetch = 0 : i64, scratch_operands = 1 : i64, tpu.core_type = #tpu.core_type<tc>, window_params = [{transform_indices = @transform_0, window_bounds = array<i64: 16, 32>}, {transform_indices = @transform_1, window_bounds = array<i64: 32, 32>}, {transform_indices = @transform_2, window_bounds = array<i64: 1, 32>}, {transform_indices = @transform_3, window_bounds = array<i64: 16, 32>}, {transform_indices = @transform_4, window_bounds = array<i64: 1, 32>}, {transform_indices = @transform_5, window_bounds = array<i64: 1, 32>}, {transform_indices = @transform_6, window_bounds = array<i64: 16, 32>}]} {
    %c0_i32 = arith.constant 0 : i32
    %0 = arith.cmpi eq, %arg2, %c0_i32 : i32
    %1 = arith.extui %0 : i1 to i32
    %c0_i32_0 = arith.constant 0 : i32
    %2 = arith.cmpi ne, %1, %c0_i32_0 : i32
    scf.if %2 {
      %cst_10 = arith.constant 0.000000e+00 : f32
      %13 = vector.broadcast %cst_10 : f32 to vector<16x32xf32>
      %c0_11 = arith.constant 0 : index
      %c0_12 = arith.constant 0 : index
      %14 = vector.load %arg10[%c0_11, %c0_12] : memref<16x32xf32, #tpu.memory_space<vmem>>, vector<16x32xf32>
      tpu.vector_store %arg10[%c0_11, %c0_12], %13 {strides = array<i32>} : memref<16x32xf32, #tpu.memory_space<vmem>>, vector<16x32xf32>,
    } else {
    }
    %c0 = arith.constant 0 : index
    %c0_1 = arith.constant 0 : index
    %3 = vector.load %arg3[%c0, %c0_1] : memref<16x32xf32, #tpu.memory_space<vmem>>, vector<16x32xf32>
    %c0_2 = arith.constant 0 : index
    %c0_3 = arith.constant 0 : index
    %4 = vector.load %arg10[%c0_2, %c0_3] : memref<16x32xf32, #tpu.memory_space<vmem>>, vector<16x32xf32>
    %5 = arith.truncf %3 : vector<16x32xf32> to vector<16x32xbf16>
    %c0_4 = arith.constant 0 : index
    %c0_5 = arith.constant 0 : index
    %6 = vector.load %arg4[%c0_4, %c0_5] : memref<32x32xbf16, #tpu.memory_space<vmem>>, vector<32x32xbf16>
    %cst = arith.constant dense<0.000000e+00> : vector<16x32xf32>
    %7 = tpu.matmul %5, %6, %cst {dimension_numbers = #tpu.dot_dimension_numbers<[1], [0], [0], [1], [0, 0, 1, 1], [], []>} : vector<16x32xbf16>, vector<32x32xbf16>, vector<16x32xf32> -> vector<16x32xf32>
    %8 = arith.addf %4, %7 : vector<16x32xf32>
    %c0_6 = arith.constant 0 : index
    %c0_7 = arith.constant 0 : index
    %9 = vector.load %arg10[%c0_6, %c0_7] : memref<16x32xf32, #tpu.memory_space<vmem>>, vector<16x32xf32>
    tpu.vector_store %arg10[%c0_6, %c0_7], %8 {strides = array<i32>} : memref<16x32xf32, #tpu.memory_space<vmem>>, vector<16x32xf32>,
    %c0_i32_8 = arith.constant 0 : i32
    %10 = arith.cmpi eq, %arg2, %c0_i32_8 : i32
    %11 = arith.extui %10 : i1 to i32
    %c0_i32_9 = arith.constant 0 : i32
    %12 = arith.cmpi ne, %11, %c0_i32_9 : i32
    scf.if %12 {
      %c0_10 = arith.constant 0 : index
      %c0_11 = arith.constant 0 : index
      %13 = vector.load %arg10[%c0_10, %c0_11] : memref<16x32xf32, #tpu.memory_space<vmem>>, vector<16x32xf32>
      %c0_12 = arith.constant 0 : index
      %c0_13 = arith.constant 0 : index
      %14 = vector.load %arg5[%c0_12, %c0_13] : memref<1x32xf32, #tpu.memory_space<vmem>>, vector<1x32xf32>
      %15 = vector.broadcast %14 : vector<1x32xf32> to vector<16x32xf32>
      %16 = arith.addf %13, %15 : vector<16x32xf32>
      %c0_14 = arith.constant 0 : index
      %c0_15 = arith.constant 0 : index
      %17 = vector.load %arg6[%c0_14, %c0_15] : memref<16x32xf32, #tpu.memory_space<vmem>>, vector<16x32xf32>
      %18 = arith.addf %16, %17 : vector<16x32xf32>
      %cst_16 = arith.constant dense<0.000000e+00> : vector<16xf32>
      %19 = vector.multi_reduction <add>, %18, %cst_16 [1] : vector<16x32xf32> to vector<16xf32>
      %20 = vector.shape_cast %19 : vector<16xf32> to vector<16x1xf32>
      %cst_17 = arith.constant 3.200000e+01 : f32
      %21 = vector.broadcast %cst_17 : f32 to vector<16x1xf32>
      %22 = arith.divf %20, %21 : vector<16x1xf32>
      %23 = vector.broadcast %22 : vector<16x1xf32> to vector<16x32xf32>
      %24 = arith.subf %18, %23 : vector<16x32xf32>
      %25 = arith.mulf %24, %24 : vector<16x32xf32>
      %cst_18 = arith.constant dense<0.000000e+00> : vector<16xf32>
      %26 = vector.multi_reduction <add>, %25, %cst_18 [1] : vector<16x32xf32> to vector<16xf32>
      %27 = vector.shape_cast %26 : vector<16xf32> to vector<16x1xf32>
      %cst_19 = arith.constant 3.200000e+01 : f32
      %28 = vector.broadcast %cst_19 : f32 to vector<16x1xf32>
      %29 = arith.divf %27, %28 : vector<16x1xf32>
      %cst_20 = arith.constant 9.99999996E-13 : f32
      %30 = vector.broadcast %cst_20 : f32 to vector<16x1xf32>
      %31 = arith.addf %29, %30 : vector<16x1xf32>
      %32 = math.rsqrt %31 : vector<16x1xf32>
      %33 = vector.broadcast %32 : vector<16x1xf32> to vector<16x32xf32>
      %34 = arith.mulf %24, %33 : vector<16x32xf32>
      %c0_21 = arith.constant 0 : index
      %c0_22 = arith.constant 0 : index
      %35 = vector.load %arg7[%c0_21, %c0_22] : memref<1x32xf32, #tpu.memory_space<vmem>>, vector<1x32xf32>
      %36 = vector.broadcast %35 : vector<1x32xf32> to vector<16x32xf32>
      %37 = arith.mulf %34, %36 : vector<16x32xf32>
      %c0_23 = arith.constant 0 : index
      %c0_24 = arith.constant 0 : index
      %38 = vector.load %arg8[%c0_23, %c0_24] : memref<1x32xf32, #tpu.memory_space<vmem>>, vector<1x32xf32>
      %39 = vector.broadcast %38 : vector<1x32xf32> to vector<16x32xf32>
      %40 = arith.addf %37, %39 : vector<16x32xf32>
      %c0_25 = arith.constant 0 : index
      %c0_26 = arith.constant 0 : index
      %41 = vector.load %arg9[%c0_25, %c0_26] : memref<16x32xf32, #tpu.memory_space<vmem>>, vector<16x32xf32>
      tpu.vector_store %arg9[%c0_25, %c0_26], %40 {strides = array<i32>} : memref<16x32xf32, #tpu.memory_space<vmem>>, vector<16x32xf32>,
    } else {
    }
    return
  }
  func.func @transform_0(%arg0: i32, %arg1: i32, %arg2: i32) -> (i32, i32) {
    %c0_i32 = arith.constant 0 : i32
    return %arg0, %arg2 : i32, i32
  }
  func.func @transform_1(%arg0: i32, %arg1: i32, %arg2: i32) -> (i32, i32) {
    %c0_i32 = arith.constant 0 : i32
    return %arg2, %arg1 : i32, i32
  }
  func.func @transform_2(%arg0: i32, %arg1: i32, %arg2: i32) -> (i32, i32) {
    %c0_i32 = arith.constant 0 : i32
    %c0_i32_0 = arith.constant 0 : i32
    return %c0_i32, %arg1 : i32, i32
  }
  func.func @transform_3(%arg0: i32, %arg1: i32, %arg2: i32) -> (i32, i32) {
    %c0_i32 = arith.constant 0 : i32
    return %arg0, %arg1 : i32, i32
  }
  func.func @transform_4(%arg0: i32, %arg1: i32, %arg2: i32) -> (i32, i32) {
    %c0_i32 = arith.constant 0 : i32
    %c0_i32_0 = arith.constant 0 : i32
    return %c0_i32, %arg1 : i32, i32
  }
  func.func @transform_5(%arg0: i32, %arg1: i32, %arg2: i32) -> (i32, i32) {
    %c0_i32 = arith.constant 0 : i32
    %c0_i32_0 = arith.constant 0 : i32
    return %c0_i32, %arg1 : i32, i32
  }
  func.func @transform_6(%arg0: i32, %arg1: i32, %arg2: i32) -> (i32, i32) {
    %c0_i32 = arith.constant 0 : i32
    return %arg0, %arg1 : i32, i32
  }
}

module attributes {stable_mosaic.version = 11 : i64} {
  func.func @_linear_kernel(%arg0: i32, %arg1: i32, %arg2: i32, %arg3: memref<16x32xf32, #tpu.memory_space<vmem>>, %arg4: memref<32x128xbf16, #tpu.memory_space<vmem>>, %arg5: memref<1x128xf32, #tpu.memory_space<vmem>>, %arg6: memref<16x128xf32, #tpu.memory_space<vmem>>, %arg7: memref<16x128xf32, #tpu.memory_space<vmem>>) attributes {dimension_semantics = [#tpu.dimension_semantics<parallel>, #tpu.dimension_semantics<parallel>, #tpu.dimension_semantics<arbitrary>], iteration_bounds = array<i64: 1, 1, 1>, scalar_prefetch = 0 : i64, scratch_operands = 1 : i64, tpu.core_type = #tpu.core_type<tc>, window_params = [{transform_indices = @transform_0, window_bounds = array<i64: 16, 32>}, {transform_indices = @transform_1, window_bounds = array<i64: 32, 128>}, {transform_indices = @transform_2, window_bounds = array<i64: 1, 128>}, {transform_indices = @transform_3, window_bounds = array<i64: 16, 128>}]} {
    %c0_i32 = arith.constant 0 : i32
    %0 = arith.cmpi eq, %arg2, %c0_i32 : i32
    %1 = arith.extui %0 : i1 to i32
    %c0_i32_0 = arith.constant 0 : i32
    %2 = arith.cmpi ne, %1, %c0_i32_0 : i32
    scf.if %2 {
      %cst_10 = arith.constant 0.000000e+00 : f32
      %13 = vector.broadcast %cst_10 : f32 to vector<16x128xf32>
      %c0_11 = arith.constant 0 : index
      %c0_12 = arith.constant 0 : index
      %14 = vector.load %arg7[%c0_11, %c0_12] : memref<16x128xf32, #tpu.memory_space<vmem>>, vector<16x128xf32>
      tpu.vector_store %arg7[%c0_11, %c0_12], %13 {strides = array<i32>} : memref<16x128xf32, #tpu.memory_space<vmem>>, vector<16x128xf32>,
    } else {
    }
    %c0 = arith.constant 0 : index
    %c0_1 = arith.constant 0 : index
    %3 = vector.load %arg3[%c0, %c0_1] : memref<16x32xf32, #tpu.memory_space<vmem>>, vector<16x32xf32>
    %c0_2 = arith.constant 0 : index
    %c0_3 = arith.constant 0 : index
    %4 = vector.load %arg7[%c0_2, %c0_3] : memref<16x128xf32, #tpu.memory_space<vmem>>, vector<16x128xf32>
    %5 = arith.truncf %3 : vector<16x32xf32> to vector<16x32xbf16>
    %c0_4 = arith.constant 0 : index
    %c0_5 = arith.constant 0 : index
    %6 = vector.load %arg4[%c0_4, %c0_5] : memref<32x128xbf16, #tpu.memory_space<vmem>>, vector<32x128xbf16>
    %cst = arith.constant dense<0.000000e+00> : vector<16x128xf32>
    %7 = tpu.matmul %5, %6, %cst {dimension_numbers = #tpu.dot_dimension_numbers<[1], [0], [0], [1], [0, 0, 1, 1], [], []>} : vector<16x32xbf16>, vector<32x128xbf16>, vector<16x128xf32> -> vector<16x128xf32>
    %8 = arith.addf %4, %7 : vector<16x128xf32>
    %c0_6 = arith.constant 0 : index
    %c0_7 = arith.constant 0 : index
    %9 = vector.load %arg7[%c0_6, %c0_7] : memref<16x128xf32, #tpu.memory_space<vmem>>, vector<16x128xf32>
    tpu.vector_store %arg7[%c0_6, %c0_7], %8 {strides = array<i32>} : memref<16x128xf32, #tpu.memory_space<vmem>>, vector<16x128xf32>,
    %c0_i32_8 = arith.constant 0 : i32
    %10 = arith.cmpi eq, %arg2, %c0_i32_8 : i32
    %11 = arith.extui %10 : i1 to i32
    %c0_i32_9 = arith.constant 0 : i32
    %12 = arith.cmpi ne, %11, %c0_i32_9 : i32
    scf.if %12 {
      %c0_10 = arith.constant 0 : index
      %c0_11 = arith.constant 0 : index
      %13 = vector.load %arg7[%c0_10, %c0_11] : memref<16x128xf32, #tpu.memory_space<vmem>>, vector<16x128xf32>
      %c0_12 = arith.constant 0 : index
      %c0_13 = arith.constant 0 : index
      %14 = vector.load %arg5[%c0_12, %c0_13] : memref<1x128xf32, #tpu.memory_space<vmem>>, vector<1x128xf32>
      %15 = vector.broadcast %14 : vector<1x128xf32> to vector<16x128xf32>
      %16 = arith.addf %13, %15 : vector<16x128xf32>
      %cst_14 = arith.constant 5.000000e-01 : f32
      %17 = vector.broadcast %cst_14 : f32 to vector<16x128xf32>
      %18 = arith.mulf %17, %16 : vector<16x128xf32>
      %cst_15 = arith.constant 0.707106769 : f32
      %19 = vector.broadcast %cst_15 : f32 to vector<16x128xf32>
      %20 = arith.mulf %16, %19 : vector<16x128xf32>
      %21 = math.erf %20 : vector<16x128xf32>
      %cst_16 = arith.constant 1.000000e+00 : f32
      %22 = vector.broadcast %cst_16 : f32 to vector<16x128xf32>
      %23 = arith.addf %22, %21 : vector<16x128xf32>
      %24 = arith.mulf %18, %23 : vector<16x128xf32>
      %c0_17 = arith.constant 0 : index
      %c0_18 = arith.constant 0 : index
      %25 = vector.load %arg6[%c0_17, %c0_18] : memref<16x128xf32, #tpu.memory_space<vmem>>, vector<16x128xf32>
      tpu.vector_store %arg6[%c0_17, %c0_18], %24 {strides = array<i32>} : memref<16x128xf32, #tpu.memory_space<vmem>>, vector<16x128xf32>,
    } else {
    }
    return
  }
  func.func @transform_0(%arg0: i32, %arg1: i32, %arg2: i32) -> (i32, i32) {
    %c0_i32 = arith.constant 0 : i32
    return %arg0, %arg2 : i32, i32
  }
  func.func @transform_1(%arg0: i32, %arg1: i32, %arg2: i32) -> (i32, i32) {
    %c0_i32 = arith.constant 0 : i32
    return %arg2, %arg1 : i32, i32
  }
  func.func @transform_2(%arg0: i32, %arg1: i32, %arg2: i32) -> (i32, i32) {
    %c0_i32 = arith.constant 0 : i32
    %c0_i32_0 = arith.constant 0 : i32
    return %c0_i32, %arg1 : i32, i32
  }
  func.func @transform_3(%arg0: i32, %arg1: i32, %arg2: i32) -> (i32, i32) {
    %c0_i32 = arith.constant 0 : i32
    return %arg0, %arg1 : i32, i32
  }
}

module attributes {stable_mosaic.version = 11 : i64} {
  func.func @_linear_kernel(%arg0: i32, %arg1: i32, %arg2: i32, %arg3: memref<16x128xf32, #tpu.memory_space<vmem>>, %arg4: memref<128x32xbf16, #tpu.memory_space<vmem>>, %arg5: memref<1x32xf32, #tpu.memory_space<vmem>>, %arg6: memref<16x32xf32, #tpu.memory_space<vmem>>, %arg7: memref<1x32xf32, #tpu.memory_space<vmem>>, %arg8: memref<1x32xf32, #tpu.memory_space<vmem>>, %arg9: memref<16x32xf32, #tpu.memory_space<vmem>>, %arg10: memref<16x32xf32, #tpu.memory_space<vmem>>) attributes {dimension_semantics = [#tpu.dimension_semantics<parallel>, #tpu.dimension_semantics<parallel>, #tpu.dimension_semantics<arbitrary>], iteration_bounds = array<i64: 1, 1, 1>, scalar_prefetch = 0 : i64, scratch_operands = 1 : i64, tpu.core_type = #tpu.core_type<tc>, window_params = [{transform_indices = @transform_0, window_bounds = array<i64: 16, 128>}, {transform_indices = @transform_1, window_bounds = array<i64: 128, 32>}, {transform_indices = @transform_2, window_bounds = array<i64: 1, 32>}, {transform_indices = @transform_3, window_bounds = array<i64: 16, 32>}, {transform_indices = @transform_4, window_bounds = array<i64: 1, 32>}, {transform_indices = @transform_5, window_bounds = array<i64: 1, 32>}, {transform_indices = @transform_6, window_bounds = array<i64: 16, 32>}]} {
    %c0_i32 = arith.constant 0 : i32
    %0 = arith.cmpi eq, %arg2, %c0_i32 : i32
    %1 = arith.extui %0 : i1 to i32
    %c0_i32_0 = arith.constant 0 : i32
    %2 = arith.cmpi ne, %1, %c0_i32_0 : i32
    scf.if %2 {
      %cst_10 = arith.constant 0.000000e+00 : f32
      %13 = vector.broadcast %cst_10 : f32 to vector<16x32xf32>
      %c0_11 = arith.constant 0 : index
      %c0_12 = arith.constant 0 : index
      %14 = vector.load %arg10[%c0_11, %c0_12] : memref<16x32xf32, #tpu.memory_space<vmem>>, vector<16x32xf32>
      tpu.vector_store %arg10[%c0_11, %c0_12], %13 {strides = array<i32>} : memref<16x32xf32, #tpu.memory_space<vmem>>, vector<16x32xf32>,
    } else {
    }
    %c0 = arith.constant 0 : index
    %c0_1 = arith.constant 0 : index
    %3 = vector.load %arg3[%c0, %c0_1] : memref<16x128xf32, #tpu.memory_space<vmem>>, vector<16x128xf32>
    %c0_2 = arith.constant 0 : index
    %c0_3 = arith.constant 0 : index
    %4 = vector.load %arg10[%c0_2, %c0_3] : memref<16x32xf32, #tpu.memory_space<vmem>>, vector<16x32xf32>
    %5 = arith.truncf %3 : vector<16x128xf32> to vector<16x128xbf16>
    %c0_4 = arith.constant 0 : index
    %c0_5 = arith.constant 0 : index
    %6 = vector.load %arg4[%c0_4, %c0_5] : memref<128x32xbf16, #tpu.memory_space<vmem>>, vector<128x32xbf16>
    %cst = arith.constant dense<0.000000e+00> : vector<16x32xf32>
    %7 = tpu.matmul %5, %6, %cst {dimension_numbers = #tpu.dot_dimension_numbers<[1], [0], [0], [1], [0, 0, 1, 1], [], []>} : vector<16x128xbf16>, vector<128x32xbf16>, vector<16x32xf32> -> vector<16x32xf32>
    %8 = arith.addf %4, %7 : vector<16x32xf32>
    %c0_6 = arith.constant 0 : index
    %c0_7 = arith.constant 0 : index
    %9 = vector.load %arg10[%c0_6, %c0_7] : memref<16x32xf32, #tpu.memory_space<vmem>>, vector<16x32xf32>
    tpu.vector_store %arg10[%c0_6, %c0_7], %8 {strides = array<i32>} : memref<16x32xf32, #tpu.memory_space<vmem>>, vector<16x32xf32>,
    %c0_i32_8 = arith.constant 0 : i32
    %10 = arith.cmpi eq, %arg2, %c0_i32_8 : i32
    %11 = arith.extui %10 : i1 to i32
    %c0_i32_9 = arith.constant 0 : i32
    %12 = arith.cmpi ne, %11, %c0_i32_9 : i32
    scf.if %12 {
      %c0_10 = arith.constant 0 : index
      %c0_11 = arith.constant 0 : index
      %13 = vector.load %arg10[%c0_10, %c0_11] : memref<16x32xf32, #tpu.memory_space<vmem>>, vector<16x32xf32>
      %c0_12 = arith.constant 0 : index
      %c0_13 = arith.constant 0 : index
      %14 = vector.load %arg5[%c0_12, %c0_13] : memref<1x32xf32, #tpu.memory_space<vmem>>, vector<1x32xf32>
      %15 = vector.broadcast %14 : vector<1x32xf32> to vector<16x32xf32>
      %16 = arith.addf %13, %15 : vector<16x32xf32>
      %c0_14 = arith.constant 0 : index
      %c0_15 = arith.constant 0 : index
      %17 = vector.load %arg6[%c0_14, %c0_15] : memref<16x32xf32, #tpu.memory_space<vmem>>, vector<16x32xf32>
      %18 = arith.addf %16, %17 : vector<16x32xf32>
      %cst_16 = arith.constant dense<0.000000e+00> : vector<16xf32>
      %19 = vector.multi_reduction <add>, %18, %cst_16 [1] : vector<16x32xf32> to vector<16xf32>
      %20 = vector.shape_cast %19 : vector<16xf32> to vector<16x1xf32>
      %cst_17 = arith.constant 3.200000e+01 : f32
      %21 = vector.broadcast %cst_17 : f32 to vector<16x1xf32>
      %22 = arith.divf %20, %21 : vector<16x1xf32>
      %23 = vector.broadcast %22 : vector<16x1xf32> to vector<16x32xf32>
      %24 = arith.subf %18, %23 : vector<16x32xf32>
      %25 = arith.mulf %24, %24 : vector<16x32xf32>
      %cst_18 = arith.constant dense<0.000000e+00> : vector<16xf32>
      %26 = vector.multi_reduction <add>, %25, %cst_18 [1] : vector<16x32xf32> to vector<16xf32>
      %27 = vector.shape_cast %26 : vector<16xf32> to vector<16x1xf32>
      %cst_19 = arith.constant 3.200000e+01 : f32
      %28 = vector.broadcast %cst_19 : f32 to vector<16x1xf32>
      %29 = arith.divf %27, %28 : vector<16x1xf32>
      %cst_20 = arith.constant 9.99999996E-13 : f32
      %30 = vector.broadcast %cst_20 : f32 to vector<16x1xf32>
      %31 = arith.addf %29, %30 : vector<16x1xf32>
      %32 = math.rsqrt %31 : vector<16x1xf32>
      %33 = vector.broadcast %32 : vector<16x1xf32> to vector<16x32xf32>
      %34 = arith.mulf %24, %33 : vector<16x32xf32>
      %c0_21 = arith.constant 0 : index
      %c0_22 = arith.constant 0 : index
      %35 = vector.load %arg7[%c0_21, %c0_22] : memref<1x32xf32, #tpu.memory_space<vmem>>, vector<1x32xf32>
      %36 = vector.broadcast %35 : vector<1x32xf32> to vector<16x32xf32>
      %37 = arith.mulf %34, %36 : vector<16x32xf32>
      %c0_23 = arith.constant 0 : index
      %c0_24 = arith.constant 0 : index
      %38 = vector.load %arg8[%c0_23, %c0_24] : memref<1x32xf32, #tpu.memory_space<vmem>>, vector<1x32xf32>
      %39 = vector.broadcast %38 : vector<1x32xf32> to vector<16x32xf32>
      %40 = arith.addf %37, %39 : vector<16x32xf32>
      %c0_25 = arith.constant 0 : index
      %c0_26 = arith.constant 0 : index
      %41 = vector.load %arg9[%c0_25, %c0_26] : memref<16x32xf32, #tpu.memory_space<vmem>>, vector<16x32xf32>
      tpu.vector_store %arg9[%c0_25, %c0_26], %40 {strides = array<i32>} : memref<16x32xf32, #tpu.memory_space<vmem>>, vector<16x32xf32>,
    } else {
    }
    return
  }
  func.func @transform_0(%arg0: i32, %arg1: i32, %arg2: i32) -> (i32, i32) {
    %c0_i32 = arith.constant 0 : i32
    return %arg0, %arg2 : i32, i32
  }
  func.func @transform_1(%arg0: i32, %arg1: i32, %arg2: i32) -> (i32, i32) {
    %c0_i32 = arith.constant 0 : i32
    return %arg2, %arg1 : i32, i32
  }
  func.func @transform_2(%arg0: i32, %arg1: i32, %arg2: i32) -> (i32, i32) {
    %c0_i32 = arith.constant 0 : i32
    %c0_i32_0 = arith.constant 0 : i32
    return %c0_i32, %arg1 : i32, i32
  }
  func.func @transform_3(%arg0: i32, %arg1: i32, %arg2: i32) -> (i32, i32) {
    %c0_i32 = arith.constant 0 : i32
    return %arg0, %arg1 : i32, i32
  }
  func.func @transform_4(%arg0: i32, %arg1: i32, %arg2: i32) -> (i32, i32) {
    %c0_i32 = arith.constant 0 : i32
    %c0_i32_0 = arith.constant 0 : i32
    return %c0_i32, %arg1 : i32, i32
  }
  func.func @transform_5(%arg0: i32, %arg1: i32, %arg2: i32) -> (i32, i32) {
    %c0_i32 = arith.constant 0 : i32
    %c0_i32_0 = arith.constant 0 : i32
    return %c0_i32, %arg1 : i32, i32
  }
  func.func @transform_6(%arg0: i32, %arg1: i32, %arg2: i32) -> (i32, i32) {
    %c0_i32 = arith.constant 0 : i32
    return %arg0, %arg1 : i32, i32
  }
}

module attributes {stable_mosaic.version = 11 : i64} {
  func.func @_linear_kernel(%arg0: i32, %arg1: i32, %arg2: i32, %arg3: memref<8x32xf32, #tpu.memory_space<vmem>>, %arg4: memref<32x32xbf16, #tpu.memory_space<vmem>>, %arg5: memref<1x32xf32, #tpu.memory_space<vmem>>, %arg6: memref<8x32xf32, #tpu.memory_space<vmem>>, %arg7: memref<8x32xf32, #tpu.memory_space<vmem>>) attributes {dimension_semantics = [#tpu.dimension_semantics<parallel>, #tpu.dimension_semantics<parallel>, #tpu.dimension_semantics<arbitrary>], iteration_bounds = array<i64: 1, 1, 1>, scalar_prefetch = 0 : i64, scratch_operands = 1 : i64, tpu.core_type = #tpu.core_type<tc>, window_params = [{transform_indices = @transform_0, window_bounds = array<i64: 8, 32>}, {transform_indices = @transform_1, window_bounds = array<i64: 32, 32>}, {transform_indices = @transform_2, window_bounds = array<i64: 1, 32>}, {transform_indices = @transform_3, window_bounds = array<i64: 8, 32>}]} {
    %c0_i32 = arith.constant 0 : i32
    %0 = arith.cmpi eq, %arg2, %c0_i32 : i32
    %1 = arith.extui %0 : i1 to i32
    %c0_i32_0 = arith.constant 0 : i32
    %2 = arith.cmpi ne, %1, %c0_i32_0 : i32
    scf.if %2 {
      %cst_10 = arith.constant 0.000000e+00 : f32
      %13 = vector.broadcast %cst_10 : f32 to vector<8x32xf32>
      %c0_11 = arith.constant 0 : index
      %c0_12 = arith.constant 0 : index
      %14 = vector.load %arg7[%c0_11, %c0_12] : memref<8x32xf32, #tpu.memory_space<vmem>>, vector<8x32xf32>
      tpu.vector_store %arg7[%c0_11, %c0_12], %13 {strides = array<i32>} : memref<8x32xf32, #tpu.memory_space<vmem>>, vector<8x32xf32>,
    } else {
    }
    %c0 = arith.constant 0 : index
    %c0_1 = arith.constant 0 : index
    %3 = vector.load %arg3[%c0, %c0_1] : memref<8x32xf32, #tpu.memory_space<vmem>>, vector<8x32xf32>
    %c0_2 = arith.constant 0 : index
    %c0_3 = arith.constant 0 : index
    %4 = vector.load %arg7[%c0_2, %c0_3] : memref<8x32xf32, #tpu.memory_space<vmem>>, vector<8x32xf32>
    %5 = arith.truncf %3 : vector<8x32xf32> to vector<8x32xbf16>
    %c0_4 = arith.constant 0 : index
    %c0_5 = arith.constant 0 : index
    %6 = vector.load %arg4[%c0_4, %c0_5] : memref<32x32xbf16, #tpu.memory_space<vmem>>, vector<32x32xbf16>
    %cst = arith.constant dense<0.000000e+00> : vector<8x32xf32>
    %7 = tpu.matmul %5, %6, %cst {dimension_numbers = #tpu.dot_dimension_numbers<[1], [0], [0], [1], [0, 0, 1, 1], [], []>} : vector<8x32xbf16>, vector<32x32xbf16>, vector<8x32xf32> -> vector<8x32xf32>
    %8 = arith.addf %4, %7 : vector<8x32xf32>
    %c0_6 = arith.constant 0 : index
    %c0_7 = arith.constant 0 : index
    %9 = vector.load %arg7[%c0_6, %c0_7] : memref<8x32xf32, #tpu.memory_space<vmem>>, vector<8x32xf32>
    tpu.vector_store %arg7[%c0_6, %c0_7], %8 {strides = array<i32>} : memref<8x32xf32, #tpu.memory_space<vmem>>, vector<8x32xf32>,
    %c0_i32_8 = arith.constant 0 : i32
    %10 = arith.cmpi eq, %arg2, %c0_i32_8 : i32
    %11 = arith.extui %10 : i1 to i32
    %c0_i32_9 = arith.constant 0 : i32
    %12 = arith.cmpi ne, %11, %c0_i32_9 : i32
    scf.if %12 {
      %c0_10 = arith.constant 0 : index
      %c0_11 = arith.constant 0 : index
      %13 = vector.load %arg7[%c0_10, %c0_11] : memref<8x32xf32, #tpu.memory_space<vmem>>, vector<8x32xf32>
      %c0_12 = arith.constant 0 : index
      %c0_13 = arith.constant 0 : index
      %14 = vector.load %arg5[%c0_12, %c0_13] : memref<1x32xf32, #tpu.memory_space<vmem>>, vector<1x32xf32>
      %15 = vector.broadcast %14 : vector<1x32xf32> to vector<8x32xf32>
      %16 = arith.addf %13, %15 : vector<8x32xf32>
      %c0_14 = arith.constant 0 : index
      %c0_15 = arith.constant 0 : index
      %17 = vector.load %arg6[%c0_14, %c0_15] : memref<8x32xf32, #tpu.memory_space<vmem>>, vector<8x32xf32>
      tpu.vector_store %arg6[%c0_14, %c0_15], %16 {strides = array<i32>} : memref<8x32xf32, #tpu.memory_space<vmem>>, vector<8x32xf32>,
    } else {
    }
    return
  }
  func.func @transform_0(%arg0: i32, %arg1: i32, %arg2: i32) -> (i32, i32) {
    %c0_i32 = arith.constant 0 : i32
    return %arg0, %arg2 : i32, i32
  }
  func.func @transform_1(%arg0: i32, %arg1: i32, %arg2: i32) -> (i32, i32) {
    %c0_i32 = arith.constant 0 : i32
    return %arg2, %arg1 : i32, i32
  }
  func.func @transform_2(%arg0: i32, %arg1: i32, %arg2: i32) -> (i32, i32) {
    %c0_i32 = arith.constant 0 : i32
    %c0_i32_0 = arith.constant 0 : i32
    return %c0_i32, %arg1 : i32, i32
  }
  func.func @transform_3(%arg0: i32, %arg1: i32, %arg2: i32) -> (i32, i32) {
    %c0_i32 = arith.constant 0 : i32
    return %arg0, %arg1 : i32, i32
  }
}

module attributes {stable_mosaic.version = 11 : i64} {
  func.func @_linear_kernel(%arg0: i32, %arg1: i32, %arg2: i32, %arg3: memref<8x192xf32, #tpu.memory_space<vmem>>, %arg4: memref<192x32xbf16, #tpu.memory_space<vmem>>, %arg5: memref<1x32xf32, #tpu.memory_space<vmem>>, %arg6: memref<8x32xf32, #tpu.memory_space<vmem>>, %arg7: memref<8x32xf32, #tpu.memory_space<vmem>>, %arg8: memref<8x32xf32, #tpu.memory_space<vmem>>) attributes {dimension_semantics = [#tpu.dimension_semantics<parallel>, #tpu.dimension_semantics<parallel>, #tpu.dimension_semantics<arbitrary>], iteration_bounds = array<i64: 1, 1, 1>, scalar_prefetch = 0 : i64, scratch_operands = 1 : i64, tpu.core_type = #tpu.core_type<tc>, window_params = [{transform_indices = @transform_0, window_bounds = array<i64: 8, 192>}, {transform_indices = @transform_1, window_bounds = array<i64: 192, 32>}, {transform_indices = @transform_2, window_bounds = array<i64: 1, 32>}, {transform_indices = @transform_3, window_bounds = array<i64: 8, 32>}, {transform_indices = @transform_4, window_bounds = array<i64: 8, 32>}]} {
    %c0_i32 = arith.constant 0 : i32
    %0 = arith.cmpi eq, %arg2, %c0_i32 : i32
    %1 = arith.extui %0 : i1 to i32
    %c0_i32_0 = arith.constant 0 : i32
    %2 = arith.cmpi ne, %1, %c0_i32_0 : i32
    scf.if %2 {
      %cst_10 = arith.constant 0.000000e+00 : f32
      %13 = vector.broadcast %cst_10 : f32 to vector<8x32xf32>
      %c0_11 = arith.constant 0 : index
      %c0_12 = arith.constant 0 : index
      %14 = vector.load %arg8[%c0_11, %c0_12] : memref<8x32xf32, #tpu.memory_space<vmem>>, vector<8x32xf32>
      tpu.vector_store %arg8[%c0_11, %c0_12], %13 {strides = array<i32>} : memref<8x32xf32, #tpu.memory_space<vmem>>, vector<8x32xf32>,
    } else {
    }
    %c0 = arith.constant 0 : index
    %c0_1 = arith.constant 0 : index
    %3 = vector.load %arg3[%c0, %c0_1] : memref<8x192xf32, #tpu.memory_space<vmem>>, vector<8x192xf32>
    %c0_2 = arith.constant 0 : index
    %c0_3 = arith.constant 0 : index
    %4 = vector.load %arg8[%c0_2, %c0_3] : memref<8x32xf32, #tpu.memory_space<vmem>>, vector<8x32xf32>
    %5 = arith.truncf %3 : vector<8x192xf32> to vector<8x192xbf16>
    %c0_4 = arith.constant 0 : index
    %c0_5 = arith.constant 0 : index
    %6 = vector.load %arg4[%c0_4, %c0_5] : memref<192x32xbf16, #tpu.memory_space<vmem>>, vector<192x32xbf16>
    %cst = arith.constant dense<0.000000e+00> : vector<8x32xf32>
    %7 = tpu.matmul %5, %6, %cst {dimension_numbers = #tpu.dot_dimension_numbers<[1], [0], [0], [1], [0, 0, 1, 1], [], []>} : vector<8x192xbf16>, vector<192x32xbf16>, vector<8x32xf32> -> vector<8x32xf32>
    %8 = arith.addf %4, %7 : vector<8x32xf32>
    %c0_6 = arith.constant 0 : index
    %c0_7 = arith.constant 0 : index
    %9 = vector.load %arg8[%c0_6, %c0_7] : memref<8x32xf32, #tpu.memory_space<vmem>>, vector<8x32xf32>
    tpu.vector_store %arg8[%c0_6, %c0_7], %8 {strides = array<i32>} : memref<8x32xf32, #tpu.memory_space<vmem>>, vector<8x32xf32>,
    %c0_i32_8 = arith.constant 0 : i32
    %10 = arith.cmpi eq, %arg2, %c0_i32_8 : i32
    %11 = arith.extui %10 : i1 to i32
    %c0_i32_9 = arith.constant 0 : i32
    %12 = arith.cmpi ne, %11, %c0_i32_9 : i32
    scf.if %12 {
      %c0_10 = arith.constant 0 : index
      %c0_11 = arith.constant 0 : index
      %13 = vector.load %arg8[%c0_10, %c0_11] : memref<8x32xf32, #tpu.memory_space<vmem>>, vector<8x32xf32>
      %c0_12 = arith.constant 0 : index
      %c0_13 = arith.constant 0 : index
      %14 = vector.load %arg5[%c0_12, %c0_13] : memref<1x32xf32, #tpu.memory_space<vmem>>, vector<1x32xf32>
      %15 = vector.broadcast %14 : vector<1x32xf32> to vector<8x32xf32>
      %16 = arith.addf %13, %15 : vector<8x32xf32>
      %c0_14 = arith.constant 0 : index
      %c0_15 = arith.constant 0 : index
      %17 = vector.load %arg6[%c0_14, %c0_15] : memref<8x32xf32, #tpu.memory_space<vmem>>, vector<8x32xf32>
      %18 = arith.addf %16, %17 : vector<8x32xf32>
      %c0_16 = arith.constant 0 : index
      %c0_17 = arith.constant 0 : index
      %19 = vector.load %arg7[%c0_16, %c0_17] : memref<8x32xf32, #tpu.memory_space<vmem>>, vector<8x32xf32>
      tpu.vector_store %arg7[%c0_16, %c0_17], %18 {strides = array<i32>} : memref<8x32xf32, #tpu.memory_space<vmem>>, vector<8x32xf32>,
    } else {
    }
    return
  }
  func.func @transform_0(%arg0: i32, %arg1: i32, %arg2: i32) -> (i32, i32) {
    %c0_i32 = arith.constant 0 : i32
    return %arg0, %arg2 : i32, i32
  }
  func.func @transform_1(%arg0: i32, %arg1: i32, %arg2: i32) -> (i32, i32) {
    %c0_i32 = arith.constant 0 : i32
    return %arg2, %arg1 : i32, i32
  }
  func.func @transform_2(%arg0: i32, %arg1: i32, %arg2: i32) -> (i32, i32) {
    %c0_i32 = arith.constant 0 : i32
    %c0_i32_0 = arith.constant 0 : i32
    return %c0_i32, %arg1 : i32, i32
  }
  func.func @transform_3(%arg0: i32, %arg1: i32, %arg2: i32) -> (i32, i32) {
    %c0_i32 = arith.constant 0 : i32
    return %arg0, %arg1 : i32, i32
  }
  func.func @transform_4(%arg0: i32, %arg1: i32, %arg2: i32) -> (i32, i32) {
    %c0_i32 = arith.constant 0 : i32
    return %arg0, %arg1 : i32, i32
  }
}

module attributes {stable_mosaic.version = 11 : i64} {
  func.func @_linear_kernel(%arg0: i32, %arg1: i32, %arg2: i32, %arg3: memref<16x32xf32, #tpu.memory_space<vmem>>, %arg4: memref<32x96xbf16, #tpu.memory_space<vmem>>, %arg5: memref<1x96xf32, #tpu.memory_space<vmem>>, %arg6: memref<1x32xf32, #tpu.memory_space<vmem>>, %arg7: memref<1x32xf32, #tpu.memory_space<vmem>>, %arg8: memref<16x96xf32, #tpu.memory_space<vmem>>, %arg9: memref<16x96xf32, #tpu.memory_space<vmem>>) attributes {dimension_semantics = [#tpu.dimension_semantics<parallel>, #tpu.dimension_semantics<parallel>, #tpu.dimension_semantics<arbitrary>], iteration_bounds = array<i64: 1, 1, 1>, scalar_prefetch = 0 : i64, scratch_operands = 1 : i64, tpu.core_type = #tpu.core_type<tc>, window_params = [{transform_indices = @transform_0, window_bounds = array<i64: 16, 32>}, {transform_indices = @transform_1, window_bounds = array<i64: 32, 96>}, {transform_indices = @transform_2, window_bounds = array<i64: 1, 96>}, {transform_indices = @transform_3, window_bounds = array<i64: 1, 32>}, {transform_indices = @transform_4, window_bounds = array<i64: 1, 32>}, {transform_indices = @transform_5, window_bounds = array<i64: 16, 96>}]} {
    %c0_i32 = arith.constant 0 : i32
    %0 = arith.cmpi eq, %arg2, %c0_i32 : i32
    %1 = arith.extui %0 : i1 to i32
    %c0_i32_0 = arith.constant 0 : i32
    %2 = arith.cmpi ne, %1, %c0_i32_0 : i32
    scf.if %2 {
      %cst_19 = arith.constant 0.000000e+00 : f32
      %35 = vector.broadcast %cst_19 : f32 to vector<16x96xf32>
      %c0_20 = arith.constant 0 : index
      %c0_21 = arith.constant 0 : index
      %36 = vector.load %arg9[%c0_20, %c0_21] : memref<16x96xf32, #tpu.memory_space<vmem>>, vector<16x96xf32>
      tpu.vector_store %arg9[%c0_20, %c0_21], %35 {strides = array<i32>} : memref<16x96xf32, #tpu.memory_space<vmem>>, vector<16x96xf32>,
    } else {
    }
    %c0 = arith.constant 0 : index
    %c0_1 = arith.constant 0 : index
    %3 = vector.load %arg3[%c0, %c0_1] : memref<16x32xf32, #tpu.memory_space<vmem>>, vector<16x32xf32>
    %cst = arith.constant dense<0.000000e+00> : vector<16xf32>
    %4 = vector.multi_reduction <add>, %3, %cst [1] : vector<16x32xf32> to vector<16xf32>
    %5 = vector.shape_cast %4 : vector<16xf32> to vector<16x1xf32>
    %cst_2 = arith.constant 3.200000e+01 : f32
    %6 = vector.broadcast %cst_2 : f32 to vector<16x1xf32>
    %7 = arith.divf %5, %6 : vector<16x1xf32>
    %8 = vector.broadcast %7 : vector<16x1xf32> to vector<16x32xf32>
    %9 = arith.subf %3, %8 : vector<16x32xf32>
    %10 = arith.mulf %9, %9 : vector<16x32xf32>
    %cst_3 = arith.constant dense<0.000000e+00> : vector<16xf32>
    %11 = vector.multi_reduction <add>, %10, %cst_3 [1] : vector<16x32xf32> to vector<16xf32>
    %12 = vector.shape_cast %11 : vector<16xf32> to vector<16x1xf32>
    %cst_4 = arith.constant 3.200000e+01 : f32
    %13 = vector.broadcast %cst_4 : f32 to vector<16x1xf32>
    %14 = arith.divf %12, %13 : vector<16x1xf32>
    %cst_5 = arith.constant 9.99999997E-7 : f32
    %15 = vector.broadcast %cst_5 : f32 to vector<16x1xf32>
    %16 = arith.addf %14, %15 : vector<16x1xf32>
    %17 = math.rsqrt %16 : vector<16x1xf32>
    %18 = vector.broadcast %17 : vector<16x1xf32> to vector<16x32xf32>
    %19 = arith.mulf %9, %18 : vector<16x32xf32>
    %c0_6 = arith.constant 0 : index
    %c0_7 = arith.constant 0 : index
    %20 = vector.load %arg6[%c0_6, %c0_7] : memref<1x32xf32, #tpu.memory_space<vmem>>, vector<1x32xf32>
    %21 = vector.broadcast %20 : vector<1x32xf32> to vector<16x32xf32>
    %22 = arith.mulf %19, %21 : vector<16x32xf32>
    %c0_8 = arith.constant 0 : index
    %c0_9 = arith.constant 0 : index
    %23 = vector.load %arg7[%c0_8, %c0_9] : memref<1x32xf32, #tpu.memory_space<vmem>>, vector<1x32xf32>
    %24 = vector.broadcast %23 : vector<1x32xf32> to vector<16x32xf32>
    %25 = arith.addf %22, %24 : vector<16x32xf32>
    %c0_10 = arith.constant 0 : index
    %c0_11 = arith.constant 0 : index
    %26 = vector.load %arg9[%c0_10, %c0_11] : memref<16x96xf32, #tpu.memory_space<vmem>>, vector<16x96xf32>
    %27 = arith.truncf %25 : vector<16x32xf32> to vector<16x32xbf16>
    %c0_12 = arith.constant 0 : index
    %c0_13 = arith.constant 0 : index
    %28 = vector.load %arg4[%c0_12, %c0_13] : memref<32x96xbf16, #tpu.memory_space<vmem>>, vector<32x96xbf16>
    %cst_14 = arith.constant dense<0.000000e+00> : vector<16x96xf32>
    %29 = tpu.matmul %27, %28, %cst_14 {dimension_numbers = #tpu.dot_dimension_numbers<[1], [0], [0], [1], [0, 0, 1, 1], [], []>} : vector<16x32xbf16>, vector<32x96xbf16>, vector<16x96xf32> -> vector<16x96xf32>
    %30 = arith.addf %26, %29 : vector<16x96xf32>
    %c0_15 = arith.constant 0 : index
    %c0_16 = arith.constant 0 : index
    %31 = vector.load %arg9[%c0_15, %c0_16] : memref<16x96xf32, #tpu.memory_space<vmem>>, vector<16x96xf32>
    tpu.vector_store %arg9[%c0_15, %c0_16], %30 {strides = array<i32>} : memref<16x96xf32, #tpu.memory_space<vmem>>, vector<16x96xf32>,
    %c0_i32_17 = arith.constant 0 : i32
    %32 = arith.cmpi eq, %arg2, %c0_i32_17 : i32
    %33 = arith.extui %32 : i1 to i32
    %c0_i32_18 = arith.constant 0 : i32
    %34 = arith.cmpi ne, %33, %c0_i32_18 : i32
    scf.if %34 {
      %c0_19 = arith.constant 0 : index
      %c0_20 = arith.constant 0 : index
      %35 = vector.load %arg9[%c0_19, %c0_20] : memref<16x96xf32, #tpu.memory_space<vmem>>, vector<16x96xf32>
      %c0_21 = arith.constant 0 : index
      %c0_22 = arith.constant 0 : index
      %36 = vector.load %arg5[%c0_21, %c0_22] : memref<1x96xf32, #tpu.memory_space<vmem>>, vector<1x96xf32>
      %37 = vector.broadcast %36 : vector<1x96xf32> to vector<16x96xf32>
      %38 = arith.addf %35, %37 : vector<16x96xf32>
      %c0_23 = arith.constant 0 : index
      %c0_24 = arith.constant 0 : index
      %39 = vector.load %arg8[%c0_23, %c0_24] : memref<16x96xf32, #tpu.memory_space<vmem>>, vector<16x96xf32>
      tpu.vector_store %arg8[%c0_23, %c0_24], %38 {strides = array<i32>} : memref<16x96xf32, #tpu.memory_space<vmem>>, vector<16x96xf32>,
    } else {
    }
    return
  }
  func.func @transform_0(%arg0: i32, %arg1: i32, %arg2: i32) -> (i32, i32) {
    %c0_i32 = arith.constant 0 : i32
    return %arg0, %arg2 : i32, i32
  }
  func.func @transform_1(%arg0: i32, %arg1: i32, %arg2: i32) -> (i32, i32) {
    %c0_i32 = arith.constant 0 : i32
    return %arg2, %arg1 : i32, i32
  }
  func.func @transform_2(%arg0: i32, %arg1: i32, %arg2: i32) -> (i32, i32) {
    %c0_i32 = arith.constant 0 : i32
    %c0_i32_0 = arith.constant 0 : i32
    return %c0_i32, %arg1 : i32, i32
  }
  func.func @transform_3(%arg0: i32, %arg1: i32, %arg2: i32) -> (i32, i32) {
    %c0_i32 = arith.constant 0 : i32
    %c0_i32_0 = arith.constant 0 : i32
    return %c0_i32, %arg2 : i32, i32
  }
  func.func @transform_4(%arg0: i32, %arg1: i32, %arg2: i32) -> (i32, i32) {
    %c0_i32 = arith.constant 0 : i32
    %c0_i32_0 = arith.constant 0 : i32
    return %c0_i32, %arg2 : i32, i32
  }
  func.func @transform_5(%arg0: i32, %arg1: i32, %arg2: i32) -> (i32, i32) {
    %c0_i32 = arith.constant 0 : i32
    return %arg0, %arg1 : i32, i32
  }
}

module attributes {stable_mosaic.version = 11 : i64} {
  func.func @_mha_kernel(%arg0: i32, %arg1: i32, %arg2: memref<1x4x5x8xf32, #tpu.memory_space<vmem>>, %arg3: memref<1x4x5x8xf32, #tpu.memory_space<vmem>>, %arg4: memref<1x4x5x8xf32, #tpu.memory_space<vmem>>, %arg5: memref<1x5x32xf32, #tpu.memory_space<vmem>>) attributes {dimension_semantics = [#tpu.dimension_semantics<parallel>, #tpu.dimension_semantics<parallel>], iteration_bounds = array<i64: 2, 1>, scalar_prefetch = 0 : i64, scratch_operands = 0 : i64, tpu.core_type = #tpu.core_type<tc>, window_params = [{transform_indices = @transform_0, window_bounds = array<i64: 1, 4, 5, 8>}, {transform_indices = @transform_1, window_bounds = array<i64: 1, 4, 5, 8>}, {transform_indices = @transform_2, window_bounds = array<i64: 1, 4, 5, 8>}, {transform_indices = @transform_3, window_bounds = array<i64: 1, 5, 32>}]} {
    %c0 = arith.constant 0 : index
    %c0_0 = arith.constant 0 : index
    %c0_1 = arith.constant 0 : index
    %c0_2 = arith.constant 0 : index
    %0 = vector.load %arg2[%c0, %c0_0, %c0_1, %c0_2] : memref<1x4x5x8xf32, #tpu.memory_space<vmem>>, vector<1x4x5x8xf32>
    %1 = vector.shape_cast %0 : vector<1x4x5x8xf32> to vector<4x5x8xf32>
    %2 = arith.truncf %1 : vector<4x5x8xf32> to vector<4x5x8xbf16>
    %c0_3 = arith.constant 0 : index
    %c0_4 = arith.constant 0 : index
    %c0_5 = arith.constant 0 : index
    %c0_6 = arith.constant 0 : index
    %3 = vector.load %arg3[%c0_3, %c0_4, %c0_5, %c0_6] : memref<1x4x5x8xf32, #tpu.memory_space<vmem>>, vector<1x4x5x8xf32>
    %4 = vector.shape_cast %3 : vector<1x4x5x8xf32> to vector<4x5x8xf32>
    %5 = arith.truncf %4 : vector<4x5x8xf32> to vector<4x5x8xbf16>
    %c0_7 = arith.constant 0 : index
    %c0_8 = arith.constant 0 : index
    %c0_9 = arith.constant 0 : index
    %c0_10 = arith.constant 0 : index
    %6 = vector.load %arg4[%c0_7, %c0_8, %c0_9, %c0_10] : memref<1x4x5x8xf32, #tpu.memory_space<vmem>>, vector<1x4x5x8xf32>
    %7 = vector.shape_cast %6 : vector<1x4x5x8xf32> to vector<4x5x8xf32>
    %8 = arith.truncf %7 : vector<4x5x8xf32> to vector<4x5x8xbf16>
    "tpu.trace_start"() <{level = 10 : i32, message = "hqd,hkd->hqk"}> : () -> ()
    %cst = arith.constant dense<0.000000e+00> : vector<4x5x5xf32>
    %9 = tpu.matmul %2, %5, %cst {dimension_numbers = #tpu.dot_dimension_numbers<[2], [2], [1], [1], [0, 0, 0, 1, 1, 1], [0], [0]>} : vector<4x5x8xbf16>, vector<4x5x8xbf16>, vector<4x5x5xf32> -> vector<4x5x5xf32>
    "tpu.trace_stop"() : () -> ()
    %cst_11 = arith.constant 0.353553385 : f32
    %10 = vector.broadcast %cst_11 : f32 to vector<4x5x5xf32>
    %11 = arith.mulf %9, %10 : vector<4x5x5xf32>
    %cst_12 = arith.constant dense<0xFF800000> : vector<4x5xf32>
    %12 = vector.multi_reduction <maximumf>, %11, %cst_12 [2] : vector<4x5x5xf32> to vector<4x5xf32>
    %13 = vector.shape_cast %12 : vector<4x5xf32> to vector<4x5x1xf32>
    %14 = vector.broadcast %13 : vector<4x5x1xf32> to vector<4x5x5xf32>
    %15 = arith.subf %11, %14 : vector<4x5x5xf32>
    %16 = math.exp %15 : vector<4x5x5xf32>
    %cst_13 = arith.constant dense<0.000000e+00> : vector<4x5xf32>
    %17 = vector.multi_reduction <add>, %16, %cst_13 [2] : vector<4x5x5xf32> to vector<4x5xf32>
    %18 = vector.shape_cast %17 : vector<4x5xf32> to vector<4x5x1xf32>
    %19 = vector.broadcast %18 : vector<4x5x1xf32> to vector<4x5x5xf32>
    %20 = arith.divf %16, %19 : vector<4x5x5xf32>
    %21 = arith.truncf %20 : vector<4x5x5xf32> to vector<4x5x5xbf16>
    "tpu.trace_start"() <{level = 10 : i32, message = "hqk,hkd->hqd"}> : () -> ()
    %cst_14 = arith.constant dense<0.000000e+00> : vector<4x5x8xf32>
    %22 = tpu.matmul %21, %8, %cst_14 {dimension_numbers = #tpu.dot_dimension_numbers<[2], [1], [1], [2], [0, 0, 0, 1, 1, 2], [0], [0]>} : vector<4x5x5xbf16>, vector<4x5x8xbf16>, vector<4x5x8xf32> -> vector<4x5x8xf32>
    "tpu.trace_stop"() : () -> ()
    %23 = vector.extract_strided_slice %22 {offsets = [0, 0, 0], sizes = [1, 5, 8], strides = [1, 1, 1]} : vector<4x5x8xf32> to vector<1x5x8xf32>
    %24 = vector.shape_cast %23 : vector<1x5x8xf32> to vector<5x8xf32>
    %c0_15 = arith.constant 0 : index
    %c0_16 = arith.constant 0 : index
    %c0_17 = arith.constant 0 : index
    %25 = vector.load %arg5[%c0_15, %c0_16, %c0_17] : memref<1x5x32xf32, #tpu.memory_space<vmem>>, vector<1x5x8xf32>
    %26 = vector.shape_cast %25 : vector<1x5x8xf32> to vector<5x8xf32>
    %27 = vector.shape_cast %24 : vector<5x8xf32> to vector<1x5x8xf32>
    tpu.vector_store %arg5[%c0_15, %c0_16, %c0_17], %27 {strides = array<i32>} : memref<1x5x32xf32, #tpu.memory_space<vmem>>, vector<1x5x8xf32>,
    %28 = vector.extract_strided_slice %22 {offsets = [1, 0, 0], sizes = [1, 5, 8], strides = [1, 1, 1]} : vector<4x5x8xf32> to vector<1x5x8xf32>
    %29 = vector.shape_cast %28 : vector<1x5x8xf32> to vector<5x8xf32>
    %c0_18 = arith.constant 0 : index
    %c0_19 = arith.constant 0 : index
    %c8 = arith.constant 8 : index
    %30 = vector.load %arg5[%c0_18, %c0_19, %c8] : memref<1x5x32xf32, #tpu.memory_space<vmem>>, vector<1x5x8xf32>
    %31 = vector.shape_cast %30 : vector<1x5x8xf32> to vector<5x8xf32>
    %32 = vector.shape_cast %29 : vector<5x8xf32> to vector<1x5x8xf32>
    tpu.vector_store %arg5[%c0_18, %c0_19, %c8], %32 {strides = array<i32>} : memref<1x5x32xf32, #tpu.memory_space<vmem>>, vector<1x5x8xf32>,
    %33 = vector.extract_strided_slice %22 {offsets = [2, 0, 0], sizes = [1, 5, 8], strides = [1, 1, 1]} : vector<4x5x8xf32> to vector<1x5x8xf32>
    %34 = vector.shape_cast %33 : vector<1x5x8xf32> to vector<5x8xf32>
    %c0_20 = arith.constant 0 : index
    %c0_21 = arith.constant 0 : index
    %c16 = arith.constant 16 : index
    %35 = vector.load %arg5[%c0_20, %c0_21, %c16] : memref<1x5x32xf32, #tpu.memory_space<vmem>>, vector<1x5x8xf32>
    %36 = vector.shape_cast %35 : vector<1x5x8xf32> to vector<5x8xf32>
    %37 = vector.shape_cast %34 : vector<5x8xf32> to vector<1x5x8xf32>
    tpu.vector_store %arg5[%c0_20, %c0_21, %c16], %37 {strides = array<i32>} : memref<1x5x32xf32, #tpu.memory_space<vmem>>, vector<1x5x8xf32>,
    %38 = vector.extract_strided_slice %22 {offsets = [3, 0, 0], sizes = [1, 5, 8], strides = [1, 1, 1]} : vector<4x5x8xf32> to vector<1x5x8xf32>
    %39 = vector.shape_cast %38 : vector<1x5x8xf32> to vector<5x8xf32>
    %c0_22 = arith.constant 0 : index
    %c0_23 = arith.constant 0 : index
    %c24 = arith.constant 24 : index
    %40 = vector.load %arg5[%c0_22, %c0_23, %c24] : memref<1x5x32xf32, #tpu.memory_space<vmem>>, vector<1x5x8xf32>
    %41 = vector.shape_cast %40 : vector<1x5x8xf32> to vector<5x8xf32>
    %42 = vector.shape_cast %39 : vector<5x8xf32> to vector<1x5x8xf32>
    tpu.vector_store %arg5[%c0_22, %c0_23, %c24], %42 {strides = array<i32>} : memref<1x5x32xf32, #tpu.memory_space<vmem>>, vector<1x5x8xf32>,
    return
  }
  func.func @transform_0(%arg0: i32, %arg1: i32) -> (i32, i32, i32, i32) {
    %c0_i32 = arith.constant 0 : i32
    %c0_i32_0 = arith.constant 0 : i32
    %c0_i32_1 = arith.constant 0 : i32
    return %arg0, %arg1, %c0_i32, %c0_i32_0 : i32, i32, i32, i32
  }
  func.func @transform_1(%arg0: i32, %arg1: i32) -> (i32, i32, i32, i32) {
    %c1_i32 = arith.constant 1 : i32
    %0 = arith.addi %c1_i32, %arg1 : i32
    %c0_i32 = arith.constant 0 : i32
    %c0_i32_0 = arith.constant 0 : i32
    %c0_i32_1 = arith.constant 0 : i32
    return %arg0, %0, %c0_i32, %c0_i32_0 : i32, i32, i32, i32
  }
  func.func @transform_2(%arg0: i32, %arg1: i32) -> (i32, i32, i32, i32) {
    %c2_i32 = arith.constant 2 : i32
    %0 = arith.addi %c2_i32, %arg1 : i32
    %c0_i32 = arith.constant 0 : i32
    %c0_i32_0 = arith.constant 0 : i32
    %c0_i32_1 = arith.constant 0 : i32
    return %arg0, %0, %c0_i32, %c0_i32_0 : i32, i32, i32, i32
  }
  func.func @transform_3(%arg0: i32, %arg1: i32) -> (i32, i32, i32) {
    %c0_i32 = arith.constant 0 : i32
    %c0_i32_0 = arith.constant 0 : i32
    return %arg0, %c0_i32, %arg1 : i32, i32, i32
  }
}

module attributes {stable_mosaic.version = 11 : i64} {
  func.func @_linear_kernel(%arg0: i32, %arg1: i32, %arg2: i32, %arg3: memref<16x32xf32, #tpu.memory_space<vmem>>, %arg4: memref<32x32xbf16, #tpu.memory_space<vmem>>, %arg5: memref<1x32xf32, #tpu.memory_space<vmem>>, %arg6: memref<1x32xf32, #tpu.memory_space<vmem>>, %arg7: memref<16x32xf32, #tpu.memory_space<vmem>>, %arg8: memref<16x32xf32, #tpu.memory_space<vmem>>, %arg9: memref<16x32xf32, #tpu.memory_space<vmem>>) attributes {dimension_semantics = [#tpu.dimension_semantics<parallel>, #tpu.dimension_semantics<parallel>, #tpu.dimension_semantics<arbitrary>], iteration_bounds = array<i64: 1, 1, 1>, scalar_prefetch = 0 : i64, scratch_operands = 1 : i64, tpu.core_type = #tpu.core_type<tc>, window_params = [{transform_indices = @transform_0, window_bounds = array<i64: 16, 32>}, {transform_indices = @transform_1, window_bounds = array<i64: 32, 32>}, {transform_indices = @transform_2, window_bounds = array<i64: 1, 32>}, {transform_indices = @transform_3, window_bounds = array<i64: 1, 32>}, {transform_indices = @transform_4, window_bounds = array<i64: 16, 32>}, {transform_indices = @transform_5, window_bounds = array<i64: 16, 32>}]} {
    %c0_i32 = arith.constant 0 : i32
    %0 = arith.cmpi eq, %arg2, %c0_i32 : i32
    %1 = arith.extui %0 : i1 to i32
    %c0_i32_0 = arith.constant 0 : i32
    %2 = arith.cmpi ne, %1, %c0_i32_0 : i32
    scf.if %2 {
      %cst_10 = arith.constant 0.000000e+00 : f32
      %13 = vector.broadcast %cst_10 : f32 to vector<16x32xf32>
      %c0_11 = arith.constant 0 : index
      %c0_12 = arith.constant 0 : index
      %14 = vector.load %arg9[%c0_11, %c0_12] : memref<16x32xf32, #tpu.memory_space<vmem>>, vector<16x32xf32>
      tpu.vector_store %arg9[%c0_11, %c0_12], %13 {strides = array<i32>} : memref<16x32xf32, #tpu.memory_space<vmem>>, vector<16x32xf32>,
    } else {
    }
    %c0 = arith.constant 0 : index
    %c0_1 = arith.constant 0 : index
    %3 = vector.load %arg3[%c0, %c0_1] : memref<16x32xf32, #tpu.memory_space<vmem>>, vector<16x32xf32>
    %c0_2 = arith.constant 0 : index
    %c0_3 = arith.constant 0 : index
    %4 = vector.load %arg9[%c0_2, %c0_3] : memref<16x32xf32, #tpu.memory_space<vmem>>, vector<16x32xf32>
    %5 = arith.truncf %3 : vector<16x32xf32> to vector<16x32xbf16>
    %c0_4 = arith.constant 0 : index
    %c0_5 = arith.constant 0 : index
    %6 = vector.load %arg4[%c0_4, %c0_5] : memref<32x32xbf16, #tpu.memory_space<vmem>>, vector<32x32xbf16>
    %cst = arith.constant dense<0.000000e+00> : vector<16x32xf32>
    %7 = tpu.matmul %5, %6, %cst {dimension_numbers = #tpu.dot_dimension_numbers<[1], [0], [0], [1], [0, 0, 1, 1], [], []>} : vector<16x32xbf16>, vector<32x32xbf16>, vector<16x32xf32> -> vector<16x32xf32>
    %8 = arith.addf %4, %7 : vector<16x32xf32>
    %c0_6 = arith.constant 0 : index
    %c0_7 = arith.constant 0 : index
    %9 = vector.load %arg9[%c0_6, %c0_7] : memref<16x32xf32, #tpu.memory_space<vmem>>, vector<16x32xf32>
    tpu.vector_store %arg9[%c0_6, %c0_7], %8 {strides = array<i32>} : memref<16x32xf32, #tpu.memory_space<vmem>>, vector<16x32xf32>,
    %c0_i32_8 = arith.constant 0 : i32
    %10 = arith.cmpi eq, %arg2, %c0_i32_8 : i32
    %11 = arith.extui %10 : i1 to i32
    %c0_i32_9 = arith.constant 0 : i32
    %12 = arith.cmpi ne, %11, %c0_i32_9 : i32
    scf.if %12 {
      %c0_10 = arith.constant 0 : index
      %c0_11 = arith.constant 0 : index
      %13 = vector.load %arg9[%c0_10, %c0_11] : memref<16x32xf32, #tpu.memory_space<vmem>>, vector<16x32xf32>
      %c0_12 = arith.constant 0 : index
      %c0_13 = arith.constant 0 : index
      %14 = vector.load %arg5[%c0_12, %c0_13] : memref<1x32xf32, #tpu.memory_space<vmem>>, vector<1x32xf32>
      %15 = vector.broadcast %14 : vector<1x32xf32> to vector<16x32xf32>
      %16 = arith.addf %13, %15 : vector<16x32xf32>
      %c0_14 = arith.constant 0 : index
      %c0_15 = arith.constant 0 : index
      %17 = vector.load %arg6[%c0_14, %c0_15] : memref<1x32xf32, #tpu.memory_space<vmem>>, vector<1x32xf32>
      %18 = vector.broadcast %17 : vector<1x32xf32> to vector<16x32xf32>
      %19 = arith.mulf %16, %18 : vector<16x32xf32>
      %c0_16 = arith.constant 0 : index
      %c0_17 = arith.constant 0 : index
      %20 = vector.load %arg7[%c0_16, %c0_17] : memref<16x32xf32, #tpu.memory_space<vmem>>, vector<16x32xf32>
      %21 = arith.addf %19, %20 : vector<16x32xf32>
      %c0_18 = arith.constant 0 : index
      %c0_19 = arith.constant 0 : index
      %22 = vector.load %arg8[%c0_18, %c0_19] : memref<16x32xf32, #tpu.memory_space<vmem>>, vector<16x32xf32>
      tpu.vector_store %arg8[%c0_18, %c0_19], %21 {strides = array<i32>} : memref<16x32xf32, #tpu.memory_space<vmem>>, vector<16x32xf32>,
    } else {
    }
    return
  }
  func.func @transform_0(%arg0: i32, %arg1: i32, %arg2: i32) -> (i32, i32) {
    %c0_i32 = arith.constant 0 : i32
    return %arg0, %arg2 : i32, i32
  }
  func.func @transform_1(%arg0: i32, %arg1: i32, %arg2: i32) -> (i32, i32) {
    %c0_i32 = arith.constant 0 : i32
    return %arg2, %arg1 : i32, i32
  }
  func.func @transform_2(%arg0: i32, %arg1: i32, %arg2: i32) -> (i32, i32) {
    %c0_i32 = arith.constant 0 : i32
    %c0_i32_0 = arith.constant 0 : i32
    return %c0_i32, %arg1 : i32, i32
  }
  func.func @transform_3(%arg0: i32, %arg1: i32, %arg2: i32) -> (i32, i32) {
    %c0_i32 = arith.constant 0 : i32
    %c0_i32_0 = arith.constant 0 : i32
    return %c0_i32, %arg1 : i32, i32
  }
  func.func @transform_4(%arg0: i32, %arg1: i32, %arg2: i32) -> (i32, i32) {
    %c0_i32 = arith.constant 0 : i32
    return %arg0, %arg1 : i32, i32
  }
  func.func @transform_5(%arg0: i32, %arg1: i32, %arg2: i32) -> (i32, i32) {
    %c0_i32 = arith.constant 0 : i32
    return %arg0, %arg1 : i32, i32
  }
}

module attributes {stable_mosaic.version = 11 : i64} {
  func.func @_linear_kernel(%arg0: i32, %arg1: i32, %arg2: i32, %arg3: memref<16x128xf32, #tpu.memory_space<vmem>>, %arg4: memref<128x32xbf16, #tpu.memory_space<vmem>>, %arg5: memref<1x32xf32, #tpu.memory_space<vmem>>, %arg6: memref<1x32xf32, #tpu.memory_space<vmem>>, %arg7: memref<16x32xf32, #tpu.memory_space<vmem>>, %arg8: memref<16x32xf32, #tpu.memory_space<vmem>>, %arg9: memref<16x32xf32, #tpu.memory_space<vmem>>) attributes {dimension_semantics = [#tpu.dimension_semantics<parallel>, #tpu.dimension_semantics<parallel>, #tpu.dimension_semantics<arbitrary>], iteration_bounds = array<i64: 1, 1, 1>, scalar_prefetch = 0 : i64, scratch_operands = 1 : i64, tpu.core_type = #tpu.core_type<tc>, window_params = [{transform_indices = @transform_0, window_bounds = array<i64: 16, 128>}, {transform_indices = @transform_1, window_bounds = array<i64: 128, 32>}, {transform_indices = @transform_2, window_bounds = array<i64: 1, 32>}, {transform_indices = @transform_3, window_bounds = array<i64: 1, 32>}, {transform_indices = @transform_4, window_bounds = array<i64: 16, 32>}, {transform_indices = @transform_5, window_bounds = array<i64: 16, 32>}]} {
    %c0_i32 = arith.constant 0 : i32
    %0 = arith.cmpi eq, %arg2, %c0_i32 : i32
    %1 = arith.extui %0 : i1 to i32
    %c0_i32_0 = arith.constant 0 : i32
    %2 = arith.cmpi ne, %1, %c0_i32_0 : i32
    scf.if %2 {
      %cst_10 = arith.constant 0.000000e+00 : f32
      %13 = vector.broadcast %cst_10 : f32 to vector<16x32xf32>
      %c0_11 = arith.constant 0 : index
      %c0_12 = arith.constant 0 : index
      %14 = vector.load %arg9[%c0_11, %c0_12] : memref<16x32xf32, #tpu.memory_space<vmem>>, vector<16x32xf32>
      tpu.vector_store %arg9[%c0_11, %c0_12], %13 {strides = array<i32>} : memref<16x32xf32, #tpu.memory_space<vmem>>, vector<16x32xf32>,
    } else {
    }
    %c0 = arith.constant 0 : index
    %c0_1 = arith.constant 0 : index
    %3 = vector.load %arg3[%c0, %c0_1] : memref<16x128xf32, #tpu.memory_space<vmem>>, vector<16x128xf32>
    %c0_2 = arith.constant 0 : index
    %c0_3 = arith.constant 0 : index
    %4 = vector.load %arg9[%c0_2, %c0_3] : memref<16x32xf32, #tpu.memory_space<vmem>>, vector<16x32xf32>
    %5 = arith.truncf %3 : vector<16x128xf32> to vector<16x128xbf16>
    %c0_4 = arith.constant 0 : index
    %c0_5 = arith.constant 0 : index
    %6 = vector.load %arg4[%c0_4, %c0_5] : memref<128x32xbf16, #tpu.memory_space<vmem>>, vector<128x32xbf16>
    %cst = arith.constant dense<0.000000e+00> : vector<16x32xf32>
    %7 = tpu.matmul %5, %6, %cst {dimension_numbers = #tpu.dot_dimension_numbers<[1], [0], [0], [1], [0, 0, 1, 1], [], []>} : vector<16x128xbf16>, vector<128x32xbf16>, vector<16x32xf32> -> vector<16x32xf32>
    %8 = arith.addf %4, %7 : vector<16x32xf32>
    %c0_6 = arith.constant 0 : index
    %c0_7 = arith.constant 0 : index
    %9 = vector.load %arg9[%c0_6, %c0_7] : memref<16x32xf32, #tpu.memory_space<vmem>>, vector<16x32xf32>
    tpu.vector_store %arg9[%c0_6, %c0_7], %8 {strides = array<i32>} : memref<16x32xf32, #tpu.memory_space<vmem>>, vector<16x32xf32>,
    %c0_i32_8 = arith.constant 0 : i32
    %10 = arith.cmpi eq, %arg2, %c0_i32_8 : i32
    %11 = arith.extui %10 : i1 to i32
    %c0_i32_9 = arith.constant 0 : i32
    %12 = arith.cmpi ne, %11, %c0_i32_9 : i32
    scf.if %12 {
      %c0_10 = arith.constant 0 : index
      %c0_11 = arith.constant 0 : index
      %13 = vector.load %arg9[%c0_10, %c0_11] : memref<16x32xf32, #tpu.memory_space<vmem>>, vector<16x32xf32>
      %c0_12 = arith.constant 0 : index
      %c0_13 = arith.constant 0 : index
      %14 = vector.load %arg5[%c0_12, %c0_13] : memref<1x32xf32, #tpu.memory_space<vmem>>, vector<1x32xf32>
      %15 = vector.broadcast %14 : vector<1x32xf32> to vector<16x32xf32>
      %16 = arith.addf %13, %15 : vector<16x32xf32>
      %c0_14 = arith.constant 0 : index
      %c0_15 = arith.constant 0 : index
      %17 = vector.load %arg6[%c0_14, %c0_15] : memref<1x32xf32, #tpu.memory_space<vmem>>, vector<1x32xf32>
      %18 = vector.broadcast %17 : vector<1x32xf32> to vector<16x32xf32>
      %19 = arith.mulf %16, %18 : vector<16x32xf32>
      %c0_16 = arith.constant 0 : index
      %c0_17 = arith.constant 0 : index
      %20 = vector.load %arg7[%c0_16, %c0_17] : memref<16x32xf32, #tpu.memory_space<vmem>>, vector<16x32xf32>
      %21 = arith.addf %19, %20 : vector<16x32xf32>
      %c0_18 = arith.constant 0 : index
      %c0_19 = arith.constant 0 : index
      %22 = vector.load %arg8[%c0_18, %c0_19] : memref<16x32xf32, #tpu.memory_space<vmem>>, vector<16x32xf32>
      tpu.vector_store %arg8[%c0_18, %c0_19], %21 {strides = array<i32>} : memref<16x32xf32, #tpu.memory_space<vmem>>, vector<16x32xf32>,
    } else {
    }
    return
  }
  func.func @transform_0(%arg0: i32, %arg1: i32, %arg2: i32) -> (i32, i32) {
    %c0_i32 = arith.constant 0 : i32
    return %arg0, %arg2 : i32, i32
  }
  func.func @transform_1(%arg0: i32, %arg1: i32, %arg2: i32) -> (i32, i32) {
    %c0_i32 = arith.constant 0 : i32
    return %arg2, %arg1 : i32, i32
  }
  func.func @transform_2(%arg0: i32, %arg1: i32, %arg2: i32) -> (i32, i32) {
    %c0_i32 = arith.constant 0 : i32
    %c0_i32_0 = arith.constant 0 : i32
    return %c0_i32, %arg1 : i32, i32
  }
  func.func @transform_3(%arg0: i32, %arg1: i32, %arg2: i32) -> (i32, i32) {
    %c0_i32 = arith.constant 0 : i32
    %c0_i32_0 = arith.constant 0 : i32
    return %c0_i32, %arg1 : i32, i32
  }
  func.func @transform_4(%arg0: i32, %arg1: i32, %arg2: i32) -> (i32, i32) {
    %c0_i32 = arith.constant 0 : i32
    return %arg0, %arg1 : i32, i32
  }
  func.func @transform_5(%arg0: i32, %arg1: i32, %arg2: i32) -> (i32, i32) {
    %c0_i32 = arith.constant 0 : i32
    return %arg0, %arg1 : i32, i32
  }
}

module attributes {stable_mosaic.version = 11 : i64} {
  func.func @_linear_kernel(%arg0: i32, %arg1: i32, %arg2: i32, %arg3: memref<16x32xf32, #tpu.memory_space<vmem>>, %arg4: memref<32x128xbf16, #tpu.memory_space<vmem>>, %arg5: memref<1x128xf32, #tpu.memory_space<vmem>>, %arg6: memref<1x32xf32, #tpu.memory_space<vmem>>, %arg7: memref<1x32xf32, #tpu.memory_space<vmem>>, %arg8: memref<16x128xf32, #tpu.memory_space<vmem>>, %arg9: memref<16x128xf32, #tpu.memory_space<vmem>>) attributes {dimension_semantics = [#tpu.dimension_semantics<parallel>, #tpu.dimension_semantics<parallel>, #tpu.dimension_semantics<arbitrary>], iteration_bounds = array<i64: 1, 1, 1>, scalar_prefetch = 0 : i64, scratch_operands = 1 : i64, tpu.core_type = #tpu.core_type<tc>, window_params = [{transform_indices = @transform_0, window_bounds = array<i64: 16, 32>}, {transform_indices = @transform_1, window_bounds = array<i64: 32, 128>}, {transform_indices = @transform_2, window_bounds = array<i64: 1, 128>}, {transform_indices = @transform_3, window_bounds = array<i64: 1, 32>}, {transform_indices = @transform_4, window_bounds = array<i64: 1, 32>}, {transform_indices = @transform_5, window_bounds = array<i64: 16, 128>}]} {
    %c0_i32 = arith.constant 0 : i32
    %0 = arith.cmpi eq, %arg2, %c0_i32 : i32
    %1 = arith.extui %0 : i1 to i32
    %c0_i32_0 = arith.constant 0 : i32
    %2 = arith.cmpi ne, %1, %c0_i32_0 : i32
    scf.if %2 {
      %cst_19 = arith.constant 0.000000e+00 : f32
      %35 = vector.broadcast %cst_19 : f32 to vector<16x128xf32>
      %c0_20 = arith.constant 0 : index
      %c0_21 = arith.constant 0 : index
      %36 = vector.load %arg9[%c0_20, %c0_21] : memref<16x128xf32, #tpu.memory_space<vmem>>, vector<16x128xf32>
      tpu.vector_store %arg9[%c0_20, %c0_21], %35 {strides = array<i32>} : memref<16x128xf32, #tpu.memory_space<vmem>>, vector<16x128xf32>,
    } else {
    }
    %c0 = arith.constant 0 : index
    %c0_1 = arith.constant 0 : index
    %3 = vector.load %arg3[%c0, %c0_1] : memref<16x32xf32, #tpu.memory_space<vmem>>, vector<16x32xf32>
    %cst = arith.constant dense<0.000000e+00> : vector<16xf32>
    %4 = vector.multi_reduction <add>, %3, %cst [1] : vector<16x32xf32> to vector<16xf32>
    %5 = vector.shape_cast %4 : vector<16xf32> to vector<16x1xf32>
    %cst_2 = arith.constant 3.200000e+01 : f32
    %6 = vector.broadcast %cst_2 : f32 to vector<16x1xf32>
    %7 = arith.divf %5, %6 : vector<16x1xf32>
    %8 = vector.broadcast %7 : vector<16x1xf32> to vector<16x32xf32>
    %9 = arith.subf %3, %8 : vector<16x32xf32>
    %10 = arith.mulf %9, %9 : vector<16x32xf32>
    %cst_3 = arith.constant dense<0.000000e+00> : vector<16xf32>
    %11 = vector.multi_reduction <add>, %10, %cst_3 [1] : vector<16x32xf32> to vector<16xf32>
    %12 = vector.shape_cast %11 : vector<16xf32> to vector<16x1xf32>
    %cst_4 = arith.constant 3.200000e+01 : f32
    %13 = vector.broadcast %cst_4 : f32 to vector<16x1xf32>
    %14 = arith.divf %12, %13 : vector<16x1xf32>
    %cst_5 = arith.constant 9.99999997E-7 : f32
    %15 = vector.broadcast %cst_5 : f32 to vector<16x1xf32>
    %16 = arith.addf %14, %15 : vector<16x1xf32>
    %17 = math.rsqrt %16 : vector<16x1xf32>
    %18 = vector.broadcast %17 : vector<16x1xf32> to vector<16x32xf32>
    %19 = arith.mulf %9, %18 : vector<16x32xf32>
    %c0_6 = arith.constant 0 : index
    %c0_7 = arith.constant 0 : index
    %20 = vector.load %arg6[%c0_6, %c0_7] : memref<1x32xf32, #tpu.memory_space<vmem>>, vector<1x32xf32>
    %21 = vector.broadcast %20 : vector<1x32xf32> to vector<16x32xf32>
    %22 = arith.mulf %19, %21 : vector<16x32xf32>
    %c0_8 = arith.constant 0 : index
    %c0_9 = arith.constant 0 : index
    %23 = vector.load %arg7[%c0_8, %c0_9] : memref<1x32xf32, #tpu.memory_space<vmem>>, vector<1x32xf32>
    %24 = vector.broadcast %23 : vector<1x32xf32> to vector<16x32xf32>
    %25 = arith.addf %22, %24 : vector<16x32xf32>
    %c0_10 = arith.constant 0 : index
    %c0_11 = arith.constant 0 : index
    %26 = vector.load %arg9[%c0_10, %c0_11] : memref<16x128xf32, #tpu.memory_space<vmem>>, vector<16x128xf32>
    %27 = arith.truncf %25 : vector<16x32xf32> to vector<16x32xbf16>
    %c0_12 = arith.constant 0 : index
    %c0_13 = arith.constant 0 : index
    %28 = vector.load %arg4[%c0_12, %c0_13] : memref<32x128xbf16, #tpu.memory_space<vmem>>, vector<32x128xbf16>
    %cst_14 = arith.constant dense<0.000000e+00> : vector<16x128xf32>
    %29 = tpu.matmul %27, %28, %cst_14 {dimension_numbers = #tpu.dot_dimension_numbers<[1], [0], [0], [1], [0, 0, 1, 1], [], []>} : vector<16x32xbf16>, vector<32x128xbf16>, vector<16x128xf32> -> vector<16x128xf32>
    %30 = arith.addf %26, %29 : vector<16x128xf32>
    %c0_15 = arith.constant 0 : index
    %c0_16 = arith.constant 0 : index
    %31 = vector.load %arg9[%c0_15, %c0_16] : memref<16x128xf32, #tpu.memory_space<vmem>>, vector<16x128xf32>
    tpu.vector_store %arg9[%c0_15, %c0_16], %30 {strides = array<i32>} : memref<16x128xf32, #tpu.memory_space<vmem>>, vector<16x128xf32>,
    %c0_i32_17 = arith.constant 0 : i32
    %32 = arith.cmpi eq, %arg2, %c0_i32_17 : i32
    %33 = arith.extui %32 : i1 to i32
    %c0_i32_18 = arith.constant 0 : i32
    %34 = arith.cmpi ne, %33, %c0_i32_18 : i32
    scf.if %34 {
      %c0_19 = arith.constant 0 : index
      %c0_20 = arith.constant 0 : index
      %35 = vector.load %arg9[%c0_19, %c0_20] : memref<16x128xf32, #tpu.memory_space<vmem>>, vector<16x128xf32>
      %c0_21 = arith.constant 0 : index
      %c0_22 = arith.constant 0 : index
      %36 = vector.load %arg5[%c0_21, %c0_22] : memref<1x128xf32, #tpu.memory_space<vmem>>, vector<1x128xf32>
      %37 = vector.broadcast %36 : vector<1x128xf32> to vector<16x128xf32>
      %38 = arith.addf %35, %37 : vector<16x128xf32>
      %cst_23 = arith.constant 5.000000e-01 : f32
      %39 = vector.broadcast %cst_23 : f32 to vector<16x128xf32>
      %40 = arith.mulf %39, %38 : vector<16x128xf32>
      %cst_24 = arith.constant 0.707106769 : f32
      %41 = vector.broadcast %cst_24 : f32 to vector<16x128xf32>
      %42 = arith.mulf %38, %41 : vector<16x128xf32>
      %43 = math.erf %42 : vector<16x128xf32>
      %cst_25 = arith.constant 1.000000e+00 : f32
      %44 = vector.broadcast %cst_25 : f32 to vector<16x128xf32>
      %45 = arith.addf %44, %43 : vector<16x128xf32>
      %46 = arith.mulf %40, %45 : vector<16x128xf32>
      %c0_26 = arith.constant 0 : index
      %c0_27 = arith.constant 0 : index
      %47 = vector.load %arg8[%c0_26, %c0_27] : memref<16x128xf32, #tpu.memory_space<vmem>>, vector<16x128xf32>
      tpu.vector_store %arg8[%c0_26, %c0_27], %46 {strides = array<i32>} : memref<16x128xf32, #tpu.memory_space<vmem>>, vector<16x128xf32>,
    } else {
    }
    return
  }
  func.func @transform_0(%arg0: i32, %arg1: i32, %arg2: i32) -> (i32, i32) {
    %c0_i32 = arith.constant 0 : i32
    return %arg0, %arg2 : i32, i32
  }
  func.func @transform_1(%arg0: i32, %arg1: i32, %arg2: i32) -> (i32, i32) {
    %c0_i32 = arith.constant 0 : i32
    return %arg2, %arg1 : i32, i32
  }
  func.func @transform_2(%arg0: i32, %arg1: i32, %arg2: i32) -> (i32, i32) {
    %c0_i32 = arith.constant 0 : i32
    %c0_i32_0 = arith.constant 0 : i32
    return %c0_i32, %arg1 : i32, i32
  }
  func.func @transform_3(%arg0: i32, %arg1: i32, %arg2: i32) -> (i32, i32) {
    %c0_i32 = arith.constant 0 : i32
    %c0_i32_0 = arith.constant 0 : i32
    return %c0_i32, %arg2 : i32, i32
  }
  func.func @transform_4(%arg0: i32, %arg1: i32, %arg2: i32) -> (i32, i32) {
    %c0_i32 = arith.constant 0 : i32
    %c0_i32_0 = arith.constant 0 : i32
    return %c0_i32, %arg2 : i32, i32
  }
  func.func @transform_5(%arg0: i32, %arg1: i32, %arg2: i32) -> (i32, i32) {
    %c0_i32 = arith.constant 0 : i32
    return %arg0, %arg1 : i32, i32
  }
}

module attributes {stable_mosaic.version = 11 : i64} {
  func.func @_layernorm_kernel(%arg0: i32, %arg1: memref<16x32xf32, #tpu.memory_space<vmem>>, %arg2: memref<1x32xf32, #tpu.memory_space<vmem>>, %arg3: memref<1x32xf32, #tpu.memory_space<vmem>>, %arg4: memref<16x32xf32, #tpu.memory_space<vmem>>) attributes {dimension_semantics = [#tpu.dimension_semantics<parallel>], iteration_bounds = array<i64: 1>, scalar_prefetch = 0 : i64, scratch_operands = 0 : i64, tpu.core_type = #tpu.core_type<tc>, window_params = [{transform_indices = @transform_0, window_bounds = array<i64: 16, 32>}, {pipeline_mode = #tpu.pipeline_mode<synchronous>, transform_indices = @transform_1, window_bounds = array<i64: 1, 32>}, {pipeline_mode = #tpu.pipeline_mode<synchronous>, transform_indices = @transform_2, window_bounds = array<i64: 1, 32>}, {transform_indices = @transform_3, window_bounds = array<i64: 16, 32>}]} {
    %c0 = arith.constant 0 : index
    %c0_0 = arith.constant 0 : index
    %0 = vector.load %arg1[%c0, %c0_0] : memref<16x32xf32, #tpu.memory_space<vmem>>, vector<16x32xf32>
    %cst = arith.constant dense<0.000000e+00> : vector<16xf32>
    %1 = vector.multi_reduction <add>, %0, %cst [1] : vector<16x32xf32> to vector<16xf32>
    %2 = vector.shape_cast %1 : vector<16xf32> to vector<16x1xf32>
    %cst_1 = arith.constant 3.200000e+01 : f32
    %3 = vector.broadcast %cst_1 : f32 to vector<16x1xf32>
    %4 = arith.divf %2, %3 : vector<16x1xf32>
    %5 = vector.broadcast %4 : vector<16x1xf32> to vector<16x32xf32>
    %6 = arith.subf %0, %5 : vector<16x32xf32>
    %7 = arith.mulf %6, %6 : vector<16x32xf32>
    %cst_2 = arith.constant dense<0.000000e+00> : vector<16xf32>
    %8 = vector.multi_reduction <add>, %7, %cst_2 [1] : vector<16x32xf32> to vector<16xf32>
    %9 = vector.shape_cast %8 : vector<16xf32> to vector<16x1xf32>
    %cst_3 = arith.constant 3.200000e+01 : f32
    %10 = vector.broadcast %cst_3 : f32 to vector<16x1xf32>
    %11 = arith.divf %9, %10 : vector<16x1xf32>
    %cst_4 = arith.constant 9.99999997E-7 : f32
    %12 = vector.broadcast %cst_4 : f32 to vector<16x1xf32>
    %13 = arith.addf %11, %12 : vector<16x1xf32>
    %14 = math.rsqrt %13 : vector<16x1xf32>
    %15 = vector.broadcast %14 : vector<16x1xf32> to vector<16x32xf32>
    %16 = arith.mulf %6, %15 : vector<16x32xf32>
    %c0_5 = arith.constant 0 : index
    %c0_6 = arith.constant 0 : index
    %17 = vector.load %arg2[%c0_5, %c0_6] : memref<1x32xf32, #tpu.memory_space<vmem>>, vector<1x32xf32>
    %18 = vector.broadcast %17 : vector<1x32xf32> to vector<16x32xf32>
    %19 = arith.mulf %16, %18 : vector<16x32xf32>
    %c0_7 = arith.constant 0 : index
    %c0_8 = arith.constant 0 : index
    %20 = vector.load %arg3[%c0_7, %c0_8] : memref<1x32xf32, #tpu.memory_space<vmem>>, vector<1x32xf32>
    %21 = vector.broadcast %20 : vector<1x32xf32> to vector<16x32xf32>
    %22 = arith.addf %19, %21 : vector<16x32xf32>
    %c0_9 = arith.constant 0 : index
    %c0_10 = arith.constant 0 : index
    %23 = vector.load %arg4[%c0_9, %c0_10] : memref<16x32xf32, #tpu.memory_space<vmem>>, vector<16x32xf32>
    tpu.vector_store %arg4[%c0_9, %c0_10], %22 {strides = array<i32>} : memref<16x32xf32, #tpu.memory_space<vmem>>, vector<16x32xf32>,
    return
  }
  func.func @transform_0(%arg0: i32) -> (i32, i32) {
    %c0_i32 = arith.constant 0 : i32
    %c0_i32_0 = arith.constant 0 : i32
    return %arg0, %c0_i32 : i32, i32
  }
  func.func @transform_1(%arg0: i32) -> (i32, i32) {
    %c0_i32 = arith.constant 0 : i32
    %c0_i32_0 = arith.constant 0 : i32
    %c0_i32_1 = arith.constant 0 : i32
    return %c0_i32, %c0_i32_0 : i32, i32
  }
  func.func @transform_2(%arg0: i32) -> (i32, i32) {
    %c0_i32 = arith.constant 0 : i32
    %c0_i32_0 = arith.constant 0 : i32
    %c0_i32_1 = arith.constant 0 : i32
    return %c0_i32, %c0_i32_0 : i32, i32
  }
  func.func @transform_3(%arg0: i32) -> (i32, i32) {
    %c0_i32 = arith.constant 0 : i32
    %c0_i32_0 = arith.constant 0 : i32
    return %arg0, %c0_i32 : i32, i32
  }
}

</mosaic_0001>

<llo_original>
// kernel: _lambda_.38
$region0: #{_lambda_.38}
  #allocation0 [shape = 'u32[]', space=smem, size = 0x4, offset = 0x4, fixed_abs, tag = 'smem constant byte address 0x4 - core index']
  #allocation1 [shape = 'u32[144,128]{1,0:T(1,128)}', space=vmem, size = 0x12000, scoped, tag = 'internal scratch']
  %s0 = inlined_call_operand.vmem [shape: f32[16,32], index: 0, kind: input, shape index: {}]
  %s1 = inlined_call_operand.vmem [shape: f32[1,32], index: 1, kind: input, shape index: {}]
  %s2 = inlined_call_operand.vmem [shape: f32[1,32], index: 2, kind: input, shape index: {}]
  %s3 = inlined_call_operand.vmem [shape: f32[16,32], index: 3, kind: output, shape index: {}]
  %s4 = sld [smem:[#allocation0]]
  $region22: #{_lambda_.38} parent=0
    _
  %s6 = ssub.s32 1, %s4
  %s7 = scalar_select 0, %s6, %s4
  // Predicated region
  $region2: #{_lambda_.38} parent=0 // pred_check
    _
  $region3: #{_lambda_.38} parent=0 // pred_check_branch
    %9 = sbr.rel (0) target = $region5
  $region4: #{_lambda_.38} parent=0 // pred_region
    _
  $region5: #{_lambda_.38} parent=0 // pred_fallthru
    _
  // Predicated region
  $region6: #{_lambda_.38} parent=0 // pred_check
    _
  $region7: #{_lambda_.38} parent=0 // pred_check_branch
    %11 = sbr.rel (0) target = $region9
  $region8: #{_lambda_.38} parent=0 // pred_region
    _
  $region9: #{_lambda_.38} parent=0 // pred_fallthru
    _
  // Predicated region
  $region10: #{_lambda_.38} parent=0 // pred_check
    _
  $region11: #{_lambda_.38} parent=0 // pred_check_branch
    %13 = sbr.rel (0) target = $region13
  $region12: #{_lambda_.38} parent=0 // pred_region
    _
  $region13: #{_lambda_.38} parent=0 // pred_fallthru
    _
  %v14 = vld [vmem:[%s0] sm:$0xff]
  %v15 = vld [vmem:[%s0 + $0x8] sm:$0xff]
  %vm16 = vcmask 261120
  %v17 = vsel %vm16, %v14, 0.0
  %18 = vadd.xlane.f32.xlu0 %v17
  %v19 = vpop.xlane.xlu0 %18
  %v20 = vsel %vm16, %v15, 0.0
  %21 = vadd.xlane.f32.xlu0 %v20
  %v22 = vpop.xlane.xlu0 %21
  %v23 = vrcp.pop 32.0
  %v24 = vmul.f32 %v19, %v23
  %v25 = vmul.f32 %v22, %v23
  %v26 = vsub.f32 %v14, %v24
  %v27 = vsub.f32 %v15, %v25
  %v28 = vmul.f32 %v26, %v26
  %v29 = vmul.f32 %v27, %v27
  %v30 = vsel %vm16, %v28, 0.0
  %31 = vadd.xlane.f32.xlu0 %v30
  %v32 = vpop.xlane.xlu0 %31
  %v33 = vsel %vm16, %v29, 0.0
  %34 = vadd.xlane.f32.xlu0 %v33
  %v35 = vpop.xlane.xlu0 %34
  %v36 = vmul.f32 %v32, %v23
  %v37 = vmul.f32 %v35, %v23
  %v38 = vadd.f32 %v36, 1e-12
  %v39 = vadd.f32 %v37, 1e-12
  %v40 = vrsqrt.pop %v38
  %v41 = vrsqrt.pop %v39
  %v42 = vmul.f32 %v26, %v40
  %v43 = vmul.f32 %v27, %v41
  %v44 = vld [vmem:[%s1] sm:$0x1]
  %v46 = vlaneseq
  %v47 = vshrl.u32 %v46, 7
  %v48 = vsub.s32 0, %v47
  %v49 = vrot.slane %v44, %v48
  %v51 = vmul.f32 %v42, %v49
  %v52 = vmul.f32 %v43, %v49
  %v53 = vld [vmem:[%s2] sm:$0x1]
  %v55 = vlaneseq
  %v56 = vshrl.u32 %v55, 7
  %v57 = vsub.s32 0, %v56
  %v58 = vrot.slane %v53, %v57
  %v60 = vadd.f32 %v51, %v58
  %v61 = vadd.f32 %v52, %v58
  %62 = vst.msk [vmem:[%s3] sm:$0xff] %vm16, %v60
  %63 = vst.msk [vmem:[%s3 + $0x8] sm:$0xff] %vm16, %v61
  // Predicated region
  $region14: #{_lambda_.38} parent=0 // pred_check
    _
  $region15: #{_lambda_.38} parent=0 // pred_check_branch
    %65 = sbr.rel (0) target = $region17
  $region16: #{_lambda_.38} parent=0 // pred_region
    _
  $region17: #{_lambda_.38} parent=0 // pred_fallthru
    _
  // Predicated region
  $region18: #{_lambda_.38} parent=0 // pred_check
    _
  $region19: #{_lambda_.38} parent=0 // pred_check_branch
    %67 = sbr.rel (0) target = $region21
  $region20: #{_lambda_.38} parent=0 // pred_region
    _
  $region21: #{_lambda_.38} parent=0 // pred_fallthru
    _

// kernel: _lambda_.39
$region0: #{_lambda_.39}
  #allocation0 [shape = 'u32[]', space=smem, size = 0x4, offset = 0x4, fixed_abs, tag = 'smem constant byte address 0x4 - core index']
  #allocation1 [shape = 'u32[144,128]{1,0:T(1,128)}', space=vmem, size = 0x12000, scoped, tag = 'internal scratch']
  #allocation2 [shape = 'f32[16,96]{1,0:T(8,128)}', space=vmem, size = 0x2000, scoped, tag = 'scratch operand']
  %s0 = inlined_call_operand.vmem [shape: f32[16,32], index: 0, kind: input, shape index: {}]
  %s1 = inlined_call_operand.vmem [shape: bf16[32,96], index: 1, kind: input, shape index: {}]
  %s2 = inlined_call_operand.vmem [shape: f32[1,96], index: 2, kind: input, shape index: {}]
  %s3 = inlined_call_operand.vmem [shape: f32[16,96], index: 3, kind: output, shape index: {}]
  %s4 = sld [smem:[#allocation0]]
  $region30: #{_lambda_.39} parent=0
    _
  %s6 = ssub.s32 1, %s4
  %s7 = scalar_select 0, %s6, %s4
  // Predicated region
  $region2: #{_lambda_.39} parent=0 // pred_check
    _
  $region3: #{_lambda_.39} parent=0 // pred_check_branch
    %9 = sbr.rel (0) target = $region5
  $region4: #{_lambda_.39} parent=0 // pred_region
    _
  $region5: #{_lambda_.39} parent=0 // pred_fallthru
    _
  // Predicated region
  $region6: #{_lambda_.39} parent=0 // pred_check
    _
  $region7: #{_lambda_.39} parent=0 // pred_check_branch
    %11 = sbr.rel (0) target = $region9
  $region8: #{_lambda_.39} parent=0 // pred_region
    _
  $region9: #{_lambda_.39} parent=0 // pred_fallthru
    _
  // Predicated region
  $region10: #{_lambda_.39} parent=0 // pred_check
    _
  $region11: #{_lambda_.39} parent=0 // pred_check_branch
    %13 = sbr.rel (0) target = $region13
  $region12: #{_lambda_.39} parent=0 // pred_region
    _
  $region13: #{_lambda_.39} parent=0 // pred_fallthru
    _
  %p15 = scmp.eq.s32.totalorder 0, 0
  // Predicated region
  $region14: #{_lambda_.39} parent=0 // pred_check
    %p16 = pneg %p15
  $region15: #{_lambda_.39} parent=0 // pred_check_branch
    %18 = sbr.rel (%p16) target = $region17
  $region16: #{_lambda_.39} parent=0 // pred_region
    %vm19 = vcmask 785408
    %20 = vst.msk [vmem:[#allocation2] sm:$0xff] %vm19, 0.0
    %21 = vst.msk [vmem:[#allocation2 + $0x8] sm:$0xff] %vm19, 0.0
  $region17: #{_lambda_.39} parent=0 // pred_fallthru
    _
  %v22 = vld [vmem:[%s0] sm:$0xff]
  %v23 = vld [vmem:[%s0 + $0x8] sm:$0xff]
  %v24 = vld [vmem:[#allocation2] sm:$0xff]
  %v25 = vld [vmem:[#allocation2 + $0x8] sm:$0xff]
  %v26 = vpack.c.bf16 %v23, %v22
  %v27 = vld [vmem:[%s1] sm:$0xf]
  %v28 = vld [vmem:[%s1 + $0x4] sm:$0xf]
  %v29 = vld [vmem:[%s1 + $0x8] sm:$0xf]
  %v30 = vld [vmem:[%s1 + $0xc] sm:$0xf]
  %v35 = vunpack.c.l.b16 %v27
  %v36 = vunpack.c.l.b16 %v28
  %v37 = vunpack.c.l.b16 %v29
  %v38 = vunpack.c.l.b16 %v30
  %v39 = vpack.c.b16 %v36, %v35
  %v40 = vpack.c.b16 %v38, %v37
  %vm43 = vcmask 261120
  %v45 = vsel %vm43, %v26, 0
  %47 = vmatprep.subr.bf16.mxu0 0
  %48 = vmatpush1.bf16.msra.mxu0 %v39
  %49 = vmatprep.subr.bf16.mxu0 0
  %50 = vmatpush1.bf16.msra.mxu0 %v40
  %51 = vmatprep.subr.bf16.mxu0 0
  %52 = vmatpush1.bf16.msra.mxu0 0
  %53 = vmatprep.subr.bf16.mxu0 0
  %54 = vmatpush1.bf16.msra.mxu0 0
  %55 = vmatprep.subr.bf16.mxu0 0
  %56 = vmatpush1.bf16.msra.mxu0 0
  %57 = vmatprep.subr.bf16.mxu0 0
  %58 = vmatpush1.bf16.msra.mxu0 0
  %59 = vmatprep.subr.bf16.mxu0 0
  %60 = vmatpush1.bf16.msra.mxu0 0
  %61 = vmatprep.subr.bf16.mxu0 0
  %62 = vmatpush1.bf16.msra.mxu0 0
  %63 = vmatprep.subr.bf16.mxu0 0
  %64 = vmatpush1.bf16.msra.mxu0 0
  %65 = vmatprep.subr.bf16.mxu0 0
  %66 = vmatpush1.bf16.msra.mxu0 0
  %67 = vmatprep.subr.bf16.mxu0 0
  %68 = vmatpush1.bf16.msra.mxu0 0
  %69 = vmatprep.subr.bf16.mxu0 0
  %70 = vmatpush1.bf16.msra.mxu0 0
  %71 = vmatprep.subr.bf16.mxu0 0
  %72 = vmatpush1.bf16.msra.mxu0 0
  %73 = vmatprep.subr.bf16.mxu0 0
  %74 = vmatpush1.bf16.msra.mxu0 0
  %75 = vmatprep.subr.bf16.mxu0 0
  %76 = vmatpush1.bf16.msra.mxu0 0
  %77 = vmatprep.subr.bf16.mxu0 0
  %78 = vmatpush1.bf16.msra.mxu0 0
  %79 = vmatprep.mubr.bf16.mxu0 0
  %80 = vmatmul.mubr.bf16.gmra.mrb[0].mxu0 %v45
  %v81 = vpop.f32.mrb[0].mxu0
  %v82 = vadd.f32 0.0, %v81
  %v83 = vpop.f32.mrb[0].mxu0
  %v84 = vpop.f32.mrb[0].mxu0
  %v85 = vadd.f32 0.0, %v84
  %v86 = vpop.f32.mrb[0].mxu0
  %87 = vdwg.mxu0
  %v88 = vadd.f32 %v24, %v82
  %v89 = vadd.f32 %v25, %v85
  %vm90 = vcmask 785408
  %91 = vst.msk [vmem:[#allocation2] sm:$0xff] %vm90, %v88
  %92 = vst.msk [vmem:[#allocation2 + $0x8] sm:$0xff] %vm90, %v89
  // Predicated region
  $region18: #{_lambda_.39} parent=0 // pred_check
    %p93 = pneg %p15
  $region19: #{_lambda_.39} parent=0 // pred_check_branch
    %95 = sbr.rel (%p93) target = $region21
  $region20: #{_lambda_.39} parent=0 // pred_region
    %v96 = vld [vmem:[#allocation2] sm:$0xff]
    %v97 = vld [vmem:[#allocation2 + $0x8] sm:$0xff]
    %v98 = vld [vmem:[%s2] sm:$0x1]
    %v100 = vlaneseq
    %v101 = vshrl.u32 %v100, 7
    %v102 = vsub.s32 0, %v101
    %v103 = vrot.slane %v98, %v102
    %v105 = vadd.f32 %v96, %v103
    %v106 = vadd.f32 %v97, %v103
    %107 = vst.msk [vmem:[%s3] sm:$0xff] %vm90, %v105
    %108 = vst.msk [vmem:[%s3 + $0x8] sm:$0xff] %vm90, %v106
  $region21: #{_lambda_.39} parent=0 // pred_fallthru
    _
  // Predicated region
  $region22: #{_lambda_.39} parent=0 // pred_check
    _
  $region23: #{_lambda_.39} parent=0 // pred_check_branch
    %110 = sbr.rel (0) target = $region25
  $region24: #{_lambda_.39} parent=0 // pred_region
    _
  $region25: #{_lambda_.39} parent=0 // pred_fallthru
    _
  // Predicated region
  $region26: #{_lambda_.39} parent=0 // pred_check
    _
  $region27: #{_lambda_.39} parent=0 // pred_check_branch
    %112 = sbr.rel (0) target = $region29
  $region28: #{_lambda_.39} parent=0 // pred_region
    _
  $region29: #{_lambda_.39} parent=0 // pred_fallthru
    _

// kernel: _lambda_.40
$region0: #{_lambda_.40}
  #allocation0 [shape = 'u32[]', space=smem, size = 0x4, offset = 0x4, fixed_abs, tag = 'smem constant byte address 0x4 - core index']
  #allocation1 [shape = 'u32[144,128]{1,0:T(1,128)}', space=vmem, size = 0x12000, scoped, tag = 'internal scratch']
  %s0 = inlined_call_operand.vmem [shape: f32[2,12,8,8], index: 0, kind: input, shape index: {}, may-alias: {0,1,2}]
  %s1 = inlined_call_operand.vmem [shape: f32[2,12,8,8], index: 1, kind: input, shape index: {}, may-alias: {0,1,2}]
  %s2 = inlined_call_operand.vmem [shape: f32[2,12,8,8], index: 2, kind: input, shape index: {}, may-alias: {0,1,2}]
  %s3 = inlined_call_operand.vmem [shape: f32[2,1,8], index: 3, kind: input, shape index: {}]
  %s4 = inlined_call_operand.vmem [shape: f32[2,8,32], index: 4, kind: output, shape index: {}]
  %s5 = sld [smem:[#allocation0]]
  $region49: #{_lambda_.40} parent=0
    _
  %s7 = ssub.s32 1, %s5
  %s8 = scalar_select 0, %s7, %s5
  loop: start=0, step=1, limit=4
  $region2: #{_lambda_.40} parent=0 // loop_pre_header
    _
  $region3: #{_lambda_.40} parent=0 // loop_header
    %s10 = sphi 0, %s14
    %p11 = scmp.ge.s32.totalorder %s10, 4
    %s17 = sphi 0, %s29
    %s18 = sphi 0, %s25
    %s19 = sphi 0, %s17
    %s20 = sphi 0, %s18
    %s21 = sphi 0, %s19
    %s22 = sphi 0, %s20
    %s34 = sphi 0, %s36
    %s37 = sphi 0, %s34
    %s38 = sphi 0, %s37
    %s54 = sphi 0, %s38
    %s64 = sphi 0, %s66
    %s67 = sphi 0, %s64
    %s68 = sphi 0, %s67
    %s84 = sphi 0, %s68
    %s94 = sphi 0, %s96
    %s97 = sphi 0, %s94
    %s98 = sphi 0, %s97
    %s114 = sphi 0, %s98
    %s120 = sphi 0, %s122
    %s123 = sphi 0, %s120
    %s124 = sphi 0, %s123
    %s140 = sphi 0, %s124
    %s148 = sphi 0, %s150
    %s151 = sphi 0, %s148
    %s152 = sphi 0, %s151
    %s168 = sphi 0, %s152
  $region4: #{_lambda_.40} parent=0 // loop_header_branch
    %13 = sbr.rel (%p11) target = $region8
  $region5: #{_lambda_.40} parent=0 // loop_body
    %s15 = ssub.s32 %s10, 1
    %s16 = ssub.s32 %s10, 2
    %s23 = sadd.s32 1, %s18
    %p24 = scmp.ge.s32.totalorder %s23, 1
    %s25 = scalar_select %p24, 0, %s23
    %s26 = sadd.s32 1, %s17
    %s27 = scalar_select %p24, %s26, %s17
    %p28 = scmp.ge.s32.totalorder %s27, 2
    %s29 = scalar_select %p28, 0, %s27
    %s30 = ssub.s32 %s17, %s29
    %s31 = ssub.s32 %s18, %s25
    %s32 = sor.u32 %s30, %s31
    %p33 = scmp.eq.s32.totalorder %s32, 0
    %s35 = sadd.s32 %s34, 1
    %s36 = scalar_select %p33, %s34, %s35
    %p39 = pneg %p33
    %p40 = scmp.eq.s32.totalorder %s10, 1
    %p41 = por %p39, %p40
    %p42 = scmp.ne.s32.totalorder %s34, %s37
    %p43 = scmp.eq.s32.totalorder %s10, 0
    %p44 = por %p42, %p43
    %p45 = scmp.ne.s32.totalorder %s34, %s37
    %p46 = scmp.eq.s32.totalorder %s15, 1
    %p47 = por %p45, %p46
    %p48 = scmp.ne.s32.totalorder %s37, %s38
    %p49 = scmp.eq.s32.totalorder %s15, 0
    %p50 = por %p48, %p49
    %p51 = scmp.ne.s32.totalorder %s37, %s38
    %p52 = scmp.eq.s32.totalorder %s16, 1
    %p53 = por %p51, %p52
    %p55 = scmp.ne.s32.totalorder %s38, %s54
    %p56 = scmp.eq.s32.totalorder %s16, 0
    %p57 = por %p55, %p56
    %s58 = sadd.s32 %s18, 1
    %s59 = sadd.s32 %s25, 1
    %s60 = ssub.s32 %s17, %s29
    %s61 = ssub.s32 %s58, %s59
    %s62 = sor.u32 %s60, %s61
    %p63 = scmp.eq.s32.totalorder %s62, 0
    %s65 = sadd.s32 %s64, 1
    %s66 = scalar_select %p63, %s64, %s65
    %p69 = pneg %p63
    %p70 = scmp.eq.s32.totalorder %s10, 1
    %p71 = por %p69, %p70
    %p72 = scmp.ne.s32.totalorder %s64, %s67
    %p73 = scmp.eq.s32.totalorder %s10, 0
    %p74 = por %p72, %p73
    %p75 = scmp.ne.s32.totalorder %s64, %s67
    %p76 = scmp.eq.s32.totalorder %s15, 1
    %p77 = por %p75, %p76
    %p78 = scmp.ne.s32.totalorder %s67, %s68
    %p79 = scmp.eq.s32.totalorder %s15, 0
    %p80 = por %p78, %p79
    %p81 = scmp.ne.s32.totalorder %s67, %s68
    %p82 = scmp.eq.s32.totalorder %s16, 1
    %p83 = por %p81, %p82
    %p85 = scmp.ne.s32.totalorder %s68, %s84
    %p86 = scmp.eq.s32.totalorder %s16, 0
    %p87 = por %p85, %p86
    %s88 = sadd.s32 %s18, 2
    %s89 = sadd.s32 %s25, 2
    %s90 = ssub.s32 %s17, %s29
    %s91 = ssub.s32 %s88, %s89
    %s92 = sor.u32 %s90, %s91
    %p93 = scmp.eq.s32.totalorder %s92, 0
    %s95 = sadd.s32 %s94, 1
    %s96 = scalar_select %p93, %s94, %s95
    %p99 = pneg %p93
    %p100 = scmp.eq.s32.totalorder %s10, 1
    %p101 = por %p99, %p100
    %p102 = scmp.ne.s32.totalorder %s94, %s97
    %p103 = scmp.eq.s32.totalorder %s10, 0
    %p104 = por %p102, %p103
    %p105 = scmp.ne.s32.totalorder %s94, %s97
    %p106 = scmp.eq.s32.totalorder %s15, 1
    %p107 = por %p105, %p106
    %p108 = scmp.ne.s32.totalorder %s97, %s98
    %p109 = scmp.eq.s32.totalorder %s15, 0
    %p110 = por %p108, %p109
    %p111 = scmp.ne.s32.totalorder %s97, %s98
    %p112 = scmp.eq.s32.totalorder %s16, 1
    %p113 = por %p111, %p112
    %p115 = scmp.ne.s32.totalorder %s98, %s114
    %p116 = scmp.eq.s32.totalorder %s16, 0
    %p117 = por %p115, %p116
    %s118 = ssub.s32 %s17, %s29
    %p119 = scmp.eq.s32.totalorder %s118, 0
    %s121 = sadd.s32 %s120, 1
    %s122 = scalar_select %p119, %s120, %s121
    %p125 = pneg %p119
    %p126 = scmp.eq.s32.totalorder %s10, 1
    %p127 = por %p125, %p126
    %p128 = scmp.ne.s32.totalorder %s120, %s123
    %p129 = scmp.eq.s32.totalorder %s10, 0
    %p130 = por %p128, %p129
    %p131 = scmp.ne.s32.totalorder %s120, %s123
    %p132 = scmp.eq.s32.totalorder %s15, 1
    %p133 = por %p131, %p132
    %p134 = scmp.ne.s32.totalorder %s123, %s124
    %p135 = scmp.eq.s32.totalorder %s15, 0
    %p136 = por %p134, %p135
    %p137 = scmp.ne.s32.totalorder %s123, %s124
    %p138 = scmp.eq.s32.totalorder %s16, 1
    %p139 = por %p137, %p138
    %p141 = scmp.ne.s32.totalorder %s124, %s140
    %p142 = scmp.eq.s32.totalorder %s16, 0
    %p143 = por %p141, %p142
    %s144 = ssub.s32 %s17, %s29
    %s145 = ssub.s32 %s18, %s25
    %s146 = sor.u32 %s144, %s145
    %p147 = scmp.eq.s32.totalorder %s146, 0
    %s149 = sadd.s32 %s148, 1
    %s150 = scalar_select %p147, %s148, %s149
    %p153 = pneg %p147
    %p154 = scmp.eq.s32.totalorder %s10, 1
    %p155 = por %p153, %p154
    %p156 = scmp.ne.s32.totalorder %s148, %s151
    %p157 = scmp.eq.s32.totalorder %s10, 0
    %p158 = por %p156, %p157
    %p159 = scmp.ne.s32.totalorder %s148, %s151
    %p160 = scmp.eq.s32.totalorder %s15, 1
    %p161 = por %p159, %p160
    %p162 = scmp.ne.s32.totalorder %s151, %s152
    %p163 = scmp.eq.s32.totalorder %s15, 0
    %p164 = por %p162, %p163
    %p165 = scmp.ne.s32.totalorder %s151, %s152
    %p166 = scmp.eq.s32.totalorder %s16, 1
    %p167 = por %p165, %p166
    %p169 = scmp.ne.s32.totalorder %s152, %s168
    %p170 = scmp.eq.s32.totalorder %s16, 0
    %p171 = por %p169, %p170
    %p172 = scmp.le.s32.totalorder 1, %s10
    %p173 = scmp.lt.s32.totalorder %s10, 3
    %p174 = pnand %p172, %p173
    %p175 = pneg %p174
    // Predicated region
    $region9: #{_lambda_.40} parent=5 // pred_check
      _
    $region10: #{_lambda_.40} parent=5 // pred_check_branch
      %177 = sbr.rel (%p174) target = $region12
    $region11: #{_lambda_.40} parent=5 // pred_region
      %s178 = ssub.s32 %s10, 1
    $region12: #{_lambda_.40} parent=5 // pred_fallthru
      _
    %p179 = scmp.lt.s32.totalorder %s10, 2
    // Predicated region
    $region13: #{_lambda_.40} parent=5 // pred_check
      %p180 = pneg %p179
    $region14: #{_lambda_.40} parent=5 // pred_check_branch
      %182 = sbr.rel (%p180) target = $region16
    $region15: #{_lambda_.40} parent=5 // pred_region
      // Predicated region
      $region17: #{_lambda_.40} parent=15 // pred_check
        %p183 = pneg %p44
      $region18: #{_lambda_.40} parent=15 // pred_check_branch
        %185 = sbr.rel (%p183) target = $region20
      $region19: #{_lambda_.40} parent=15 // pred_region
        %s186 = smul.u32 4, %s18
        %p187 = scmp.lt.s32.totalorder %s17, 1
        %s188 = scalar_select %p187, %s17, 1
        %p189 = scmp.lt.s32.totalorder %s186, 11
        %s190 = scalar_select %p189, %s186, 11
        %s191 = smul.addr %s188, 12
        %s192 = sadd.s32 %s190, %s191
        %s193 = smul.addr %s192, 8
        %s194 = scalar_lea.vmem %s0, %s193
        %s195 = smul.u32 4, %s18
      $region20: #{_lambda_.40} parent=15 // pred_fallthru
        _
      // Predicated region
      $region21: #{_lambda_.40} parent=15 // pred_check
        %p196 = pneg %p74
      $region22: #{_lambda_.40} parent=15 // pred_check_branch
        %198 = sbr.rel (%p196) target = $region24
      $region23: #{_lambda_.40} parent=15 // pred_region
        %s199 = sadd.s32 %s18, 1
        %s200 = smul.u32 4, %s199
        %p201 = scmp.lt.s32.totalorder %s17, 1
        %s202 = scalar_select %p201, %s17, 1
        %p203 = scmp.lt.s32.totalorder %s200, 11
        %s204 = scalar_select %p203, %s200, 11
        %s205 = smul.addr %s202, 12
        %s206 = sadd.s32 %s204, %s205
        %s207 = smul.addr %s206, 8
        %s208 = scalar_lea.vmem %s1, %s207
        %s209 = sadd.s32 %s18, 1
        %s210 = smul.u32 4, %s209
      $region24: #{_lambda_.40} parent=15 // pred_fallthru
        _
      // Predicated region
      $region25: #{_lambda_.40} parent=15 // pred_check
        %p211 = pneg %p104
      $region26: #{_lambda_.40} parent=15 // pred_check_branch
        %213 = sbr.rel (%p211) target = $region28
      $region27: #{_lambda_.40} parent=15 // pred_region
        %s214 = sadd.s32 %s18, 2
        %s215 = smul.u32 4, %s214
        %p216 = scmp.lt.s32.totalorder %s17, 1
        %s217 = scalar_select %p216, %s17, 1
        %p218 = scmp.lt.s32.totalorder %s215, 11
        %s219 = scalar_select %p218, %s215, 11
        %s220 = smul.addr %s217, 12
        %s221 = sadd.s32 %s219, %s220
        %s222 = smul.addr %s221, 8
        %s223 = scalar_lea.vmem %s2, %s222
        %s224 = sadd.s32 %s18, 2
        %s225 = smul.u32 4, %s224
      $region28: #{_lambda_.40} parent=15 // pred_fallthru
        _
      // Predicated region
      $region29: #{_lambda_.40} parent=15 // pred_check
        %p226 = pneg %p130
      $region30: #{_lambda_.40} parent=15 // pred_check_branch
        %228 = sbr.rel (%p226) target = $region32
      $region31: #{_lambda_.40} parent=15 // pred_region
        %p229 = scmp.lt.s32.totalorder %s17, 1
        %s230 = scalar_select %p229, %s17, 1
        %s231 = scalar_lea.vmem %s3, %s230
      $region32: #{_lambda_.40} parent=15 // pred_fallthru
        _
    $region16: #{_lambda_.40} parent=5 // pred_fallthru
      _
    %p232 = scmp.le.s32.totalorder 1, %s10
    %p233 = scmp.lt.s32.totalorder %s10, 3
    %p234 = pnand %p232, %p233
    %p235 = pneg %p234
    // Predicated region
    $region33: #{_lambda_.40} parent=5 // pred_check
      _
    $region34: #{_lambda_.40} parent=5 // pred_check_branch
      %237 = sbr.rel (%p234) target = $region36
    $region35: #{_lambda_.40} parent=5 // pred_region
      %s238 = ssub.s32 %s10, 1
      %s239 = smul.u32 4, %s20
      %p240 = scmp.lt.s32.totalorder %s19, 1
      %s241 = scalar_select %p240, %s19, 1
      %p242 = scmp.lt.s32.totalorder %s239, 11
      %s243 = scalar_select %p242, %s239, 11
      %s244 = smul.addr %s241, 12
      %s245 = sadd.s32 %s243, %s244
      %s246 = smul.addr %s245, 8
      %s247 = scalar_lea.vmem %s0, %s246
      %p248 = pneg %p50
      %p249 = pneg %p47
      %s250 = sadd.s32 %s20, 1
      %s251 = smul.u32 4, %s250
      %p252 = scmp.lt.s32.totalorder %s19, 1
      %s253 = scalar_select %p252, %s19, 1
      %p254 = scmp.lt.s32.totalorder %s251, 11
      %s255 = scalar_select %p254, %s251, 11
      %s256 = smul.addr %s253, 12
      %s257 = sadd.s32 %s255, %s256
      %s258 = smul.addr %s257, 8
      %s259 = scalar_lea.vmem %s1, %s258
      %p260 = pneg %p80
      %p261 = pneg %p77
      %s262 = sadd.s32 %s20, 2
      %s263 = smul.u32 4, %s262
      %p264 = scmp.lt.s32.totalorder %s19, 1
      %s265 = scalar_select %p264, %s19, 1
      %p266 = scmp.lt.s32.totalorder %s263, 11
      %s267 = scalar_select %p266, %s263, 11
      %s268 = smul.addr %s265, 12
      %s269 = sadd.s32 %s267, %s268
      %s270 = smul.addr %s269, 8
      %s271 = scalar_lea.vmem %s2, %s270
      %p272 = pneg %p110
      %p273 = pneg %p107
      %p274 = scmp.lt.s32.totalorder %s19, 1
      %s275 = scalar_select %p274, %s19, 1
      %s276 = scalar_lea.vmem %s3, %s275
      %p277 = pneg %p136
      %p278 = pneg %p133
      %p279 = pneg %p164
      %p280 = pneg %p161
      %p281 = scmp.lt.s32.totalorder %s19, 1
      %s282 = scalar_select %p281, %s19, 1
      %p283 = scmp.lt.s32.totalorder %s20, 0
      %s284 = scalar_select %p283, %s20, 0
      %s285 = sadd.s32 %s284, %s282
      %s286 = smul.addr %s285, 8
      %s287 = scalar_lea.vmem %s4, %s286
      %s288 = smul.u32 4, %s20
      %p289 = scmp.lt.s32.totalorder %s19, 1
      %s290 = scalar_select %p289, %s19, 1
      %p291 = scmp.lt.s32.totalorder %s288, 11
      %s292 = scalar_select %p291, %s288, 11
      %s293 = smul.addr %s290, 12
      %s294 = sadd.s32 %s292, %s293
      %s295 = smul.addr %s294, 8
      %s296 = scalar_lea.vmem %s0, %s295
      %s297 = smul.u32 4, %s20
      %s298 = sadd.s32 %s20, 1
      %s299 = smul.u32 4, %s298
      %p300 = scmp.lt.s32.totalorder %s19, 1
      %s301 = scalar_select %p300, %s19, 1
      %p302 = scmp.lt.s32.totalorder %s299, 11
      %s303 = scalar_select %p302, %s299, 11
      %s304 = smul.addr %s301, 12
      %s305 = sadd.s32 %s303, %s304
      %s306 = smul.addr %s305, 8
      %s307 = scalar_lea.vmem %s1, %s306
      %s308 = sadd.s32 %s20, 1
      %s309 = smul.u32 4, %s308
      %s310 = sadd.s32 %s20, 2
      %s311 = smul.u32 4, %s310
      %p312 = scmp.lt.s32.totalorder %s19, 1
      %s313 = scalar_select %p312, %s19, 1
      %p314 = scmp.lt.s32.totalorder %s311, 11
      %s315 = scalar_select %p314, %s311, 11
      %s316 = smul.addr %s313, 12
      %s317 = sadd.s32 %s315, %s316
      %s318 = smul.addr %s317, 8
      %s319 = scalar_lea.vmem %s2, %s318
      %s320 = sadd.s32 %s20, 2
      %s321 = smul.u32 4, %s320
      %p322 = scmp.lt.s32.totalorder %s19, 1
      %s323 = scalar_select %p322, %s19, 1
      %s324 = scalar_lea.vmem %s3, %s323
      %p325 = scmp.lt.s32.totalorder %s19, 1
      %s326 = scalar_select %p325, %s19, 1
      %p327 = scmp.lt.s32.totalorder %s20, 0
      %s328 = scalar_select %p327, %s20, 0
      %s329 = sadd.s32 %s328, %s326
      %s330 = smul.addr %s329, 8
      %s331 = scalar_lea.vmem %s4, %s330
      %v333 = vld [vmem:[%s296] sm:$0xff]
      %v334 = vld [vmem:[%s296 + $0x8] sm:$0xff]
      %v335 = vld [vmem:[%s296 + $0x10] sm:$0xff]
      %v336 = vld [vmem:[%s296 + $0x18] sm:$0xff]
      %v337 = vpack.c.bf16 %v333, %v333
      %v338 = vpack.c.bf16 %v334, %v334
      %v339 = vpack.c.bf16 %v335, %v335
      %v340 = vpack.c.bf16 %v336, %v336
      %v341 = vld [vmem:[%s307] sm:$0xff]
      %v342 = vld [vmem:[%s307 + $0x8] sm:$0xff]
      %v343 = vld [vmem:[%s307 + $0x10] sm:$0xff]
      %v344 = vld [vmem:[%s307 + $0x18] sm:$0xff]
      %v345 = vpack.c.bf16 %v341, %v341
      %v346 = vpack.c.bf16 %v342, %v342
      %v347 = vpack.c.bf16 %v343, %v343
      %v348 = vpack.c.bf16 %v344, %v344
      %v349 = vld [vmem:[%s319] sm:$0xff]
      %v350 = vld [vmem:[%s319 + $0x8] sm:$0xff]
      %v351 = vld [vmem:[%s319 + $0x10] sm:$0xff]
      %v352 = vld [vmem:[%s319 + $0x18] sm:$0xff]
      %v353 = vpack.c.bf16 %v349, %v349
      %v354 = vpack.c.bf16 %v350, %v350
      %v355 = vpack.c.bf16 %v351, %v351
      %v356 = vpack.c.bf16 %v352, %v352
      %vm357 = vcmask 64512
      %v359 = vsel %vm357, %v337, 0
      %v362 = vsel %vm357, %v345, 0
      %364 = vmatprep.subr.bf16.mxu0 0
      %365 = vmatpush1.bf16.xpose.msra.mxu0 %v362
      %366 = vmatprep.subr.bf16.mxu0 0
      %367 = vmatpush1.bf16.xpose.msra.mxu0 0
      %368 = vmatprep.subr.bf16.mxu0 0
      %369 = vmatpush1.bf16.xpose.msra.mxu0 0
      %370 = vmatprep.subr.bf16.mxu0 0
      %371 = vmatpush1.bf16.xpose.msra.mxu0 0
      %372 = vmatprep.subr.bf16.mxu0 0
      %373 = vmatpush1.bf16.xpose.msra.mxu0 0
      %374 = vmatprep.subr.bf16.mxu0 0
      %375 = vmatpush1.bf16.xpose.msra.mxu0 0
      %376 = vmatprep.subr.bf16.mxu0 0
      %377 = vmatpush1.bf16.xpose.msra.mxu0 0
      %378 = vmatprep.subr.bf16.mxu0 0
      %379 = vmatpush1.bf16.xpose.msra.mxu0 0
      %380 = vmatprep.subr.bf16.mxu0 0
      %381 = vmatpush1.bf16.xpose.msra.mxu0 0
      %382 = vmatprep.subr.bf16.mxu0 0
      %383 = vmatpush1.bf16.xpose.msra.mxu0 0
      %384 = vmatprep.subr.bf16.mxu0 0
      %385 = vmatpush1.bf16.xpose.msra.mxu0 0
      %386 = vmatprep.subr.bf16.mxu0 0
      %387 = vmatpush1.bf16.xpose.msra.mxu0 0
      %388 = vmatprep.subr.bf16.mxu0 0
      %389 = vmatpush1.bf16.xpose.msra.mxu0 0
      %390 = vmatprep.subr.bf16.mxu0 0
      %391 = vmatpush1.bf16.xpose.msra.mxu0 0
      %392 = vmatprep.subr.bf16.mxu0 0
      %393 = vmatpush1.bf16.xpose.msra.mxu0 0
      %394 = vmatprep.subr.bf16.mxu0 0
      %395 = vmatpush1.bf16.xpose.msra.mxu0 0
      %396 = vmatprep.mubr.bf16.mxu0 0
      %397 = vmatmul.mubr.bf16.gmra.mrb[0].mxu0 %v359
      %v398 = vpop.f32.mrb[0].mxu0
      %v399 = vadd.f32 0.0, %v398
      %v400 = vpop.f32.mrb[0].mxu0
      %v401 = vpop.f32.mrb[0].mxu0
      %v402 = vpop.f32.mrb[0].mxu0
      %403 = vdwg.mxu0
      %v405 = vsel %vm357, %v338, 0
      %v408 = vsel %vm357, %v346, 0
      %410 = vmatprep.subr.bf16.mxu0 0
      %411 = vmatpush1.bf16.xpose.msra.mxu0 %v408
      %412 = vmatprep.subr.bf16.mxu0 0
      %413 = vmatpush1.bf16.xpose.msra.mxu0 0
      %414 = vmatprep.subr.bf16.mxu0 0
      %415 = vmatpush1.bf16.xpose.msra.mxu0 0
      %416 = vmatprep.subr.bf16.mxu0 0
      %417 = vmatpush1.bf16.xpose.msra.mxu0 0
      %418 = vmatprep.subr.bf16.mxu0 0
      %419 = vmatpush1.bf16.xpose.msra.mxu0 0
      %420 = vmatprep.subr.bf16.mxu0 0
      %421 = vmatpush1.bf16.xpose.msra.mxu0 0
      %422 = vmatprep.subr.bf16.mxu0 0
      %423 = vmatpush1.bf16.xpose.msra.mxu0 0
      %424 = vmatprep.subr.bf16.mxu0 0
      %425 = vmatpush1.bf16.xpose.msra.mxu0 0
      %426 = vmatprep.subr.bf16.mxu0 0
      %427 = vmatpush1.bf16.xpose.msra.mxu0 0
      %428 = vmatprep.subr.bf16.mxu0 0
      %429 = vmatpush1.bf16.xpose.msra.mxu0 0
      %430 = vmatprep.subr.bf16.mxu0 0
      %431 = vmatpush1.bf16.xpose.msra.mxu0 0
      %432 = vmatprep.subr.bf16.mxu0 0
      %433 = vmatpush1.bf16.xpose.msra.mxu0 0
      %434 = vmatprep.subr.bf16.mxu0 0
      %435 = vmatpush1.bf16.xpose.msra.mxu0 0
      %436 = vmatprep.subr.bf16.mxu0 0
      %437 = vmatpush1.bf16.xpose.msra.mxu0 0
      %438 = vmatprep.subr.bf16.mxu0 0
      %439 = vmatpush1.bf16.xpose.msra.mxu0 0
      %440 = vmatprep.subr.bf16.mxu0 0
      %441 = vmatpush1.bf16.xpose.msra.mxu0 0
      %442 = vmatprep.mubr.bf16.mxu0 0
      %443 = vmatmul.mubr.bf16.gmra.mrb[0].mxu0 %v405
      %v444 = vpop.f32.mrb[0].mxu0
      %v445 = vadd.f32 0.0, %v444
      %v446 = vpop.f32.mrb[0].mxu0
      %v447 = vpop.f32.mrb[0].mxu0
      %v448 = vpop.f32.mrb[0].mxu0
      %449 = vdwg.mxu0
      %v451 = vsel %vm357, %v339, 0
      %v454 = vsel %vm357, %v347, 0
      %456 = vmatprep.subr.bf16.mxu0 0
      %457 = vmatpush1.bf16.xpose.msra.mxu0 %v454
      %458 = vmatprep.subr.bf16.mxu0 0
      %459 = vmatpush1.bf16.xpose.msra.mxu0 0
      %460 = vmatprep.subr.bf16.mxu0 0
      %461 = vmatpush1.bf16.xpose.msra.mxu0 0
      %462 = vmatprep.subr.bf16.mxu0 0
      %463 = vmatpush1.bf16.xpose.msra.mxu0 0
      %464 = vmatprep.subr.bf16.mxu0 0
      %465 = vmatpush1.bf16.xpose.msra.mxu0 0
      %466 = vmatprep.subr.bf16.mxu0 0
      %467 = vmatpush1.bf16.xpose.msra.mxu0 0
      %468 = vmatprep.subr.bf16.mxu0 0
      %469 = vmatpush1.bf16.xpose.msra.mxu0 0
      %470 = vmatprep.subr.bf16.mxu0 0
      %471 = vmatpush1.bf16.xpose.msra.mxu0 0
      %472 = vmatprep.subr.bf16.mxu0 0
      %473 = vmatpush1.bf16.xpose.msra.mxu0 0
      %474 = vmatprep.subr.bf16.mxu0 0
      %475 = vmatpush1.bf16.xpose.msra.mxu0 0
      %476 = vmatprep.subr.bf16.mxu0 0
      %477 = vmatpush1.bf16.xpose.msra.mxu0 0
      %478 = vmatprep.subr.bf16.mxu0 0
      %479 = vmatpush1.bf16.xpose.msra.mxu0 0
      %480 = vmatprep.subr.bf16.mxu0 0
      %481 = vmatpush1.bf16.xpose.msra.mxu0 0
      %482 = vmatprep.subr.bf16.mxu0 0
      %483 = vmatpush1.bf16.xpose.msra.mxu0 0
      %484 = vmatprep.subr.bf16.mxu0 0
      %485 = vmatpush1.bf16.xpose.msra.mxu0 0
      %486 = vmatprep.subr.bf16.mxu0 0
      %487 = vmatpush1.bf16.xpose.msra.mxu0 0
      %488 = vmatprep.mubr.bf16.mxu0 0
      %489 = vmatmul.mubr.bf16.gmra.mrb[0].mxu0 %v451
      %v490 = vpop.f32.mrb[0].mxu0
      %v491 = vadd.f32 0.0, %v490
      %v492 = vpop.f32.mrb[0].mxu0
      %v493 = vpop.f32.mrb[0].mxu0
      %v494 = vpop.f32.mrb[0].mxu0
      %495 = vdwg.mxu0
      %v497 = vsel %vm357, %v340, 0
      %v500 = vsel %vm357, %v348, 0
      %502 = vmatprep.subr.bf16.mxu0 0
      %503 = vmatpush1.bf16.xpose.msra.mxu0 %v500
      %504 = vmatprep.subr.bf16.mxu0 0
      %505 = vmatpush1.bf16.xpose.msra.mxu0 0
      %506 = vmatprep.subr.bf16.mxu0 0
      %507 = vmatpush1.bf16.xpose.msra.mxu0 0
      %508 = vmatprep.subr.bf16.mxu0 0
      %509 = vmatpush1.bf16.xpose.msra.mxu0 0
      %510 = vmatprep.subr.bf16.mxu0 0
      %511 = vmatpush1.bf16.xpose.msra.mxu0 0
      %512 = vmatprep.subr.bf16.mxu0 0
      %513 = vmatpush1.bf16.xpose.msra.mxu0 0
      %514 = vmatprep.subr.bf16.mxu0 0
      %515 = vmatpush1.bf16.xpose.msra.mxu0 0
      %516 = vmatprep.subr.bf16.mxu0 0
      %517 = vmatpush1.bf16.xpose.msra.mxu0 0
      %518 = vmatprep.subr.bf16.mxu0 0
      %519 = vmatpush1.bf16.xpose.msra.mxu0 0
      %520 = vmatprep.subr.bf16.mxu0 0
      %521 = vmatpush1.bf16.xpose.msra.mxu0 0
      %522 = vmatprep.subr.bf16.mxu0 0
      %523 = vmatpush1.bf16.xpose.msra.mxu0 0
      %524 = vmatprep.subr.bf16.mxu0 0
      %525 = vmatpush1.bf16.xpose.msra.mxu0 0
      %526 = vmatprep.subr.bf16.mxu0 0
      %527 = vmatpush1.bf16.xpose.msra.mxu0 0
      %528 = vmatprep.subr.bf16.mxu0 0
      %529 = vmatpush1.bf16.xpose.msra.mxu0 0
      %530 = vmatprep.subr.bf16.mxu0 0
      %531 = vmatpush1.bf16.xpose.msra.mxu0 0
      %532 = vmatprep.subr.bf16.mxu0 0
      %533 = vmatpush1.bf16.xpose.msra.mxu0 0
      %534 = vmatprep.mubr.bf16.mxu0 0
      %535 = vmatmul.mubr.bf16.gmra.mrb[0].mxu0 %v497
      %v536 = vpop.f32.mrb[0].mxu0
      %v537 = vadd.f32 0.0, %v536
      %v538 = vpop.f32.mrb[0].mxu0
      %v539 = vpop.f32.mrb[0].mxu0
      %v540 = vpop.f32.mrb[0].mxu0
      %541 = vdwg.mxu0
      %v542 = vmul.f32 %v399, 0.35355338
      %v543 = vmul.f32 %v445, 0.35355338
      %v544 = vmul.f32 %v491, 0.35355338
      %v545 = vmul.f32 %v537, 0.35355338
      %v546 = vld [vmem:[%s324] sm:$0x1]
      %v547 = vsub.f32 1.0, %v546
      %v548 = vmul.f32 %v547, -1e+30
      %v550 = vlaneseq
      %v551 = vshrl.u32 %v550, 7
      %v552 = vsub.s32 0, %v551
      %v553 = vrot.slane %v548, %v552
      %v555 = vadd.f32 %v542, %v553
      %v556 = vadd.f32 %v543, %v553
      %v557 = vadd.f32 %v544, %v553
      %v558 = vadd.f32 %v545, %v553
      %v559 = vsel %vm357, %v555, -inf
      %560 = vmax.xlane.f32.xlu0 %v559
      %v561 = vpop.xlane.xlu0 %560
      %v562 = vsel %vm357, %v556, -inf
      %563 = vmax.xlane.f32.xlu0 %v562
      %v564 = vpop.xlane.xlu0 %563
      %v565 = vsel %vm357, %v557, -inf
      %566 = vmax.xlane.f32.xlu0 %v565
      %v567 = vpop.xlane.xlu0 %566
      %v568 = vsel %vm357, %v558, -inf
      %569 = vmax.xlane.f32.xlu0 %v568
      %v570 = vpop.xlane.xlu0 %569
      %v571 = vsub.f32 %v555, %v561
      %v572 = vsub.f32 %v556, %v564
      %v573 = vsub.f32 %v557, %v567
      %v574 = vsub.f32 %v558, %v570
      %v575 = vmul.f32 %v571, 1.442695
      %v576 = vpow.pop %v575
      %v577 = vmul.f32 %v572, 1.442695
      %v578 = vpow.pop %v577
      %v579 = vmul.f32 %v573, 1.442695
      %v580 = vpow.pop %v579
      %v581 = vmul.f32 %v574, 1.442695
      %v582 = vpow.pop %v581
      %v583 = vsel %vm357, %v576, 0.0
      %584 = vadd.xlane.f32.xlu0 %v583
      %v585 = vpop.xlane.xlu0 %584
      %v586 = vsel %vm357, %v578, 0.0
      %587 = vadd.xlane.f32.xlu0 %v586
      %v588 = vpop.xlane.xlu0 %587
      %v589 = vsel %vm357, %v580, 0.0
      %590 = vadd.xlane.f32.xlu0 %v589
      %v591 = vpop.xlane.xlu0 %590
      %v592 = vsel %vm357, %v582, 0.0
      %593 = vadd.xlane.f32.xlu0 %v592
      %v594 = vpop.xlane.xlu0 %593
      %v595 = vrcp.pop %v585
      %v596 = vmul.f32 %v576, %v595
      %v597 = vrcp.pop %v588
      %v598 = vmul.f32 %v578, %v597
      %v599 = vrcp.pop %v591
      %v600 = vmul.f32 %v580, %v599
      %v601 = vrcp.pop %v594
      %v602 = vmul.f32 %v582, %v601
      %v603 = vpack.c.bf16 %v596, %v596
      %v604 = vpack.c.bf16 %v598, %v598
      %v605 = vpack.c.bf16 %v600, %v600
      %v606 = vpack.c.bf16 %v602, %v602
      %v608 = vsel %vm357, %v603, 0
      %vm610 = vcmask 1043456
      %v612 = vsel %vm610, %v353, 0
      %614 = vmatprep.subr.bf16.mxu0 0
      %615 = vmatpush1.bf16.msra.mxu0 %v612
      %616 = vmatprep.subr.bf16.mxu0 0
      %617 = vmatpush1.bf16.msra.mxu0 0
      %618 = vmatprep.subr.bf16.mxu0 0
      %619 = vmatpush1.bf16.msra.mxu0 0
      %620 = vmatprep.subr.bf16.mxu0 0
      %621 = vmatpush1.bf16.msra.mxu0 0
      %622 = vmatprep.subr.bf16.mxu0 0
      %623 = vmatpush1.bf16.msra.mxu0 0
      %624 = vmatprep.subr.bf16.mxu0 0
      %625 = vmatpush1.bf16.msra.mxu0 0
      %626 = vmatprep.subr.bf16.mxu0 0
      %627 = vmatpush1.bf16.msra.mxu0 0
      %628 = vmatprep.subr.bf16.mxu0 0
      %629 = vmatpush1.bf16.msra.mxu0 0
      %630 = vmatprep.subr.bf16.mxu0 0
      %631 = vmatpush1.bf16.msra.mxu0 0
      %632 = vmatprep.subr.bf16.mxu0 0
      %633 = vmatpush1.bf16.msra.mxu0 0
      %634 = vmatprep.subr.bf16.mxu0 0
      %635 = vmatpush1.bf16.msra.mxu0 0
      %636 = vmatprep.subr.bf16.mxu0 0
      %637 = vmatpush1.bf16.msra.mxu0 0
      %638 = vmatprep.subr.bf16.mxu0 0
      %639 = vmatpush1.bf16.msra.mxu0 0
      %640 = vmatprep.subr.bf16.mxu0 0
      %641 = vmatpush1.bf16.msra.mxu0 0
      %642 = vmatprep.subr.bf16.mxu0 0
      %643 = vmatpush1.bf16.msra.mxu0 0
      %644 = vmatprep.subr.bf16.mxu0 0
      %645 = vmatpush1.bf16.msra.mxu0 0
      %646 = vmatprep.mubr.bf16.mxu0 0
      %647 = vmatmul.mubr.bf16.gmra.mrb[0].mxu0 %v608
      %v648 = vpop.f32.mrb[0].mxu0
      %v649 = vadd.f32 0.0, %v648
      %v650 = vpop.f32.mrb[0].mxu0
      %v651 = vpop.f32.mrb[0].mxu0
      %v652 = vpop.f32.mrb[0].mxu0
      %653 = vdwg.mxu0
      %v655 = vsel %vm357, %v604, 0
      %v658 = vsel %vm610, %v354, 0
      %660 = vmatprep.subr.bf16.mxu0 0
      %661 = vmatpush1.bf16.msra.mxu0 %v658
      %662 = vmatprep.subr.bf16.mxu0 0
      %663 = vmatpush1.bf16.msra.mxu0 0
      %664 = vmatprep.subr.bf16.mxu0 0
      %665 = vmatpush1.bf16.msra.mxu0 0
      %666 = vmatprep.subr.bf16.mxu0 0
      %667 = vmatpush1.bf16.msra.mxu0 0
      %668 = vmatprep.subr.bf16.mxu0 0
      %669 = vmatpush1.bf16.msra.mxu0 0
      %670 = vmatprep.subr.bf16.mxu0 0
      %671 = vmatpush1.bf16.msra.mxu0 0
      %672 = vmatprep.subr.bf16.mxu0 0
      %673 = vmatpush1.bf16.msra.mxu0 0
      %674 = vmatprep.subr.bf16.mxu0 0
      %675 = vmatpush1.bf16.msra.mxu0 0
      %676 = vmatprep.subr.bf16.mxu0 0
      %677 = vmatpush1.bf16.msra.mxu0 0
      %678 = vmatprep.subr.bf16.mxu0 0
      %679 = vmatpush1.bf16.msra.mxu0 0
      %680 = vmatprep.subr.bf16.mxu0 0
      %681 = vmatpush1.bf16.msra.mxu0 0
      %682 = vmatprep.subr.bf16.mxu0 0
      %683 = vmatpush1.bf16.msra.mxu0 0
      %684 = vmatprep.subr.bf16.mxu0 0
      %685 = vmatpush1.bf16.msra.mxu0 0
      %686 = vmatprep.subr.bf16.mxu0 0
      %687 = vmatpush1.bf16.msra.mxu0 0
      %688 = vmatprep.subr.bf16.mxu0 0
      %689 = vmatpush1.bf16.msra.mxu0 0
      %690 = vmatprep.subr.bf16.mxu0 0
      %691 = vmatpush1.bf16.msra.mxu0 0
      %692 = vmatprep.mubr.bf16.mxu0 0
      %693 = vmatmul.mubr.bf16.gmra.mrb[0].mxu0 %v655
      %v694 = vpop.f32.mrb[0].mxu0
      %v695 = vadd.f32 0.0, %v694
      %v696 = vpop.f32.mrb[0].mxu0
      %v697 = vpop.f32.mrb[0].mxu0
      %v698 = vpop.f32.mrb[0].mxu0
      %699 = vdwg.mxu0
      %v701 = vsel %vm357, %v605, 0
      %v704 = vsel %vm610, %v355, 0
      %706 = vmatprep.subr.bf16.mxu0 0
      %707 = vmatpush1.bf16.msra.mxu0 %v704
      %708 = vmatprep.subr.bf16.mxu0 0
      %709 = vmatpush1.bf16.msra.mxu0 0
      %710 = vmatprep.subr.bf16.mxu0 0
      %711 = vmatpush1.bf16.msra.mxu0 0
      %712 = vmatprep.subr.bf16.mxu0 0
      %713 = vmatpush1.bf16.msra.mxu0 0
      %714 = vmatprep.subr.bf16.mxu0 0
      %715 = vmatpush1.bf16.msra.mxu0 0
      %716 = vmatprep.subr.bf16.mxu0 0
      %717 = vmatpush1.bf16.msra.mxu0 0
      %718 = vmatprep.subr.bf16.mxu0 0
      %719 = vmatpush1.bf16.msra.mxu0 0
      %720 = vmatprep.subr.bf16.mxu0 0
      %721 = vmatpush1.bf16.msra.mxu0 0
      %722 = vmatprep.subr.bf16.mxu0 0
      %723 = vmatpush1.bf16.msra.mxu0 0
      %724 = vmatprep.subr.bf16.mxu0 0
      %725 = vmatpush1.bf16.msra.mxu0 0
      %726 = vmatprep.subr.bf16.mxu0 0
      %727 = vmatpush1.bf16.msra.mxu0 0
      %728 = vmatprep.subr.bf16.mxu0 0
      %729 = vmatpush1.bf16.msra.mxu0 0
      %730 = vmatprep.subr.bf16.mxu0 0
      %731 = vmatpush1.bf16.msra.mxu0 0
      %732 = vmatprep.subr.bf16.mxu0 0
      %733 = vmatpush1.bf16.msra.mxu0 0
      %734 = vmatprep.subr.bf16.mxu0 0
      %735 = vmatpush1.bf16.msra.mxu0 0
      %736 = vmatprep.subr.bf16.mxu0 0
      %737 = vmatpush1.bf16.msra.mxu0 0
      %738 = vmatprep.mubr.bf16.mxu0 0
      %739 = vmatmul.mubr.bf16.gmra.mrb[0].mxu0 %v701
      %v740 = vpop.f32.mrb[0].mxu0
      %v741 = vadd.f32 0.0, %v740
      %v742 = vpop.f32.mrb[0].mxu0
      %v743 = vpop.f32.mrb[0].mxu0
      %v744 = vpop.f32.mrb[0].mxu0
      %745 = vdwg.mxu0
      %v747 = vsel %vm357, %v606, 0
      %v750 = vsel %vm610, %v356, 0
      %752 = vmatprep.subr.bf16.mxu0 0
      %753 = vmatpush1.bf16.msra.mxu0 %v750
      %754 = vmatprep.subr.bf16.mxu0 0
      %755 = vmatpush1.bf16.msra.mxu0 0
      %756 = vmatprep.subr.bf16.mxu0 0
      %757 = vmatpush1.bf16.msra.mxu0 0
      %758 = vmatprep.subr.bf16.mxu0 0
      %759 = vmatpush1.bf16.msra.mxu0 0
      %760 = vmatprep.subr.bf16.mxu0 0
      %761 = vmatpush1.bf16.msra.mxu0 0
      %762 = vmatprep.subr.bf16.mxu0 0
      %763 = vmatpush1.bf16.msra.mxu0 0
      %764 = vmatprep.subr.bf16.mxu0 0
      %765 = vmatpush1.bf16.msra.mxu0 0
      %766 = vmatprep.subr.bf16.mxu0 0
      %767 = vmatpush1.bf16.msra.mxu0 0
      %768 = vmatprep.subr.bf16.mxu0 0
      %769 = vmatpush1.bf16.msra.mxu0 0
      %770 = vmatprep.subr.bf16.mxu0 0
      %771 = vmatpush1.bf16.msra.mxu0 0
      %772 = vmatprep.subr.bf16.mxu0 0
      %773 = vmatpush1.bf16.msra.mxu0 0
      %774 = vmatprep.subr.bf16.mxu0 0
      %775 = vmatpush1.bf16.msra.mxu0 0
      %776 = vmatprep.subr.bf16.mxu0 0
      %777 = vmatpush1.bf16.msra.mxu0 0
      %778 = vmatprep.subr.bf16.mxu0 0
      %779 = vmatpush1.bf16.msra.mxu0 0
      %780 = vmatprep.subr.bf16.mxu0 0
      %781 = vmatpush1.bf16.msra.mxu0 0
      %782 = vmatprep.subr.bf16.mxu0 0
      %783 = vmatpush1.bf16.msra.mxu0 0
      %784 = vmatprep.mubr.bf16.mxu0 0
      %785 = vmatmul.mubr.bf16.gmra.mrb[0].mxu0 %v747
      %v786 = vpop.f32.mrb[0].mxu0
      %v787 = vadd.f32 0.0, %v786
      %v788 = vpop.f32.mrb[0].mxu0
      %v789 = vpop.f32.mrb[0].mxu0
      %v790 = vpop.f32.mrb[0].mxu0
      %791 = vdwg.mxu0
      %792 = vst.msk [vmem:[%s331] sm:$0xff] %vm357, %v649
      %794 = vrot.lane.b32.xlu0 %v695, 8
      %v795 = vpop.permute.xlu0 %794
      %vm797 = vcmask 130112
      %798 = vst.msk [vmem:[%s331] sm:$0xff] %vm797, %v795
      %800 = vrot.lane.b32.xlu0 %v741, 16
      %v801 = vpop.permute.xlu0 %800
      %vm803 = vcmask 195712
      %804 = vst.msk [vmem:[%s331] sm:$0xff] %vm803, %v801
      %806 = vrot.lane.b32.xlu0 %v787, 24
      %v807 = vpop.permute.xlu0 %806
      %vm809 = vcmask 261312
      %810 = vst.msk [vmem:[%s331] sm:$0xff] %vm809, %v807
      %p811 = scmp.lt.s32.totalorder %s19, 1
      %s812 = scalar_select %p811, %s19, 1
      %p813 = scmp.lt.s32.totalorder %s20, 0
      %s814 = scalar_select %p813, %s20, 0
      %s815 = sadd.s32 %s814, %s812
      %s816 = smul.addr %s815, 8
      %s817 = scalar_lea.vmem %s4, %s816
      // Predicated region
      $region37: #{_lambda_.40} parent=35 // pred_check
        %p818 = pneg %p161
      $region38: #{_lambda_.40} parent=35 // pred_check_branch
        %820 = sbr.rel (%p818) target = $region40
      $region39: #{_lambda_.40} parent=35 // pred_region
        _
      $region40: #{_lambda_.40} parent=35 // pred_fallthru
        _
    $region36: #{_lambda_.40} parent=5 // pred_fallthru
      _
    %p821 = scmp.le.s32.totalorder 2, %s10
    // Predicated region
    $region41: #{_lambda_.40} parent=5 // pred_check
      %p822 = pneg %p821
    $region42: #{_lambda_.40} parent=5 // pred_check_branch
      %824 = sbr.rel (%p822) target = $region44
    $region43: #{_lambda_.40} parent=5 // pred_region
      %s825 = ssub.s32 %s10, 2
      // Predicated region
      $region45: #{_lambda_.40} parent=43 // pred_check
        %p826 = pneg %p167
      $region46: #{_lambda_.40} parent=43 // pred_check_branch
        %828 = sbr.rel (%p826) target = $region48
      $region47: #{_lambda_.40} parent=43 // pred_region
        %p829 = scmp.lt.s32.totalorder %s21, 1
        %s830 = scalar_select %p829, %s21, 1
        %p831 = scmp.lt.s32.totalorder %s22, 0
        %s832 = scalar_select %p831, %s22, 0
        %s833 = sadd.s32 %s832, %s830
        %s834 = smul.addr %s833, 8
        %s835 = scalar_lea.vmem %s4, %s834
      $region48: #{_lambda_.40} parent=43 // pred_fallthru
        _
    $region44: #{_lambda_.40} parent=5 // pred_fallthru
      _
  $region6: #{_lambda_.40} parent=0 // loop_footer
    %s14 = sadd.s32 1, %s10
  $region7: #{_lambda_.40} parent=0 // loop_footer_branch
    %9 = sbr.rel target = $region3
  $region8: #{_lambda_.40} parent=0 // loop_exit
    _

// kernel: _lambda_.41
$region0: #{_lambda_.41}
  #allocation0 [shape = 'u32[]', space=smem, size = 0x4, offset = 0x4, fixed_abs, tag = 'smem constant byte address 0x4 - core index']
  #allocation1 [shape = 'u32[144,128]{1,0:T(1,128)}', space=vmem, size = 0x12000, scoped, tag = 'internal scratch']
  #allocation2 [shape = 'f32[16,32]{1,0:T(8,128)}', space=vmem, size = 0x2000, scoped, tag = 'scratch operand']
  %s0 = inlined_call_operand.vmem [shape: f32[16,32], index: 0, kind: input, shape index: {}]
  %s1 = inlined_call_operand.vmem [shape: bf16[32,32], index: 1, kind: input, shape index: {}]
  %s2 = inlined_call_operand.vmem [shape: f32[1,32], index: 2, kind: input, shape index: {}]
  %s3 = inlined_call_operand.vmem [shape: f32[16,32], index: 3, kind: input, shape index: {}]
  %s4 = inlined_call_operand.vmem [shape: f32[1,32], index: 4, kind: input, shape index: {}]
  %s5 = inlined_call_operand.vmem [shape: f32[1,32], index: 5, kind: input, shape index: {}]
  %s6 = inlined_call_operand.vmem [shape: f32[16,32], index: 6, kind: output, shape index: {}]
  %s7 = sld [smem:[#allocation0]]
  $region42: #{_lambda_.41} parent=0
    _
  %s9 = ssub.s32 1, %s7
  %s10 = scalar_select 0, %s9, %s7
  // Predicated region
  $region2: #{_lambda_.41} parent=0 // pred_check
    _
  $region3: #{_lambda_.41} parent=0 // pred_check_branch
    %12 = sbr.rel (0) target = $region5
  $region4: #{_lambda_.41} parent=0 // pred_region
    _
  $region5: #{_lambda_.41} parent=0 // pred_fallthru
    _
  // Predicated region
  $region6: #{_lambda_.41} parent=0 // pred_check
    _
  $region7: #{_lambda_.41} parent=0 // pred_check_branch
    %14 = sbr.rel (0) target = $region9
  $region8: #{_lambda_.41} parent=0 // pred_region
    _
  $region9: #{_lambda_.41} parent=0 // pred_fallthru
    _
  // Predicated region
  $region10: #{_lambda_.41} parent=0 // pred_check
    _
  $region11: #{_lambda_.41} parent=0 // pred_check_branch
    %16 = sbr.rel (0) target = $region13
  $region12: #{_lambda_.41} parent=0 // pred_region
    _
  $region13: #{_lambda_.41} parent=0 // pred_fallthru
    _
  // Predicated region
  $region14: #{_lambda_.41} parent=0 // pred_check
    _
  $region15: #{_lambda_.41} parent=0 // pred_check_branch
    %18 = sbr.rel (0) target = $region17
  $region16: #{_lambda_.41} parent=0 // pred_region
    _
  $region17: #{_lambda_.41} parent=0 // pred_fallthru
    _
  // Predicated region
  $region18: #{_lambda_.41} parent=0 // pred_check
    _
  $region19: #{_lambda_.41} parent=0 // pred_check_branch
    %20 = sbr.rel (0) target = $region21
  $region20: #{_lambda_.41} parent=0 // pred_region
    _
  $region21: #{_lambda_.41} parent=0 // pred_fallthru
    _
  // Predicated region
  $region22: #{_lambda_.41} parent=0 // pred_check
    _
  $region23: #{_lambda_.41} parent=0 // pred_check_branch
    %22 = sbr.rel (0) target = $region25
  $region24: #{_lambda_.41} parent=0 // pred_region
    _
  $region25: #{_lambda_.41} parent=0 // pred_fallthru
    _
  %p24 = scmp.eq.s32.totalorder 0, 0
  // Predicated region
  $region26: #{_lambda_.41} parent=0 // pred_check
    %p25 = pneg %p24
  $region27: #{_lambda_.41} parent=0 // pred_check_branch
    %27 = sbr.rel (%p25) target = $region29
  $region28: #{_lambda_.41} parent=0 // pred_region
    %vm28 = vcmask 261120
    %29 = vst.msk [vmem:[#allocation2] sm:$0xff] %vm28, 0.0
    %30 = vst.msk [vmem:[#allocation2 + $0x8] sm:$0xff] %vm28, 0.0
  $region29: #{_lambda_.41} parent=0 // pred_fallthru
    _
  %v31 = vld [vmem:[%s0] sm:$0xff]
  %v32 = vld [vmem:[%s0 + $0x8] sm:$0xff]
  %v33 = vld [vmem:[#allocation2] sm:$0xff]
  %v34 = vld [vmem:[#allocation2 + $0x8] sm:$0xff]
  %v35 = vpack.c.bf16 %v32, %v31
  %v36 = vld [vmem:[%s1] sm:$0xf]
  %v37 = vld [vmem:[%s1 + $0x4] sm:$0xf]
  %v38 = vld [vmem:[%s1 + $0x8] sm:$0xf]
  %v39 = vld [vmem:[%s1 + $0xc] sm:$0xf]
  %v44 = vunpack.c.l.b16 %v36
  %v45 = vunpack.c.l.b16 %v37
  %v46 = vunpack.c.l.b16 %v38
  %v47 = vunpack.c.l.b16 %v39
  %v48 = vpack.c.b16 %v45, %v44
  %v49 = vpack.c.b16 %v47, %v46
  %vm52 = vcmask 261120
  %v54 = vsel %vm52, %v35, 0
  %56 = vmatprep.subr.bf16.mxu0 0
  %57 = vmatpush1.bf16.msra.mxu0 %v48
  %58 = vmatprep.subr.bf16.mxu0 0
  %59 = vmatpush1.bf16.msra.mxu0 %v49
  %60 = vmatprep.subr.bf16.mxu0 0
  %61 = vmatpush1.bf16.msra.mxu0 0
  %62 = vmatprep.subr.bf16.mxu0 0
  %63 = vmatpush1.bf16.msra.mxu0 0
  %64 = vmatprep.subr.bf16.mxu0 0
  %65 = vmatpush1.bf16.msra.mxu0 0
  %66 = vmatprep.subr.bf16.mxu0 0
  %67 = vmatpush1.bf16.msra.mxu0 0
  %68 = vmatprep.subr.bf16.mxu0 0
  %69 = vmatpush1.bf16.msra.mxu0 0
  %70 = vmatprep.subr.bf16.mxu0 0
  %71 = vmatpush1.bf16.msra.mxu0 0
  %72 = vmatprep.subr.bf16.mxu0 0
  %73 = vmatpush1.bf16.msra.mxu0 0
  %74 = vmatprep.subr.bf16.mxu0 0
  %75 = vmatpush1.bf16.msra.mxu0 0
  %76 = vmatprep.subr.bf16.mxu0 0
  %77 = vmatpush1.bf16.msra.mxu0 0
  %78 = vmatprep.subr.bf16.mxu0 0
  %79 = vmatpush1.bf16.msra.mxu0 0
  %80 = vmatprep.subr.bf16.mxu0 0
  %81 = vmatpush1.bf16.msra.mxu0 0
  %82 = vmatprep.subr.bf16.mxu0 0
  %83 = vmatpush1.bf16.msra.mxu0 0
  %84 = vmatprep.subr.bf16.mxu0 0
  %85 = vmatpush1.bf16.msra.mxu0 0
  %86 = vmatprep.subr.bf16.mxu0 0
  %87 = vmatpush1.bf16.msra.mxu0 0
  %88 = vmatprep.mubr.bf16.mxu0 0
  %89 = vmatmul.mubr.bf16.gmra.mrb[0].mxu0 %v54
  %v90 = vpop.f32.mrb[0].mxu0
  %v91 = vadd.f32 0.0, %v90
  %v92 = vpop.f32.mrb[0].mxu0
  %v93 = vpop.f32.mrb[0].mxu0
  %v94 = vadd.f32 0.0, %v93
  %v95 = vpop.f32.mrb[0].mxu0
  %96 = vdwg.mxu0
  %v97 = vadd.f32 %v33, %v91
  %v98 = vadd.f32 %v34, %v94
  %99 = vst.msk [vmem:[#allocation2] sm:$0xff] %vm52, %v97
  %100 = vst.msk [vmem:[#allocation2 + $0x8] sm:$0xff] %vm52, %v98
  // Predicated region
  $region30: #{_lambda_.41} parent=0 // pred_check
    %p101 = pneg %p24
  $region31: #{_lambda_.41} parent=0 // pred_check_branch
    %103 = sbr.rel (%p101) target = $region33
  $region32: #{_lambda_.41} parent=0 // pred_region
    %v104 = vld [vmem:[#allocation2] sm:$0xff]
    %v105 = vld [vmem:[#allocation2 + $0x8] sm:$0xff]
    %v106 = vld [vmem:[%s2] sm:$0x1]
    %v108 = vlaneseq
    %v109 = vshrl.u32 %v108, 7
    %v110 = vsub.s32 0, %v109
    %v111 = vrot.slane %v106, %v110
    %v113 = vadd.f32 %v104, %v111
    %v114 = vadd.f32 %v105, %v111
    %v115 = vld [vmem:[%s3] sm:$0xff]
    %v116 = vld [vmem:[%s3 + $0x8] sm:$0xff]
    %v117 = vadd.f32 %v113, %v115
    %v118 = vadd.f32 %v114, %v116
    %v119 = vsel %vm52, %v117, 0.0
    %120 = vadd.xlane.f32.xlu0 %v119
    %v121 = vpop.xlane.xlu0 %120
    %v122 = vsel %vm52, %v118, 0.0
    %123 = vadd.xlane.f32.xlu0 %v122
    %v124 = vpop.xlane.xlu0 %123
    %v125 = vrcp.pop 32.0
    %v126 = vmul.f32 %v121, %v125
    %v127 = vmul.f32 %v124, %v125
    %v128 = vsub.f32 %v117, %v126
    %v129 = vsub.f32 %v118, %v127
    %v130 = vmul.f32 %v128, %v128
    %v131 = vmul.f32 %v129, %v129
    %v132 = vsel %vm52, %v130, 0.0
    %133 = vadd.xlane.f32.xlu0 %v132
    %v134 = vpop.xlane.xlu0 %133
    %v135 = vsel %vm52, %v131, 0.0
    %136 = vadd.xlane.f32.xlu0 %v135
    %v137 = vpop.xlane.xlu0 %136
    %v138 = vmul.f32 %v134, %v125
    %v139 = vmul.f32 %v137, %v125
    %v140 = vadd.f32 %v138, 1e-12
    %v141 = vadd.f32 %v139, 1e-12
    %v142 = vrsqrt.pop %v140
    %v143 = vrsqrt.pop %v141
    %v144 = vmul.f32 %v128, %v142
    %v145 = vmul.f32 %v129, %v143
    %v146 = vld [vmem:[%s4] sm:$0x1]
    %v148 = vlaneseq
    %v149 = vshrl.u32 %v148, 7
    %v150 = vsub.s32 0, %v149
    %v151 = vrot.slane %v146, %v150
    %v153 = vmul.f32 %v144, %v151
    %v154 = vmul.f32 %v145, %v151
    %v155 = vld [vmem:[%s5] sm:$0x1]
    %v157 = vlaneseq
    %v158 = vshrl.u32 %v157, 7
    %v159 = vsub.s32 0, %v158
    %v160 = vrot.slane %v155, %v159
    %v162 = vadd.f32 %v153, %v160
    %v163 = vadd.f32 %v154, %v160
    %164 = vst.msk [vmem:[%s6] sm:$0xff] %vm52, %v162
    %165 = vst.msk [vmem:[%s6 + $0x8] sm:$0xff] %vm52, %v163
  $region33: #{_lambda_.41} parent=0 // pred_fallthru
    _
  // Predicated region
  $region34: #{_lambda_.41} parent=0 // pred_check
    _
  $region35: #{_lambda_.41} parent=0 // pred_check_branch
    %167 = sbr.rel (0) target = $region37
  $region36: #{_lambda_.41} parent=0 // pred_region
    _
  $region37: #{_lambda_.41} parent=0 // pred_fallthru
    _
  // Predicated region
  $region38: #{_lambda_.41} parent=0 // pred_check
    _
  $region39: #{_lambda_.41} parent=0 // pred_check_branch
    %169 = sbr.rel (0) target = $region41
  $region40: #{_lambda_.41} parent=0 // pred_region
    _
  $region41: #{_lambda_.41} parent=0 // pred_fallthru
    _

// kernel: _lambda_.42
$region0: #{_lambda_.42}
  #allocation0 [shape = 'u32[]', space=smem, size = 0x4, offset = 0x4, fixed_abs, tag = 'smem constant byte address 0x4 - core index']
  #allocation1 [shape = 'u32[144,128]{1,0:T(1,128)}', space=vmem, size = 0x12000, scoped, tag = 'internal scratch']
  #allocation2 [shape = 'f32[16,128]{1,0:T(8,128)}', space=vmem, size = 0x2000, scoped, tag = 'scratch operand']
  %s0 = inlined_call_operand.vmem [shape: f32[16,32], index: 0, kind: input, shape index: {}]
  %s1 = inlined_call_operand.vmem [shape: bf16[32,128], index: 1, kind: input, shape index: {}]
  %s2 = inlined_call_operand.vmem [shape: f32[1,128], index: 2, kind: input, shape index: {}]
  %s3 = inlined_call_operand.vmem [shape: f32[16,128], index: 3, kind: output, shape index: {}]
  %s4 = sld [smem:[#allocation0]]
  $region30: #{_lambda_.42} parent=0
    _
  %s6 = ssub.s32 1, %s4
  %s7 = scalar_select 0, %s6, %s4
  // Predicated region
  $region2: #{_lambda_.42} parent=0 // pred_check
    _
  $region3: #{_lambda_.42} parent=0 // pred_check_branch
    %9 = sbr.rel (0) target = $region5
  $region4: #{_lambda_.42} parent=0 // pred_region
    _
  $region5: #{_lambda_.42} parent=0 // pred_fallthru
    _
  // Predicated region
  $region6: #{_lambda_.42} parent=0 // pred_check
    _
  $region7: #{_lambda_.42} parent=0 // pred_check_branch
    %11 = sbr.rel (0) target = $region9
  $region8: #{_lambda_.42} parent=0 // pred_region
    _
  $region9: #{_lambda_.42} parent=0 // pred_fallthru
    _
  // Predicated region
  $region10: #{_lambda_.42} parent=0 // pred_check
    _
  $region11: #{_lambda_.42} parent=0 // pred_check_branch
    %13 = sbr.rel (0) target = $region13
  $region12: #{_lambda_.42} parent=0 // pred_region
    _
  $region13: #{_lambda_.42} parent=0 // pred_fallthru
    _
  %p15 = scmp.eq.s32.totalorder 0, 0
  // Predicated region
  $region14: #{_lambda_.42} parent=0 // pred_check
    %p16 = pneg %p15
  $region15: #{_lambda_.42} parent=0 // pred_check_branch
    %18 = sbr.rel (%p16) target = $region17
  $region16: #{_lambda_.42} parent=0 // pred_region
    %19 = vst [vmem:[#allocation2] sm:$0xff] 0.0
    %20 = vst [vmem:[#allocation2 + $0x8] sm:$0xff] 0.0
  $region17: #{_lambda_.42} parent=0 // pred_fallthru
    _
  %v21 = vld [vmem:[%s0] sm:$0xff]
  %v22 = vld [vmem:[%s0 + $0x8] sm:$0xff]
  %v23 = vld [vmem:[#allocation2] sm:$0xff]
  %v24 = vld [vmem:[#allocation2 + $0x8] sm:$0xff]
  %v25 = vpack.c.bf16 %v22, %v21
  %v26 = vld [vmem:[%s1] sm:$0xf]
  %v27 = vld [vmem:[%s1 + $0x4] sm:$0xf]
  %v28 = vld [vmem:[%s1 + $0x8] sm:$0xf]
  %v29 = vld [vmem:[%s1 + $0xc] sm:$0xf]
  %v34 = vunpack.c.l.b16 %v26
  %v35 = vunpack.c.l.b16 %v27
  %v36 = vunpack.c.l.b16 %v28
  %v37 = vunpack.c.l.b16 %v29
  %v38 = vpack.c.b16 %v35, %v34
  %v39 = vpack.c.b16 %v37, %v36
  %vm42 = vcmask 261120
  %v44 = vsel %vm42, %v25, 0
  %46 = vmatprep.subr.bf16.mxu0 0
  %47 = vmatpush1.bf16.msra.mxu0 %v38
  %48 = vmatprep.subr.bf16.mxu0 0
  %49 = vmatpush1.bf16.msra.mxu0 %v39
  %50 = vmatprep.subr.bf16.mxu0 0
  %51 = vmatpush1.bf16.msra.mxu0 0
  %52 = vmatprep.subr.bf16.mxu0 0
  %53 = vmatpush1.bf16.msra.mxu0 0
  %54 = vmatprep.subr.bf16.mxu0 0
  %55 = vmatpush1.bf16.msra.mxu0 0
  %56 = vmatprep.subr.bf16.mxu0 0
  %57 = vmatpush1.bf16.msra.mxu0 0
  %58 = vmatprep.subr.bf16.mxu0 0
  %59 = vmatpush1.bf16.msra.mxu0 0
  %60 = vmatprep.subr.bf16.mxu0 0
  %61 = vmatpush1.bf16.msra.mxu0 0
  %62 = vmatprep.subr.bf16.mxu0 0
  %63 = vmatpush1.bf16.msra.mxu0 0
  %64 = vmatprep.subr.bf16.mxu0 0
  %65 = vmatpush1.bf16.msra.mxu0 0
  %66 = vmatprep.subr.bf16.mxu0 0
  %67 = vmatpush1.bf16.msra.mxu0 0
  %68 = vmatprep.subr.bf16.mxu0 0
  %69 = vmatpush1.bf16.msra.mxu0 0
  %70 = vmatprep.subr.bf16.mxu0 0
  %71 = vmatpush1.bf16.msra.mxu0 0
  %72 = vmatprep.subr.bf16.mxu0 0
  %73 = vmatpush1.bf16.msra.mxu0 0
  %74 = vmatprep.subr.bf16.mxu0 0
  %75 = vmatpush1.bf16.msra.mxu0 0
  %76 = vmatprep.subr.bf16.mxu0 0
  %77 = vmatpush1.bf16.msra.mxu0 0
  %78 = vmatprep.mubr.bf16.mxu0 0
  %79 = vmatmul.mubr.bf16.gmra.mrb[0].mxu0 %v44
  %v80 = vpop.f32.mrb[0].mxu0
  %v81 = vadd.f32 0.0, %v80
  %v82 = vpop.f32.mrb[0].mxu0
  %v83 = vpop.f32.mrb[0].mxu0
  %v84 = vadd.f32 0.0, %v83
  %v85 = vpop.f32.mrb[0].mxu0
  %86 = vdwg.mxu0
  %v87 = vadd.f32 %v23, %v81
  %v88 = vadd.f32 %v24, %v84
  %89 = vst [vmem:[#allocation2] sm:$0xff] %v87
  %90 = vst [vmem:[#allocation2 + $0x8] sm:$0xff] %v88
  // Predicated region
  $region18: #{_lambda_.42} parent=0 // pred_check
    %p91 = pneg %p15
  $region19: #{_lambda_.42} parent=0 // pred_check_branch
    %93 = sbr.rel (%p91) target = $region21
  $region20: #{_lambda_.42} parent=0 // pred_region
    %v94 = vld [vmem:[#allocation2] sm:$0xff]
    %v95 = vld [vmem:[#allocation2 + $0x8] sm:$0xff]
    %v96 = vld [vmem:[%s2] sm:$0x1]
    %v98 = vlaneseq
    %v99 = vshrl.u32 %v98, 7
    %v100 = vsub.s32 0, %v99
    %v101 = vrot.slane %v96, %v100
    %v103 = vadd.f32 %v94, %v101
    %v104 = vadd.f32 %v95, %v101
    %v105 = vmul.f32 %v103, 0.5
    %v106 = vmul.f32 %v104, 0.5
    %v107 = vmul.f32 %v103, 0.70710677
    %v108 = vmul.f32 %v104, 0.70710677
    %v109 = verf.f32.pop %v107
    %v110 = verf.f32.pop %v108
    %v111 = vadd.f32 %v109, 1.0
    %v112 = vadd.f32 %v110, 1.0
    %v113 = vmul.f32 %v105, %v111
    %v114 = vmul.f32 %v106, %v112
    %115 = vst [vmem:[%s3] sm:$0xff] %v113
    %116 = vst [vmem:[%s3 + $0x8] sm:$0xff] %v114
  $region21: #{_lambda_.42} parent=0 // pred_fallthru
    _
  // Predicated region
  $region22: #{_lambda_.42} parent=0 // pred_check
    _
  $region23: #{_lambda_.42} parent=0 // pred_check_branch
    %118 = sbr.rel (0) target = $region25
  $region24: #{_lambda_.42} parent=0 // pred_region
    _
  $region25: #{_lambda_.42} parent=0 // pred_fallthru
    _
  // Predicated region
  $region26: #{_lambda_.42} parent=0 // pred_check
    _
  $region27: #{_lambda_.42} parent=0 // pred_check_branch
    %120 = sbr.rel (0) target = $region29
  $region28: #{_lambda_.42} parent=0 // pred_region
    _
  $region29: #{_lambda_.42} parent=0 // pred_fallthru
    _

// kernel: _lambda_.43
$region0: #{_lambda_.43}
  #allocation0 [shape = 'u32[]', space=smem, size = 0x4, offset = 0x4, fixed_abs, tag = 'smem constant byte address 0x4 - core index']
  #allocation1 [shape = 'u32[144,128]{1,0:T(1,128)}', space=vmem, size = 0x12000, scoped, tag = 'internal scratch']
  #allocation2 [shape = 'f32[16,32]{1,0:T(8,128)}', space=vmem, size = 0x2000, scoped, tag = 'scratch operand']
  %s0 = inlined_call_operand.vmem [shape: f32[16,128], index: 0, kind: input, shape index: {}]
  %s1 = inlined_call_operand.vmem [shape: bf16[128,32], index: 1, kind: input, shape index: {}]
  %s2 = inlined_call_operand.vmem [shape: f32[1,32], index: 2, kind: input, shape index: {}]
  %s3 = inlined_call_operand.vmem [shape: f32[16,32], index: 3, kind: input, shape index: {}]
  %s4 = inlined_call_operand.vmem [shape: f32[1,32], index: 4, kind: input, shape index: {}]
  %s5 = inlined_call_operand.vmem [shape: f32[1,32], index: 5, kind: input, shape index: {}]
  %s6 = inlined_call_operand.vmem [shape: f32[16,32], index: 6, kind: output, shape index: {}]
  %s7 = sld [smem:[#allocation0]]
  $region42: #{_lambda_.43} parent=0
    _
  %s9 = ssub.s32 1, %s7
  %s10 = scalar_select 0, %s9, %s7
  // Predicated region
  $region2: #{_lambda_.43} parent=0 // pred_check
    _
  $region3: #{_lambda_.43} parent=0 // pred_check_branch
    %12 = sbr.rel (0) target = $region5
  $region4: #{_lambda_.43} parent=0 // pred_region
    _
  $region5: #{_lambda_.43} parent=0 // pred_fallthru
    _
  // Predicated region
  $region6: #{_lambda_.43} parent=0 // pred_check
    _
  $region7: #{_lambda_.43} parent=0 // pred_check_branch
    %14 = sbr.rel (0) target = $region9
  $region8: #{_lambda_.43} parent=0 // pred_region
    _
  $region9: #{_lambda_.43} parent=0 // pred_fallthru
    _
  // Predicated region
  $region10: #{_lambda_.43} parent=0 // pred_check
    _
  $region11: #{_lambda_.43} parent=0 // pred_check_branch
    %16 = sbr.rel (0) target = $region13
  $region12: #{_lambda_.43} parent=0 // pred_region
    _
  $region13: #{_lambda_.43} parent=0 // pred_fallthru
    _
  // Predicated region
  $region14: #{_lambda_.43} parent=0 // pred_check
    _
  $region15: #{_lambda_.43} parent=0 // pred_check_branch
    %18 = sbr.rel (0) target = $region17
  $region16: #{_lambda_.43} parent=0 // pred_region
    _
  $region17: #{_lambda_.43} parent=0 // pred_fallthru
    _
  // Predicated region
  $region18: #{_lambda_.43} parent=0 // pred_check
    _
  $region19: #{_lambda_.43} parent=0 // pred_check_branch
    %20 = sbr.rel (0) target = $region21
  $region20: #{_lambda_.43} parent=0 // pred_region
    _
  $region21: #{_lambda_.43} parent=0 // pred_fallthru
    _
  // Predicated region
  $region22: #{_lambda_.43} parent=0 // pred_check
    _
  $region23: #{_lambda_.43} parent=0 // pred_check_branch
    %22 = sbr.rel (0) target = $region25
  $region24: #{_lambda_.43} parent=0 // pred_region
    _
  $region25: #{_lambda_.43} parent=0 // pred_fallthru
    _
  %p24 = scmp.eq.s32.totalorder 0, 0
  // Predicated region
  $region26: #{_lambda_.43} parent=0 // pred_check
    %p25 = pneg %p24
  $region27: #{_lambda_.43} parent=0 // pred_check_branch
    %27 = sbr.rel (%p25) target = $region29
  $region28: #{_lambda_.43} parent=0 // pred_region
    %vm28 = vcmask 261120
    %29 = vst.msk [vmem:[#allocation2] sm:$0xff] %vm28, 0.0
    %30 = vst.msk [vmem:[#allocation2 + $0x8] sm:$0xff] %vm28, 0.0
  $region29: #{_lambda_.43} parent=0 // pred_fallthru
    _
  %v31 = vld [vmem:[%s0] sm:$0xff]
  %v32 = vld [vmem:[%s0 + $0x8] sm:$0xff]
  %v33 = vld [vmem:[#allocation2] sm:$0xff]
  %v34 = vld [vmem:[#allocation2 + $0x8] sm:$0xff]
  %v35 = vpack.c.bf16 %v32, %v31
  %v36 = vld [vmem:[%s1] sm:$0xf]
  %v37 = vld [vmem:[%s1 + $0x4] sm:$0xf]
  %v38 = vld [vmem:[%s1 + $0x8] sm:$0xf]
  %v39 = vld [vmem:[%s1 + $0xc] sm:$0xf]
  %v40 = vld [vmem:[%s1 + $0x10] sm:$0xf]
  %v41 = vld [vmem:[%s1 + $0x14] sm:$0xf]
  %v42 = vld [vmem:[%s1 + $0x18] sm:$0xf]
  %v43 = vld [vmem:[%s1 + $0x1c] sm:$0xf]
  %v44 = vld [vmem:[%s1 + $0x20] sm:$0xf]
  %v45 = vld [vmem:[%s1 + $0x24] sm:$0xf]
  %v46 = vld [vmem:[%s1 + $0x28] sm:$0xf]
  %v47 = vld [vmem:[%s1 + $0x2c] sm:$0xf]
  %v48 = vld [vmem:[%s1 + $0x30] sm:$0xf]
  %v49 = vld [vmem:[%s1 + $0x34] sm:$0xf]
  %v50 = vld [vmem:[%s1 + $0x38] sm:$0xf]
  %v51 = vld [vmem:[%s1 + $0x3c] sm:$0xf]
  %v68 = vunpack.c.l.b16 %v36
  %v69 = vunpack.c.l.b16 %v37
  %v70 = vunpack.c.l.b16 %v38
  %v71 = vunpack.c.l.b16 %v39
  %v72 = vunpack.c.l.b16 %v40
  %v73 = vunpack.c.l.b16 %v41
  %v74 = vunpack.c.l.b16 %v42
  %v75 = vunpack.c.l.b16 %v43
  %v76 = vunpack.c.l.b16 %v44
  %v77 = vunpack.c.l.b16 %v45
  %v78 = vunpack.c.l.b16 %v46
  %v79 = vunpack.c.l.b16 %v47
  %v80 = vunpack.c.l.b16 %v48
  %v81 = vunpack.c.l.b16 %v49
  %v82 = vunpack.c.l.b16 %v50
  %v83 = vunpack.c.l.b16 %v51
  %v84 = vpack.c.b16 %v69, %v68
  %v85 = vpack.c.b16 %v71, %v70
  %v86 = vpack.c.b16 %v73, %v72
  %v87 = vpack.c.b16 %v75, %v74
  %v88 = vpack.c.b16 %v77, %v76
  %v89 = vpack.c.b16 %v79, %v78
  %v90 = vpack.c.b16 %v81, %v80
  %v91 = vpack.c.b16 %v83, %v82
  %100 = vmatprep.subr.bf16.mxu0 0
  %101 = vmatpush1.bf16.msra.mxu0 %v84
  %102 = vmatprep.subr.bf16.mxu0 0
  %103 = vmatpush1.bf16.msra.mxu0 %v85
  %104 = vmatprep.subr.bf16.mxu0 0
  %105 = vmatpush1.bf16.msra.mxu0 %v86
  %106 = vmatprep.subr.bf16.mxu0 0
  %107 = vmatpush1.bf16.msra.mxu0 %v87
  %108 = vmatprep.subr.bf16.mxu0 0
  %109 = vmatpush1.bf16.msra.mxu0 %v88
  %110 = vmatprep.subr.bf16.mxu0 0
  %111 = vmatpush1.bf16.msra.mxu0 %v89
  %112 = vmatprep.subr.bf16.mxu0 0
  %113 = vmatpush1.bf16.msra.mxu0 %v90
  %114 = vmatprep.subr.bf16.mxu0 0
  %115 = vmatpush1.bf16.msra.mxu0 %v91
  %116 = vmatprep.subr.bf16.mxu0 0
  %117 = vmatpush1.bf16.msra.mxu0 0
  %118 = vmatprep.subr.bf16.mxu0 0
  %119 = vmatpush1.bf16.msra.mxu0 0
  %120 = vmatprep.subr.bf16.mxu0 0
  %121 = vmatpush1.bf16.msra.mxu0 0
  %122 = vmatprep.subr.bf16.mxu0 0
  %123 = vmatpush1.bf16.msra.mxu0 0
  %124 = vmatprep.subr.bf16.mxu0 0
  %125 = vmatpush1.bf16.msra.mxu0 0
  %126 = vmatprep.subr.bf16.mxu0 0
  %127 = vmatpush1.bf16.msra.mxu0 0
  %128 = vmatprep.subr.bf16.mxu0 0
  %129 = vmatpush1.bf16.msra.mxu0 0
  %130 = vmatprep.subr.bf16.mxu0 0
  %131 = vmatpush1.bf16.msra.mxu0 0
  %132 = vmatprep.mubr.bf16.mxu0 0
  %133 = vmatmul.mubr.bf16.gmra.mrb[0].mxu0 %v35
  %v134 = vpop.f32.mrb[0].mxu0
  %v135 = vadd.f32 0.0, %v134
  %v136 = vpop.f32.mrb[0].mxu0
  %v137 = vpop.f32.mrb[0].mxu0
  %v138 = vadd.f32 0.0, %v137
  %v139 = vpop.f32.mrb[0].mxu0
  %140 = vdwg.mxu0
  %v141 = vadd.f32 %v33, %v135
  %v142 = vadd.f32 %v34, %v138
  %vm143 = vcmask 261120
  %144 = vst.msk [vmem:[#allocation2] sm:$0xff] %vm143, %v141
  %145 = vst.msk [vmem:[#allocation2 + $0x8] sm:$0xff] %vm143, %v142
  // Predicated region
  $region30: #{_lambda_.43} parent=0 // pred_check
    %p146 = pneg %p24
  $region31: #{_lambda_.43} parent=0 // pred_check_branch
    %148 = sbr.rel (%p146) target = $region33
  $region32: #{_lambda_.43} parent=0 // pred_region
    %v149 = vld [vmem:[#allocation2] sm:$0xff]
    %v150 = vld [vmem:[#allocation2 + $0x8] sm:$0xff]
    %v151 = vld [vmem:[%s2] sm:$0x1]
    %v153 = vlaneseq
    %v154 = vshrl.u32 %v153, 7
    %v155 = vsub.s32 0, %v154
    %v156 = vrot.slane %v151, %v155
    %v158 = vadd.f32 %v149, %v156
    %v159 = vadd.f32 %v150, %v156
    %v160 = vld [vmem:[%s3] sm:$0xff]
    %v161 = vld [vmem:[%s3 + $0x8] sm:$0xff]
    %v162 = vadd.f32 %v158, %v160
    %v163 = vadd.f32 %v159, %v161
    %v164 = vsel %vm143, %v162, 0.0
    %165 = vadd.xlane.f32.xlu0 %v164
    %v166 = vpop.xlane.xlu0 %165
    %v167 = vsel %vm143, %v163, 0.0
    %168 = vadd.xlane.f32.xlu0 %v167
    %v169 = vpop.xlane.xlu0 %168
    %v170 = vrcp.pop 32.0
    %v171 = vmul.f32 %v166, %v170
    %v172 = vmul.f32 %v169, %v170
    %v173 = vsub.f32 %v162, %v171
    %v174 = vsub.f32 %v163, %v172
    %v175 = vmul.f32 %v173, %v173
    %v176 = vmul.f32 %v174, %v174
    %v177 = vsel %vm143, %v175, 0.0
    %178 = vadd.xlane.f32.xlu0 %v177
    %v179 = vpop.xlane.xlu0 %178
    %v180 = vsel %vm143, %v176, 0.0
    %181 = vadd.xlane.f32.xlu0 %v180
    %v182 = vpop.xlane.xlu0 %181
    %v183 = vmul.f32 %v179, %v170
    %v184 = vmul.f32 %v182, %v170
    %v185 = vadd.f32 %v183, 1e-12
    %v186 = vadd.f32 %v184, 1e-12
    %v187 = vrsqrt.pop %v185
    %v188 = vrsqrt.pop %v186
    %v189 = vmul.f32 %v173, %v187
    %v190 = vmul.f32 %v174, %v188
    %v191 = vld [vmem:[%s4] sm:$0x1]
    %v193 = vlaneseq
    %v194 = vshrl.u32 %v193, 7
    %v195 = vsub.s32 0, %v194
    %v196 = vrot.slane %v191, %v195
    %v198 = vmul.f32 %v189, %v196
    %v199 = vmul.f32 %v190, %v196
    %v200 = vld [vmem:[%s5] sm:$0x1]
    %v202 = vlaneseq
    %v203 = vshrl.u32 %v202, 7
    %v204 = vsub.s32 0, %v203
    %v205 = vrot.slane %v200, %v204
    %v207 = vadd.f32 %v198, %v205
    %v208 = vadd.f32 %v199, %v205
    %209 = vst.msk [vmem:[%s6] sm:$0xff] %vm143, %v207
    %210 = vst.msk [vmem:[%s6 + $0x8] sm:$0xff] %vm143, %v208
  $region33: #{_lambda_.43} parent=0 // pred_fallthru
    _
  // Predicated region
  $region34: #{_lambda_.43} parent=0 // pred_check
    _
  $region35: #{_lambda_.43} parent=0 // pred_check_branch
    %212 = sbr.rel (0) target = $region37
  $region36: #{_lambda_.43} parent=0 // pred_region
    _
  $region37: #{_lambda_.43} parent=0 // pred_fallthru
    _
  // Predicated region
  $region38: #{_lambda_.43} parent=0 // pred_check
    _
  $region39: #{_lambda_.43} parent=0 // pred_check_branch
    %214 = sbr.rel (0) target = $region41
  $region40: #{_lambda_.43} parent=0 // pred_region
    _
  $region41: #{_lambda_.43} parent=0 // pred_fallthru
    _

// kernel: _lambda_.49
$region0: #{_lambda_.49}
  #allocation0 [shape = 'u32[]', space=smem, size = 0x4, offset = 0x4, fixed_abs, tag = 'smem constant byte address 0x4 - core index']
  #allocation1 [shape = 'u32[144,128]{1,0:T(1,128)}', space=vmem, size = 0x12000, scoped, tag = 'internal scratch']
  #allocation2 [shape = 'f32[8,32]{1,0:T(8,128)}', space=vmem, size = 0x1000, scoped, tag = 'scratch operand']
  %s0 = inlined_call_operand.vmem [shape: f32[8,32], index: 0, kind: input, shape index: {}]
  %s1 = inlined_call_operand.vmem [shape: bf16[32,32], index: 1, kind: input, shape index: {}]
  %s2 = inlined_call_operand.vmem [shape: f32[1,32], index: 2, kind: input, shape index: {}]
  %s3 = inlined_call_operand.vmem [shape: f32[8,32], index: 3, kind: output, shape index: {}]
  %s4 = sld [smem:[#allocation0]]
  $region30: #{_lambda_.49} parent=0
    _
  %s6 = ssub.s32 1, %s4
  %s7 = scalar_select 0, %s6, %s4
  // Predicated region
  $region2: #{_lambda_.49} parent=0 // pred_check
    _
  $region3: #{_lambda_.49} parent=0 // pred_check_branch
    %9 = sbr.rel (0) target = $region5
  $region4: #{_lambda_.49} parent=0 // pred_region
    _
  $region5: #{_lambda_.49} parent=0 // pred_fallthru
    _
  // Predicated region
  $region6: #{_lambda_.49} parent=0 // pred_check
    _
  $region7: #{_lambda_.49} parent=0 // pred_check_branch
    %11 = sbr.rel (0) target = $region9
  $region8: #{_lambda_.49} parent=0 // pred_region
    _
  $region9: #{_lambda_.49} parent=0 // pred_fallthru
    _
  // Predicated region
  $region10: #{_lambda_.49} parent=0 // pred_check
    _
  $region11: #{_lambda_.49} parent=0 // pred_check_branch
    %13 = sbr.rel (0) target = $region13
  $region12: #{_lambda_.49} parent=0 // pred_region
    _
  $region13: #{_lambda_.49} parent=0 // pred_fallthru
    _
  %p15 = scmp.eq.s32.totalorder 0, 0
  // Predicated region
  $region14: #{_lambda_.49} parent=0 // pred_check
    %p16 = pneg %p15
  $region15: #{_lambda_.49} parent=0 // pred_check_branch
    %18 = sbr.rel (%p16) target = $region17
  $region16: #{_lambda_.49} parent=0 // pred_region
    %vm19 = vcmask 261120
    %20 = vst.msk [vmem:[#allocation2] sm:$0xff] %vm19, 0.0
  $region17: #{_lambda_.49} parent=0 // pred_fallthru
    _
  %v21 = vld [vmem:[%s0] sm:$0xff]
  %v22 = vld [vmem:[#allocation2] sm:$0xff]
  %v23 = vpack.c.bf16 %v21, %v21
  %v24 = vld [vmem:[%s1] sm:$0xf]
  %v25 = vld [vmem:[%s1 + $0x4] sm:$0xf]
  %v26 = vld [vmem:[%s1 + $0x8] sm:$0xf]
  %v27 = vld [vmem:[%s1 + $0xc] sm:$0xf]
  %v32 = vunpack.c.l.b16 %v24
  %v33 = vunpack.c.l.b16 %v25
  %v34 = vunpack.c.l.b16 %v26
  %v35 = vunpack.c.l.b16 %v27
  %v36 = vpack.c.b16 %v33, %v32
  %v37 = vpack.c.b16 %v35, %v34
  %vm40 = vcmask 261120
  %v42 = vsel %vm40, %v23, 0
  %44 = vmatprep.subr.bf16.mxu0 0
  %45 = vmatpush1.bf16.msra.mxu0 %v36
  %46 = vmatprep.subr.bf16.mxu0 0
  %47 = vmatpush1.bf16.msra.mxu0 %v37
  %48 = vmatprep.subr.bf16.mxu0 0
  %49 = vmatpush1.bf16.msra.mxu0 0
  %50 = vmatprep.subr.bf16.mxu0 0
  %51 = vmatpush1.bf16.msra.mxu0 0
  %52 = vmatprep.subr.bf16.mxu0 0
  %53 = vmatpush1.bf16.msra.mxu0 0
  %54 = vmatprep.subr.bf16.mxu0 0
  %55 = vmatpush1.bf16.msra.mxu0 0
  %56 = vmatprep.subr.bf16.mxu0 0
  %57 = vmatpush1.bf16.msra.mxu0 0
  %58 = vmatprep.subr.bf16.mxu0 0
  %59 = vmatpush1.bf16.msra.mxu0 0
  %60 = vmatprep.subr.bf16.mxu0 0
  %61 = vmatpush1.bf16.msra.mxu0 0
  %62 = vmatprep.subr.bf16.mxu0 0
  %63 = vmatpush1.bf16.msra.mxu0 0
  %64 = vmatprep.subr.bf16.mxu0 0
  %65 = vmatpush1.bf16.msra.mxu0 0
  %66 = vmatprep.subr.bf16.mxu0 0
  %67 = vmatpush1.bf16.msra.mxu0 0
  %68 = vmatprep.subr.bf16.mxu0 0
  %69 = vmatpush1.bf16.msra.mxu0 0
  %70 = vmatprep.subr.bf16.mxu0 0
  %71 = vmatpush1.bf16.msra.mxu0 0
  %72 = vmatprep.subr.bf16.mxu0 0
  %73 = vmatpush1.bf16.msra.mxu0 0
  %74 = vmatprep.subr.bf16.mxu0 0
  %75 = vmatpush1.bf16.msra.mxu0 0
  %76 = vmatprep.mubr.bf16.mxu0 0
  %77 = vmatmul.mubr.bf16.gmra.mrb[0].mxu0 %v42
  %v78 = vpop.f32.mrb[0].mxu0
  %v79 = vadd.f32 0.0, %v78
  %v80 = vpop.f32.mrb[0].mxu0
  %v81 = vpop.f32.mrb[0].mxu0
  %v82 = vpop.f32.mrb[0].mxu0
  %83 = vdwg.mxu0
  %v84 = vadd.f32 %v22, %v79
  %85 = vst.msk [vmem:[#allocation2] sm:$0xff] %vm40, %v84
  // Predicated region
  $region18: #{_lambda_.49} parent=0 // pred_check
    %p86 = pneg %p15
  $region19: #{_lambda_.49} parent=0 // pred_check_branch
    %88 = sbr.rel (%p86) target = $region21
  $region20: #{_lambda_.49} parent=0 // pred_region
    %v89 = vld [vmem:[#allocation2] sm:$0xff]
    %v90 = vld [vmem:[%s2] sm:$0x1]
    %v92 = vlaneseq
    %v93 = vshrl.u32 %v92, 7
    %v94 = vsub.s32 0, %v93
    %v95 = vrot.slane %v90, %v94
    %v97 = vadd.f32 %v89, %v95
    %98 = vst.msk [vmem:[%s3] sm:$0xff] %vm40, %v97
  $region21: #{_lambda_.49} parent=0 // pred_fallthru
    _
  // Predicated region
  $region22: #{_lambda_.49} parent=0 // pred_check
    _
  $region23: #{_lambda_.49} parent=0 // pred_check_branch
    %100 = sbr.rel (0) target = $region25
  $region24: #{_lambda_.49} parent=0 // pred_region
    _
  $region25: #{_lambda_.49} parent=0 // pred_fallthru
    _
  // Predicated region
  $region26: #{_lambda_.49} parent=0 // pred_check
    _
  $region27: #{_lambda_.49} parent=0 // pred_check_branch
    %102 = sbr.rel (0) target = $region29
  $region28: #{_lambda_.49} parent=0 // pred_region
    _
  $region29: #{_lambda_.49} parent=0 // pred_fallthru
    _

// kernel: _lambda_.25
$region0: #{_lambda_.25}
  #allocation0 [shape = 'u32[]', space=smem, size = 0x4, offset = 0x4, fixed_abs, tag = 'smem constant byte address 0x4 - core index']
  #allocation1 [shape = 'u32[144,128]{1,0:T(1,128)}', space=vmem, size = 0x12000, scoped, tag = 'internal scratch']
  #allocation2 [shape = 'f32[8,32]{1,0:T(8,128)}', space=vmem, size = 0x1000, scoped, tag = 'scratch operand']
  %s0 = inlined_call_operand.vmem [shape: f32[8,192], index: 0, kind: input, shape index: {}]
  %s1 = inlined_call_operand.vmem [shape: bf16[192,32], index: 1, kind: input, shape index: {}]
  %s2 = inlined_call_operand.vmem [shape: f32[1,32], index: 2, kind: input, shape index: {}]
  %s3 = inlined_call_operand.vmem [shape: f32[8,32], index: 3, kind: input, shape index: {}]
  %s4 = inlined_call_operand.vmem [shape: f32[8,32], index: 4, kind: output, shape index: {}]
  %s5 = sld [smem:[#allocation0]]
  $region34: #{_lambda_.25} parent=0
    _
  %s7 = ssub.s32 1, %s5
  %s8 = scalar_select 0, %s7, %s5
  // Predicated region
  $region2: #{_lambda_.25} parent=0 // pred_check
    _
  $region3: #{_lambda_.25} parent=0 // pred_check_branch
    %10 = sbr.rel (0) target = $region5
  $region4: #{_lambda_.25} parent=0 // pred_region
    _
  $region5: #{_lambda_.25} parent=0 // pred_fallthru
    _
  // Predicated region
  $region6: #{_lambda_.25} parent=0 // pred_check
    _
  $region7: #{_lambda_.25} parent=0 // pred_check_branch
    %12 = sbr.rel (0) target = $region9
  $region8: #{_lambda_.25} parent=0 // pred_region
    _
  $region9: #{_lambda_.25} parent=0 // pred_fallthru
    _
  // Predicated region
  $region10: #{_lambda_.25} parent=0 // pred_check
    _
  $region11: #{_lambda_.25} parent=0 // pred_check_branch
    %14 = sbr.rel (0) target = $region13
  $region12: #{_lambda_.25} parent=0 // pred_region
    _
  $region13: #{_lambda_.25} parent=0 // pred_fallthru
    _
  // Predicated region
  $region14: #{_lambda_.25} parent=0 // pred_check
    _
  $region15: #{_lambda_.25} parent=0 // pred_check_branch
    %16 = sbr.rel (0) target = $region17
  $region16: #{_lambda_.25} parent=0 // pred_region
    _
  $region17: #{_lambda_.25} parent=0 // pred_fallthru
    _
  %p18 = scmp.eq.s32.totalorder 0, 0
  // Predicated region
  $region18: #{_lambda_.25} parent=0 // pred_check
    %p19 = pneg %p18
  $region19: #{_lambda_.25} parent=0 // pred_check_branch
    %21 = sbr.rel (%p19) target = $region21
  $region20: #{_lambda_.25} parent=0 // pred_region
    %vm22 = vcmask 261120
    %23 = vst.msk [vmem:[#allocation2] sm:$0xff] %vm22, 0.0
  $region21: #{_lambda_.25} parent=0 // pred_fallthru
    _
  %v24 = vld [vmem:[%s0] sm:$0xff]
  %v25 = vld [vmem:[%s0 + $0x8] sm:$0xff]
  %v26 = vld [vmem:[#allocation2] sm:$0xff]
  %v27 = vpack.c.bf16 %v24, %v24
  %v28 = vpack.c.bf16 %v25, %v25
  %v29 = vld [vmem:[%s1] sm:$0xf]
  %v30 = vld [vmem:[%s1 + $0x4] sm:$0xf]
  %v31 = vld [vmem:[%s1 + $0x8] sm:$0xf]
  %v32 = vld [vmem:[%s1 + $0xc] sm:$0xf]
  %v33 = vld [vmem:[%s1 + $0x10] sm:$0xf]
  %v34 = vld [vmem:[%s1 + $0x14] sm:$0xf]
  %v35 = vld [vmem:[%s1 + $0x18] sm:$0xf]
  %v36 = vld [vmem:[%s1 + $0x1c] sm:$0xf]
  %v37 = vld [vmem:[%s1 + $0x20] sm:$0xf]
  %v38 = vld [vmem:[%s1 + $0x24] sm:$0xf]
  %v39 = vld [vmem:[%s1 + $0x28] sm:$0xf]
  %v40 = vld [vmem:[%s1 + $0x2c] sm:$0xf]
  %v41 = vld [vmem:[%s1 + $0x30] sm:$0xf]
  %v42 = vld [vmem:[%s1 + $0x34] sm:$0xf]
  %v43 = vld [vmem:[%s1 + $0x38] sm:$0xf]
  %v44 = vld [vmem:[%s1 + $0x3c] sm:$0xf]
  %v45 = vld [vmem:[%s1 + $0x40] sm:$0xf]
  %v46 = vld [vmem:[%s1 + $0x44] sm:$0xf]
  %v47 = vld [vmem:[%s1 + $0x48] sm:$0xf]
  %v48 = vld [vmem:[%s1 + $0x4c] sm:$0xf]
  %v49 = vld [vmem:[%s1 + $0x50] sm:$0xf]
  %v50 = vld [vmem:[%s1 + $0x54] sm:$0xf]
  %v51 = vld [vmem:[%s1 + $0x58] sm:$0xf]
  %v52 = vld [vmem:[%s1 + $0x5c] sm:$0xf]
  %v77 = vunpack.c.l.b16 %v29
  %v78 = vunpack.c.l.b16 %v30
  %v79 = vunpack.c.l.b16 %v31
  %v80 = vunpack.c.l.b16 %v32
  %v81 = vunpack.c.l.b16 %v33
  %v82 = vunpack.c.l.b16 %v34
  %v83 = vunpack.c.l.b16 %v35
  %v84 = vunpack.c.l.b16 %v36
  %v85 = vunpack.c.l.b16 %v37
  %v86 = vunpack.c.l.b16 %v38
  %v87 = vunpack.c.l.b16 %v39
  %v88 = vunpack.c.l.b16 %v40
  %v89 = vunpack.c.l.b16 %v41
  %v90 = vunpack.c.l.b16 %v42
  %v91 = vunpack.c.l.b16 %v43
  %v92 = vunpack.c.l.b16 %v44
  %v93 = vunpack.c.l.b16 %v45
  %v94 = vunpack.c.l.b16 %v46
  %v95 = vunpack.c.l.b16 %v47
  %v96 = vunpack.c.l.b16 %v48
  %v97 = vunpack.c.l.b16 %v49
  %v98 = vunpack.c.l.b16 %v50
  %v99 = vunpack.c.l.b16 %v51
  %v100 = vunpack.c.l.b16 %v52
  %v101 = vpack.c.b16 %v78, %v77
  %v102 = vpack.c.b16 %v80, %v79
  %v103 = vpack.c.b16 %v82, %v81
  %v104 = vpack.c.b16 %v84, %v83
  %v105 = vpack.c.b16 %v86, %v85
  %v106 = vpack.c.b16 %v88, %v87
  %v107 = vpack.c.b16 %v90, %v89
  %v108 = vpack.c.b16 %v92, %v91
  %v109 = vpack.c.b16 %v94, %v93
  %v110 = vpack.c.b16 %v96, %v95
  %v111 = vpack.c.b16 %v98, %v97
  %v112 = vpack.c.b16 %v100, %v99
  %vm125 = vcmask 523264
  %v127 = vsel %vm125, %v28, 0
  %129 = vmatprep.subr.bf16.mxu0 0
  %130 = vmatpush1.bf16.msra.mxu0 %v101
  %131 = vmatprep.subr.bf16.mxu0 0
  %132 = vmatpush1.bf16.msra.mxu0 %v102
  %133 = vmatprep.subr.bf16.mxu0 0
  %134 = vmatpush1.bf16.msra.mxu0 %v103
  %135 = vmatprep.subr.bf16.mxu0 0
  %136 = vmatpush1.bf16.msra.mxu0 %v104
  %137 = vmatprep.subr.bf16.mxu0 0
  %138 = vmatpush1.bf16.msra.mxu0 %v105
  %139 = vmatprep.subr.bf16.mxu0 0
  %140 = vmatpush1.bf16.msra.mxu0 %v106
  %141 = vmatprep.subr.bf16.mxu0 0
  %142 = vmatpush1.bf16.msra.mxu0 %v107
  %143 = vmatprep.subr.bf16.mxu0 0
  %144 = vmatpush1.bf16.msra.mxu0 %v108
  %145 = vmatprep.subr.bf16.mxu0 0
  %146 = vmatpush1.bf16.msra.mxu0 %v109
  %147 = vmatprep.subr.bf16.mxu0 0
  %148 = vmatpush1.bf16.msra.mxu0 %v110
  %149 = vmatprep.subr.bf16.mxu0 0
  %150 = vmatpush1.bf16.msra.mxu0 %v111
  %151 = vmatprep.subr.bf16.mxu0 0
  %152 = vmatpush1.bf16.msra.mxu0 %v112
  %153 = vmatprep.subr.bf16.mxu0 0
  %154 = vmatpush1.bf16.msra.mxu0 0
  %155 = vmatprep.subr.bf16.mxu0 0
  %156 = vmatpush1.bf16.msra.mxu0 0
  %157 = vmatprep.subr.bf16.mxu0 0
  %158 = vmatpush1.bf16.msra.mxu0 0
  %159 = vmatprep.subr.bf16.mxu0 0
  %160 = vmatpush1.bf16.msra.mxu0 0
  %161 = vmatprep.mubr.bf16.mxu0 %v127
  %162 = vmatmul.mubr.bf16.gmra.mrb[0].mxu0 %v27
  %v163 = vpop.f32.mrb[0].mxu0
  %v164 = vadd.f32 0.0, %v163
  %v165 = vpop.f32.mrb[0].mxu0
  %v166 = vpop.f32.mrb[0].mxu0
  %v167 = vpop.f32.mrb[0].mxu0
  %168 = vdwg.mxu0
  %v169 = vadd.f32 %v26, %v164
  %vm170 = vcmask 261120
  %171 = vst.msk [vmem:[#allocation2] sm:$0xff] %vm170, %v169
  // Predicated region
  $region22: #{_lambda_.25} parent=0 // pred_check
    %p172 = pneg %p18
  $region23: #{_lambda_.25} parent=0 // pred_check_branch
    %174 = sbr.rel (%p172) target = $region25
  $region24: #{_lambda_.25} parent=0 // pred_region
    %v175 = vld [vmem:[#allocation2] sm:$0xff]
    %v176 = vld [vmem:[%s2] sm:$0x1]
    %v178 = vlaneseq
    %v179 = vshrl.u32 %v178, 7
    %v180 = vsub.s32 0, %v179
    %v181 = vrot.slane %v176, %v180
    %v183 = vadd.f32 %v175, %v181
    %v184 = vld [vmem:[%s3] sm:$0xff]
    %v185 = vadd.f32 %v183, %v184
    %186 = vst.msk [vmem:[%s4] sm:$0xff] %vm170, %v185
  $region25: #{_lambda_.25} parent=0 // pred_fallthru
    _
  // Predicated region
  $region26: #{_lambda_.25} parent=0 // pred_check
    _
  $region27: #{_lambda_.25} parent=0 // pred_check_branch
    %188 = sbr.rel (0) target = $region29
  $region28: #{_lambda_.25} parent=0 // pred_region
    _
  $region29: #{_lambda_.25} parent=0 // pred_fallthru
    _
  // Predicated region
  $region30: #{_lambda_.25} parent=0 // pred_check
    _
  $region31: #{_lambda_.25} parent=0 // pred_check_branch
    %190 = sbr.rel (0) target = $region33
  $region32: #{_lambda_.25} parent=0 // pred_region
    _
  $region33: #{_lambda_.25} parent=0 // pred_fallthru
    _

// kernel: _lambda_.26
$region0: #{_lambda_.26}
  #allocation0 [shape = 'u32[]', space=smem, size = 0x4, offset = 0x4, fixed_abs, tag = 'smem constant byte address 0x4 - core index']
  #allocation1 [shape = 'u32[144,128]{1,0:T(1,128)}', space=vmem, size = 0x12000, scoped, tag = 'internal scratch']
  #allocation2 [shape = 'f32[16,96]{1,0:T(8,128)}', space=vmem, size = 0x2000, scoped, tag = 'scratch operand']
  %s0 = inlined_call_operand.vmem [shape: f32[16,32], index: 0, kind: input, shape index: {}]
  %s1 = inlined_call_operand.vmem [shape: bf16[32,96], index: 1, kind: input, shape index: {}]
  %s2 = inlined_call_operand.vmem [shape: f32[1,96], index: 2, kind: input, shape index: {}]
  %s3 = inlined_call_operand.vmem [shape: f32[1,32], index: 3, kind: input, shape index: {}]
  %s4 = inlined_call_operand.vmem [shape: f32[1,32], index: 4, kind: input, shape index: {}]
  %s5 = inlined_call_operand.vmem [shape: f32[16,96], index: 5, kind: output, shape index: {}]
  %s6 = sld [smem:[#allocation0]]
  $region38: #{_lambda_.26} parent=0
    _
  %s8 = ssub.s32 1, %s6
  %s9 = scalar_select 0, %s8, %s6
  // Predicated region
  $region2: #{_lambda_.26} parent=0 // pred_check
    _
  $region3: #{_lambda_.26} parent=0 // pred_check_branch
    %11 = sbr.rel (0) target = $region5
  $region4: #{_lambda_.26} parent=0 // pred_region
    _
  $region5: #{_lambda_.26} parent=0 // pred_fallthru
    _
  // Predicated region
  $region6: #{_lambda_.26} parent=0 // pred_check
    _
  $region7: #{_lambda_.26} parent=0 // pred_check_branch
    %13 = sbr.rel (0) target = $region9
  $region8: #{_lambda_.26} parent=0 // pred_region
    _
  $region9: #{_lambda_.26} parent=0 // pred_fallthru
    _
  // Predicated region
  $region10: #{_lambda_.26} parent=0 // pred_check
    _
  $region11: #{_lambda_.26} parent=0 // pred_check_branch
    %15 = sbr.rel (0) target = $region13
  $region12: #{_lambda_.26} parent=0 // pred_region
    _
  $region13: #{_lambda_.26} parent=0 // pred_fallthru
    _
  // Predicated region
  $region14: #{_lambda_.26} parent=0 // pred_check
    _
  $region15: #{_lambda_.26} parent=0 // pred_check_branch
    %17 = sbr.rel (0) target = $region17
  $region16: #{_lambda_.26} parent=0 // pred_region
    _
  $region17: #{_lambda_.26} parent=0 // pred_fallthru
    _
  // Predicated region
  $region18: #{_lambda_.26} parent=0 // pred_check
    _
  $region19: #{_lambda_.26} parent=0 // pred_check_branch
    %19 = sbr.rel (0) target = $region21
  $region20: #{_lambda_.26} parent=0 // pred_region
    _
  $region21: #{_lambda_.26} parent=0 // pred_fallthru
    _
  %p21 = scmp.eq.s32.totalorder 0, 0
  // Predicated region
  $region22: #{_lambda_.26} parent=0 // pred_check
    %p22 = pneg %p21
  $region23: #{_lambda_.26} parent=0 // pred_check_branch
    %24 = sbr.rel (%p22) target = $region25
  $region24: #{_lambda_.26} parent=0 // pred_region
    %vm25 = vcmask 785408
    %26 = vst.msk [vmem:[#allocation2] sm:$0xff] %vm25, 0.0
    %27 = vst.msk [vmem:[#allocation2 + $0x8] sm:$0xff] %vm25, 0.0
  $region25: #{_lambda_.26} parent=0 // pred_fallthru
    _
  %v28 = vld [vmem:[%s0] sm:$0xff]
  %v29 = vld [vmem:[%s0 + $0x8] sm:$0xff]
  %vm30 = vcmask 261120
  %v31 = vsel %vm30, %v28, 0.0
  %32 = vadd.xlane.f32.xlu0 %v31
  %v33 = vpop.xlane.xlu0 %32
  %v34 = vsel %vm30, %v29, 0.0
  %35 = vadd.xlane.f32.xlu0 %v34
  %v36 = vpop.xlane.xlu0 %35
  %v37 = vrcp.pop 32.0
  %v38 = vmul.f32 %v33, %v37
  %v39 = vmul.f32 %v36, %v37
  %v40 = vsub.f32 %v28, %v38
  %v41 = vsub.f32 %v29, %v39
  %v42 = vmul.f32 %v40, %v40
  %v43 = vmul.f32 %v41, %v41
  %v44 = vsel %vm30, %v42, 0.0
  %45 = vadd.xlane.f32.xlu0 %v44
  %v46 = vpop.xlane.xlu0 %45
  %v47 = vsel %vm30, %v43, 0.0
  %48 = vadd.xlane.f32.xlu0 %v47
  %v49 = vpop.xlane.xlu0 %48
  %v50 = vmul.f32 %v46, %v37
  %v51 = vmul.f32 %v49, %v37
  %v52 = vadd.f32 %v50, 1e-06
  %v53 = vadd.f32 %v51, 1e-06
  %v54 = vrsqrt.pop %v52
  %v55 = vrsqrt.pop %v53
  %v56 = vmul.f32 %v40, %v54
  %v57 = vmul.f32 %v41, %v55
  %v58 = vld [vmem:[%s3] sm:$0x1]
  %v60 = vlaneseq
  %v61 = vshrl.u32 %v60, 7
  %v62 = vsub.s32 0, %v61
  %v63 = vrot.slane %v58, %v62
  %v65 = vmul.f32 %v56, %v63
  %v66 = vmul.f32 %v57, %v63
  %v67 = vld [vmem:[%s4] sm:$0x1]
  %v69 = vlaneseq
  %v70 = vshrl.u32 %v69, 7
  %v71 = vsub.s32 0, %v70
  %v72 = vrot.slane %v67, %v71
  %v74 = vadd.f32 %v65, %v72
  %v75 = vadd.f32 %v66, %v72
  %v76 = vld [vmem:[#allocation2] sm:$0xff]
  %v77 = vld [vmem:[#allocation2 + $0x8] sm:$0xff]
  %v78 = vpack.c.bf16 %v75, %v74
  %v79 = vld [vmem:[%s1] sm:$0xf]
  %v80 = vld [vmem:[%s1 + $0x4] sm:$0xf]
  %v81 = vld [vmem:[%s1 + $0x8] sm:$0xf]
  %v82 = vld [vmem:[%s1 + $0xc] sm:$0xf]
  %v87 = vunpack.c.l.b16 %v79
  %v88 = vunpack.c.l.b16 %v80
  %v89 = vunpack.c.l.b16 %v81
  %v90 = vunpack.c.l.b16 %v82
  %v91 = vpack.c.b16 %v88, %v87
  %v92 = vpack.c.b16 %v90, %v89
  %v96 = vsel %vm30, %v78, 0
  %98 = vmatprep.subr.bf16.mxu0 0
  %99 = vmatpush1.bf16.msra.mxu0 %v91
  %100 = vmatprep.subr.bf16.mxu0 0
  %101 = vmatpush1.bf16.msra.mxu0 %v92
  %102 = vmatprep.subr.bf16.mxu0 0
  %103 = vmatpush1.bf16.msra.mxu0 0
  %104 = vmatprep.subr.bf16.mxu0 0
  %105 = vmatpush1.bf16.msra.mxu0 0
  %106 = vmatprep.subr.bf16.mxu0 0
  %107 = vmatpush1.bf16.msra.mxu0 0
  %108 = vmatprep.subr.bf16.mxu0 0
  %109 = vmatpush1.bf16.msra.mxu0 0
  %110 = vmatprep.subr.bf16.mxu0 0
  %111 = vmatpush1.bf16.msra.mxu0 0
  %112 = vmatprep.subr.bf16.mxu0 0
  %113 = vmatpush1.bf16.msra.mxu0 0
  %114 = vmatprep.subr.bf16.mxu0 0
  %115 = vmatpush1.bf16.msra.mxu0 0
  %116 = vmatprep.subr.bf16.mxu0 0
  %117 = vmatpush1.bf16.msra.mxu0 0
  %118 = vmatprep.subr.bf16.mxu0 0
  %119 = vmatpush1.bf16.msra.mxu0 0
  %120 = vmatprep.subr.bf16.mxu0 0
  %121 = vmatpush1.bf16.msra.mxu0 0
  %122 = vmatprep.subr.bf16.mxu0 0
  %123 = vmatpush1.bf16.msra.mxu0 0
  %124 = vmatprep.subr.bf16.mxu0 0
  %125 = vmatpush1.bf16.msra.mxu0 0
  %126 = vmatprep.subr.bf16.mxu0 0
  %127 = vmatpush1.bf16.msra.mxu0 0
  %128 = vmatprep.subr.bf16.mxu0 0
  %129 = vmatpush1.bf16.msra.mxu0 0
  %130 = vmatprep.mubr.bf16.mxu0 0
  %131 = vmatmul.mubr.bf16.gmra.mrb[0].mxu0 %v96
  %v132 = vpop.f32.mrb[0].mxu0
  %v133 = vadd.f32 0.0, %v132
  %v134 = vpop.f32.mrb[0].mxu0
  %v135 = vpop.f32.mrb[0].mxu0
  %v136 = vadd.f32 0.0, %v135
  %v137 = vpop.f32.mrb[0].mxu0
  %138 = vdwg.mxu0
  %v139 = vadd.f32 %v76, %v133
  %v140 = vadd.f32 %v77, %v136
  %vm141 = vcmask 785408
  %142 = vst.msk [vmem:[#allocation2] sm:$0xff] %vm141, %v139
  %143 = vst.msk [vmem:[#allocation2 + $0x8] sm:$0xff] %vm141, %v140
  // Predicated region
  $region26: #{_lambda_.26} parent=0 // pred_check
    %p144 = pneg %p21
  $region27: #{_lambda_.26} parent=0 // pred_check_branch
    %146 = sbr.rel (%p144) target = $region29
  $region28: #{_lambda_.26} parent=0 // pred_region
    %v147 = vld [vmem:[#allocation2] sm:$0xff]
    %v148 = vld [vmem:[#allocation2 + $0x8] sm:$0xff]
    %v149 = vld [vmem:[%s2] sm:$0x1]
    %v151 = vlaneseq
    %v152 = vshrl.u32 %v151, 7
    %v153 = vsub.s32 0, %v152
    %v154 = vrot.slane %v149, %v153
    %v156 = vadd.f32 %v147, %v154
    %v157 = vadd.f32 %v148, %v154
    %158 = vst.msk [vmem:[%s5] sm:$0xff] %vm141, %v156
    %159 = vst.msk [vmem:[%s5 + $0x8] sm:$0xff] %vm141, %v157
  $region29: #{_lambda_.26} parent=0 // pred_fallthru
    _
  // Predicated region
  $region30: #{_lambda_.26} parent=0 // pred_check
    _
  $region31: #{_lambda_.26} parent=0 // pred_check_branch
    %161 = sbr.rel (0) target = $region33
  $region32: #{_lambda_.26} parent=0 // pred_region
    _
  $region33: #{_lambda_.26} parent=0 // pred_fallthru
    _
  // Predicated region
  $region34: #{_lambda_.26} parent=0 // pred_check
    _
  $region35: #{_lambda_.26} parent=0 // pred_check_branch
    %163 = sbr.rel (0) target = $region37
  $region36: #{_lambda_.26} parent=0 // pred_region
    _
  $region37: #{_lambda_.26} parent=0 // pred_fallthru
    _

// kernel: _lambda_.28
$region0: #{_lambda_.28}
  #allocation0 [shape = 'u32[]', space=smem, size = 0x4, offset = 0x4, fixed_abs, tag = 'smem constant byte address 0x4 - core index']
  #allocation1 [shape = 'u32[144,128]{1,0:T(1,128)}', space=vmem, size = 0x12000, scoped, tag = 'internal scratch']
  #allocation2 [shape = 'f32[16,32]{1,0:T(8,128)}', space=vmem, size = 0x2000, scoped, tag = 'scratch operand']
  %s0 = inlined_call_operand.vmem [shape: f32[16,32], index: 0, kind: input, shape index: {}]
  %s1 = inlined_call_operand.vmem [shape: bf16[32,32], index: 1, kind: input, shape index: {}]
  %s2 = inlined_call_operand.vmem [shape: f32[1,32], index: 2, kind: input, shape index: {}]
  %s3 = inlined_call_operand.vmem [shape: f32[1,32], index: 3, kind: input, shape index: {}]
  %s4 = inlined_call_operand.vmem [shape: f32[16,32], index: 4, kind: input, shape index: {}]
  %s5 = inlined_call_operand.vmem [shape: f32[16,32], index: 5, kind: output, shape index: {}]
  %s6 = sld [smem:[#allocation0]]
  $region38: #{_lambda_.28} parent=0
    _
  %s8 = ssub.s32 1, %s6
  %s9 = scalar_select 0, %s8, %s6
  // Predicated region
  $region2: #{_lambda_.28} parent=0 // pred_check
    _
  $region3: #{_lambda_.28} parent=0 // pred_check_branch
    %11 = sbr.rel (0) target = $region5
  $region4: #{_lambda_.28} parent=0 // pred_region
    _
  $region5: #{_lambda_.28} parent=0 // pred_fallthru
    _
  // Predicated region
  $region6: #{_lambda_.28} parent=0 // pred_check
    _
  $region7: #{_lambda_.28} parent=0 // pred_check_branch
    %13 = sbr.rel (0) target = $region9
  $region8: #{_lambda_.28} parent=0 // pred_region
    _
  $region9: #{_lambda_.28} parent=0 // pred_fallthru
    _
  // Predicated region
  $region10: #{_lambda_.28} parent=0 // pred_check
    _
  $region11: #{_lambda_.28} parent=0 // pred_check_branch
    %15 = sbr.rel (0) target = $region13
  $region12: #{_lambda_.28} parent=0 // pred_region
    _
  $region13: #{_lambda_.28} parent=0 // pred_fallthru
    _
  // Predicated region
  $region14: #{_lambda_.28} parent=0 // pred_check
    _
  $region15: #{_lambda_.28} parent=0 // pred_check_branch
    %17 = sbr.rel (0) target = $region17
  $region16: #{_lambda_.28} parent=0 // pred_region
    _
  $region17: #{_lambda_.28} parent=0 // pred_fallthru
    _
  // Predicated region
  $region18: #{_lambda_.28} parent=0 // pred_check
    _
  $region19: #{_lambda_.28} parent=0 // pred_check_branch
    %19 = sbr.rel (0) target = $region21
  $region20: #{_lambda_.28} parent=0 // pred_region
    _
  $region21: #{_lambda_.28} parent=0 // pred_fallthru
    _
  %p21 = scmp.eq.s32.totalorder 0, 0
  // Predicated region
  $region22: #{_lambda_.28} parent=0 // pred_check
    %p22 = pneg %p21
  $region23: #{_lambda_.28} parent=0 // pred_check_branch
    %24 = sbr.rel (%p22) target = $region25
  $region24: #{_lambda_.28} parent=0 // pred_region
    %vm25 = vcmask 261120
    %26 = vst.msk [vmem:[#allocation2] sm:$0xff] %vm25, 0.0
    %27 = vst.msk [vmem:[#allocation2 + $0x8] sm:$0xff] %vm25, 0.0
  $region25: #{_lambda_.28} parent=0 // pred_fallthru
    _
  %v28 = vld [vmem:[%s0] sm:$0xff]
  %v29 = vld [vmem:[%s0 + $0x8] sm:$0xff]
  %v30 = vld [vmem:[#allocation2] sm:$0xff]
  %v31 = vld [vmem:[#allocation2 + $0x8] sm:$0xff]
  %v32 = vpack.c.bf16 %v29, %v28
  %v33 = vld [vmem:[%s1] sm:$0xf]
  %v34 = vld [vmem:[%s1 + $0x4] sm:$0xf]
  %v35 = vld [vmem:[%s1 + $0x8] sm:$0xf]
  %v36 = vld [vmem:[%s1 + $0xc] sm:$0xf]
  %v41 = vunpack.c.l.b16 %v33
  %v42 = vunpack.c.l.b16 %v34
  %v43 = vunpack.c.l.b16 %v35
  %v44 = vunpack.c.l.b16 %v36
  %v45 = vpack.c.b16 %v42, %v41
  %v46 = vpack.c.b16 %v44, %v43
  %vm49 = vcmask 261120
  %v51 = vsel %vm49, %v32, 0
  %53 = vmatprep.subr.bf16.mxu0 0
  %54 = vmatpush1.bf16.msra.mxu0 %v45
  %55 = vmatprep.subr.bf16.mxu0 0
  %56 = vmatpush1.bf16.msra.mxu0 %v46
  %57 = vmatprep.subr.bf16.mxu0 0
  %58 = vmatpush1.bf16.msra.mxu0 0
  %59 = vmatprep.subr.bf16.mxu0 0
  %60 = vmatpush1.bf16.msra.mxu0 0
  %61 = vmatprep.subr.bf16.mxu0 0
  %62 = vmatpush1.bf16.msra.mxu0 0
  %63 = vmatprep.subr.bf16.mxu0 0
  %64 = vmatpush1.bf16.msra.mxu0 0
  %65 = vmatprep.subr.bf16.mxu0 0
  %66 = vmatpush1.bf16.msra.mxu0 0
  %67 = vmatprep.subr.bf16.mxu0 0
  %68 = vmatpush1.bf16.msra.mxu0 0
  %69 = vmatprep.subr.bf16.mxu0 0
  %70 = vmatpush1.bf16.msra.mxu0 0
  %71 = vmatprep.subr.bf16.mxu0 0
  %72 = vmatpush1.bf16.msra.mxu0 0
  %73 = vmatprep.subr.bf16.mxu0 0
  %74 = vmatpush1.bf16.msra.mxu0 0
  %75 = vmatprep.subr.bf16.mxu0 0
  %76 = vmatpush1.bf16.msra.mxu0 0
  %77 = vmatprep.subr.bf16.mxu0 0
  %78 = vmatpush1.bf16.msra.mxu0 0
  %79 = vmatprep.subr.bf16.mxu0 0
  %80 = vmatpush1.bf16.msra.mxu0 0
  %81 = vmatprep.subr.bf16.mxu0 0
  %82 = vmatpush1.bf16.msra.mxu0 0
  %83 = vmatprep.subr.bf16.mxu0 0
  %84 = vmatpush1.bf16.msra.mxu0 0
  %85 = vmatprep.mubr.bf16.mxu0 0
  %86 = vmatmul.mubr.bf16.gmra.mrb[0].mxu0 %v51
  %v87 = vpop.f32.mrb[0].mxu0
  %v88 = vadd.f32 0.0, %v87
  %v89 = vpop.f32.mrb[0].mxu0
  %v90 = vpop.f32.mrb[0].mxu0
  %v91 = vadd.f32 0.0, %v90
  %v92 = vpop.f32.mrb[0].mxu0
  %93 = vdwg.mxu0
  %v94 = vadd.f32 %v30, %v88
  %v95 = vadd.f32 %v31, %v91
  %96 = vst.msk [vmem:[#allocation2] sm:$0xff] %vm49, %v94
  %97 = vst.msk [vmem:[#allocation2 + $0x8] sm:$0xff] %vm49, %v95
  // Predicated region
  $region26: #{_lambda_.28} parent=0 // pred_check
    %p98 = pneg %p21
  $region27: #{_lambda_.28} parent=0 // pred_check_branch
    %100 = sbr.rel (%p98) target = $region29
  $region28: #{_lambda_.28} parent=0 // pred_region
    %v101 = vld [vmem:[#allocation2] sm:$0xff]
    %v102 = vld [vmem:[#allocation2 + $0x8] sm:$0xff]
    %v103 = vld [vmem:[%s2] sm:$0x1]
    %v105 = vlaneseq
    %v106 = vshrl.u32 %v105, 7
    %v107 = vsub.s32 0, %v106
    %v108 = vrot.slane %v103, %v107
    %v110 = vadd.f32 %v101, %v108
    %v111 = vadd.f32 %v102, %v108
    %v112 = vld [vmem:[%s3] sm:$0x1]
    %v114 = vlaneseq
    %v115 = vshrl.u32 %v114, 7
    %v116 = vsub.s32 0, %v115
    %v117 = vrot.slane %v112, %v116
    %v119 = vmul.f32 %v110, %v117
    %v120 = vmul.f32 %v111, %v117
    %v121 = vld [vmem:[%s4] sm:$0xff]
    %v122 = vld [vmem:[%s4 + $0x8] sm:$0xff]
    %v123 = vadd.f32 %v119, %v121
    %v124 = vadd.f32 %v120, %v122
    %125 = vst.msk [vmem:[%s5] sm:$0xff] %vm49, %v123
    %126 = vst.msk [vmem:[%s5 + $0x8] sm:$0xff] %vm49, %v124
  $region29: #{_lambda_.28} parent=0 // pred_fallthru
    _
  // Predicated region
  $region30: #{_lambda_.28} parent=0 // pred_check
    _
  $region31: #{_lambda_.28} parent=0 // pred_check_branch
    %128 = sbr.rel (0) target = $region33
  $region32: #{_lambda_.28} parent=0 // pred_region
    _
  $region33: #{_lambda_.28} parent=0 // pred_fallthru
    _
  // Predicated region
  $region34: #{_lambda_.28} parent=0 // pred_check
    _
  $region35: #{_lambda_.28} parent=0 // pred_check_branch
    %130 = sbr.rel (0) target = $region37
  $region36: #{_lambda_.28} parent=0 // pred_region
    _
  $region37: #{_lambda_.28} parent=0 // pred_fallthru
    _

// kernel: _lambda_.27
$region0: #{_lambda_.27}
  #allocation0 [shape = 'u32[]', space=smem, size = 0x4, offset = 0x4, fixed_abs, tag = 'smem constant byte address 0x4 - core index']
  #allocation1 [shape = 'u32[144,128]{1,0:T(1,128)}', space=vmem, size = 0x12000, scoped, tag = 'internal scratch']
  %s0 = inlined_call_operand.vmem [shape: f32[2,12,5,8], index: 0, kind: input, shape index: {}, may-alias: {0,1,2}]
  %s1 = inlined_call_operand.vmem [shape: f32[2,12,5,8], index: 1, kind: input, shape index: {}, may-alias: {0,1,2}]
  %s2 = inlined_call_operand.vmem [shape: f32[2,12,5,8], index: 2, kind: input, shape index: {}, may-alias: {0,1,2}]
  %s3 = inlined_call_operand.vmem [shape: f32[2,5,32], index: 3, kind: output, shape index: {}]
  %s4 = sld [smem:[#allocation0]]
  $region45: #{_lambda_.27} parent=0
    _
  %s6 = ssub.s32 1, %s4
  %s7 = scalar_select 0, %s6, %s4
  loop: start=0, step=1, limit=4
  $region2: #{_lambda_.27} parent=0 // loop_pre_header
    _
  $region3: #{_lambda_.27} parent=0 // loop_header
    %s9 = sphi 0, %s13
    %p10 = scmp.ge.s32.totalorder %s9, 4
    %s16 = sphi 0, %s28
    %s17 = sphi 0, %s24
    %s18 = sphi 0, %s16
    %s19 = sphi 0, %s17
    %s20 = sphi 0, %s18
    %s21 = sphi 0, %s19
    %s33 = sphi 0, %s35
    %s36 = sphi 0, %s33
    %s37 = sphi 0, %s36
    %s53 = sphi 0, %s37
    %s63 = sphi 0, %s65
    %s66 = sphi 0, %s63
    %s67 = sphi 0, %s66
    %s83 = sphi 0, %s67
    %s93 = sphi 0, %s95
    %s96 = sphi 0, %s93
    %s97 = sphi 0, %s96
    %s113 = sphi 0, %s97
    %s121 = sphi 0, %s123
    %s124 = sphi 0, %s121
    %s125 = sphi 0, %s124
    %s141 = sphi 0, %s125
  $region4: #{_lambda_.27} parent=0 // loop_header_branch
    %12 = sbr.rel (%p10) target = $region8
  $region5: #{_lambda_.27} parent=0 // loop_body
    %s14 = ssub.s32 %s9, 1
    %s15 = ssub.s32 %s9, 2
    %s22 = sadd.s32 1, %s17
    %p23 = scmp.ge.s32.totalorder %s22, 1
    %s24 = scalar_select %p23, 0, %s22
    %s25 = sadd.s32 1, %s16
    %s26 = scalar_select %p23, %s25, %s16
    %p27 = scmp.ge.s32.totalorder %s26, 2
    %s28 = scalar_select %p27, 0, %s26
    %s29 = ssub.s32 %s16, %s28
    %s30 = ssub.s32 %s17, %s24
    %s31 = sor.u32 %s29, %s30
    %p32 = scmp.eq.s32.totalorder %s31, 0
    %s34 = sadd.s32 %s33, 1
    %s35 = scalar_select %p32, %s33, %s34
    %p38 = pneg %p32
    %p39 = scmp.eq.s32.totalorder %s9, 1
    %p40 = por %p38, %p39
    %p41 = scmp.ne.s32.totalorder %s33, %s36
    %p42 = scmp.eq.s32.totalorder %s9, 0
    %p43 = por %p41, %p42
    %p44 = scmp.ne.s32.totalorder %s33, %s36
    %p45 = scmp.eq.s32.totalorder %s14, 1
    %p46 = por %p44, %p45
    %p47 = scmp.ne.s32.totalorder %s36, %s37
    %p48 = scmp.eq.s32.totalorder %s14, 0
    %p49 = por %p47, %p48
    %p50 = scmp.ne.s32.totalorder %s36, %s37
    %p51 = scmp.eq.s32.totalorder %s15, 1
    %p52 = por %p50, %p51
    %p54 = scmp.ne.s32.totalorder %s37, %s53
    %p55 = scmp.eq.s32.totalorder %s15, 0
    %p56 = por %p54, %p55
    %s57 = sadd.s32 %s17, 1
    %s58 = sadd.s32 %s24, 1
    %s59 = ssub.s32 %s16, %s28
    %s60 = ssub.s32 %s57, %s58
    %s61 = sor.u32 %s59, %s60
    %p62 = scmp.eq.s32.totalorder %s61, 0
    %s64 = sadd.s32 %s63, 1
    %s65 = scalar_select %p62, %s63, %s64
    %p68 = pneg %p62
    %p69 = scmp.eq.s32.totalorder %s9, 1
    %p70 = por %p68, %p69
    %p71 = scmp.ne.s32.totalorder %s63, %s66
    %p72 = scmp.eq.s32.totalorder %s9, 0
    %p73 = por %p71, %p72
    %p74 = scmp.ne.s32.totalorder %s63, %s66
    %p75 = scmp.eq.s32.totalorder %s14, 1
    %p76 = por %p74, %p75
    %p77 = scmp.ne.s32.totalorder %s66, %s67
    %p78 = scmp.eq.s32.totalorder %s14, 0
    %p79 = por %p77, %p78
    %p80 = scmp.ne.s32.totalorder %s66, %s67
    %p81 = scmp.eq.s32.totalorder %s15, 1
    %p82 = por %p80, %p81
    %p84 = scmp.ne.s32.totalorder %s67, %s83
    %p85 = scmp.eq.s32.totalorder %s15, 0
    %p86 = por %p84, %p85
    %s87 = sadd.s32 %s17, 2
    %s88 = sadd.s32 %s24, 2
    %s89 = ssub.s32 %s16, %s28
    %s90 = ssub.s32 %s87, %s88
    %s91 = sor.u32 %s89, %s90
    %p92 = scmp.eq.s32.totalorder %s91, 0
    %s94 = sadd.s32 %s93, 1
    %s95 = scalar_select %p92, %s93, %s94
    %p98 = pneg %p92
    %p99 = scmp.eq.s32.totalorder %s9, 1
    %p100 = por %p98, %p99
    %p101 = scmp.ne.s32.totalorder %s93, %s96
    %p102 = scmp.eq.s32.totalorder %s9, 0
    %p103 = por %p101, %p102
    %p104 = scmp.ne.s32.totalorder %s93, %s96
    %p105 = scmp.eq.s32.totalorder %s14, 1
    %p106 = por %p104, %p105
    %p107 = scmp.ne.s32.totalorder %s96, %s97
    %p108 = scmp.eq.s32.totalorder %s14, 0
    %p109 = por %p107, %p108
    %p110 = scmp.ne.s32.totalorder %s96, %s97
    %p111 = scmp.eq.s32.totalorder %s15, 1
    %p112 = por %p110, %p111
    %p114 = scmp.ne.s32.totalorder %s97, %s113
    %p115 = scmp.eq.s32.totalorder %s15, 0
    %p116 = por %p114, %p115
    %s117 = ssub.s32 %s16, %s28
    %s118 = ssub.s32 %s17, %s24
    %s119 = sor.u32 %s117, %s118
    %p120 = scmp.eq.s32.totalorder %s119, 0
    %s122 = sadd.s32 %s121, 1
    %s123 = scalar_select %p120, %s121, %s122
    %p126 = pneg %p120
    %p127 = scmp.eq.s32.totalorder %s9, 1
    %p128 = por %p126, %p127
    %p129 = scmp.ne.s32.totalorder %s121, %s124
    %p130 = scmp.eq.s32.totalorder %s9, 0
    %p131 = por %p129, %p130
    %p132 = scmp.ne.s32.totalorder %s121, %s124
    %p133 = scmp.eq.s32.totalorder %s14, 1
    %p134 = por %p132, %p133
    %p135 = scmp.ne.s32.totalorder %s124, %s125
    %p136 = scmp.eq.s32.totalorder %s14, 0
    %p137 = por %p135, %p136
    %p138 = scmp.ne.s32.totalorder %s124, %s125
    %p139 = scmp.eq.s32.totalorder %s15, 1
    %p140 = por %p138, %p139
    %p142 = scmp.ne.s32.totalorder %s125, %s141
    %p143 = scmp.eq.s32.totalorder %s15, 0
    %p144 = por %p142, %p143
    %p145 = scmp.le.s32.totalorder 1, %s9
    %p146 = scmp.lt.s32.totalorder %s9, 3
    %p147 = pnand %p145, %p146
    %p148 = pneg %p147
    // Predicated region
    $region9: #{_lambda_.27} parent=5 // pred_check
      _
    $region10: #{_lambda_.27} parent=5 // pred_check_branch
      %150 = sbr.rel (%p147) target = $region12
    $region11: #{_lambda_.27} parent=5 // pred_region
      %s151 = ssub.s32 %s9, 1
    $region12: #{_lambda_.27} parent=5 // pred_fallthru
      _
    %p152 = scmp.lt.s32.totalorder %s9, 2
    // Predicated region
    $region13: #{_lambda_.27} parent=5 // pred_check
      %p153 = pneg %p152
    $region14: #{_lambda_.27} parent=5 // pred_check_branch
      %155 = sbr.rel (%p153) target = $region16
    $region15: #{_lambda_.27} parent=5 // pred_region
      // Predicated region
      $region17: #{_lambda_.27} parent=15 // pred_check
        %p156 = pneg %p43
      $region18: #{_lambda_.27} parent=15 // pred_check_branch
        %158 = sbr.rel (%p156) target = $region20
      $region19: #{_lambda_.27} parent=15 // pred_region
        %s159 = smul.u32 4, %s17
        %p160 = scmp.lt.s32.totalorder %s16, 1
        %s161 = scalar_select %p160, %s16, 1
        %p162 = scmp.lt.s32.totalorder %s159, 11
        %s163 = scalar_select %p162, %s159, 11
        %s164 = smul.addr %s161, 12
        %s165 = sadd.s32 %s163, %s164
        %s166 = smul.addr %s165, 8
        %s167 = scalar_lea.vmem %s0, %s166
        %s168 = smul.u32 4, %s17
      $region20: #{_lambda_.27} parent=15 // pred_fallthru
        _
      // Predicated region
      $region21: #{_lambda_.27} parent=15 // pred_check
        %p169 = pneg %p73
      $region22: #{_lambda_.27} parent=15 // pred_check_branch
        %171 = sbr.rel (%p169) target = $region24
      $region23: #{_lambda_.27} parent=15 // pred_region
        %s172 = sadd.s32 %s17, 1
        %s173 = smul.u32 4, %s172
        %p174 = scmp.lt.s32.totalorder %s16, 1
        %s175 = scalar_select %p174, %s16, 1
        %p176 = scmp.lt.s32.totalorder %s173, 11
        %s177 = scalar_select %p176, %s173, 11
        %s178 = smul.addr %s175, 12
        %s179 = sadd.s32 %s177, %s178
        %s180 = smul.addr %s179, 8
        %s181 = scalar_lea.vmem %s1, %s180
        %s182 = sadd.s32 %s17, 1
        %s183 = smul.u32 4, %s182
      $region24: #{_lambda_.27} parent=15 // pred_fallthru
        _
      // Predicated region
      $region25: #{_lambda_.27} parent=15 // pred_check
        %p184 = pneg %p103
      $region26: #{_lambda_.27} parent=15 // pred_check_branch
        %186 = sbr.rel (%p184) target = $region28
      $region27: #{_lambda_.27} parent=15 // pred_region
        %s187 = sadd.s32 %s17, 2
        %s188 = smul.u32 4, %s187
        %p189 = scmp.lt.s32.totalorder %s16, 1
        %s190 = scalar_select %p189, %s16, 1
        %p191 = scmp.lt.s32.totalorder %s188, 11
        %s192 = scalar_select %p191, %s188, 11
        %s193 = smul.addr %s190, 12
        %s194 = sadd.s32 %s192, %s193
        %s195 = smul.addr %s194, 8
        %s196 = scalar_lea.vmem %s2, %s195
        %s197 = sadd.s32 %s17, 2
        %s198 = smul.u32 4, %s197
      $region28: #{_lambda_.27} parent=15 // pred_fallthru
        _
    $region16: #{_lambda_.27} parent=5 // pred_fallthru
      _
    %p199 = scmp.le.s32.totalorder 1, %s9
    %p200 = scmp.lt.s32.totalorder %s9, 3
    %p201 = pnand %p199, %p200
    %p202 = pneg %p201
    // Predicated region
    $region29: #{_lambda_.27} parent=5 // pred_check
      _
    $region30: #{_lambda_.27} parent=5 // pred_check_branch
      %204 = sbr.rel (%p201) target = $region32
    $region31: #{_lambda_.27} parent=5 // pred_region
      %s205 = ssub.s32 %s9, 1
      %s206 = smul.u32 4, %s19
      %p207 = scmp.lt.s32.totalorder %s18, 1
      %s208 = scalar_select %p207, %s18, 1
      %p209 = scmp.lt.s32.totalorder %s206, 11
      %s210 = scalar_select %p209, %s206, 11
      %s211 = smul.addr %s208, 12
      %s212 = sadd.s32 %s210, %s211
      %s213 = smul.addr %s212, 8
      %s214 = scalar_lea.vmem %s0, %s213
      %p215 = pneg %p49
      %p216 = pneg %p46
      %s217 = sadd.s32 %s19, 1
      %s218 = smul.u32 4, %s217
      %p219 = scmp.lt.s32.totalorder %s18, 1
      %s220 = scalar_select %p219, %s18, 1
      %p221 = scmp.lt.s32.totalorder %s218, 11
      %s222 = scalar_select %p221, %s218, 11
      %s223 = smul.addr %s220, 12
      %s224 = sadd.s32 %s222, %s223
      %s225 = smul.addr %s224, 8
      %s226 = scalar_lea.vmem %s1, %s225
      %p227 = pneg %p79
      %p228 = pneg %p76
      %s229 = sadd.s32 %s19, 2
      %s230 = smul.u32 4, %s229
      %p231 = scmp.lt.s32.totalorder %s18, 1
      %s232 = scalar_select %p231, %s18, 1
      %p233 = scmp.lt.s32.totalorder %s230, 11
      %s234 = scalar_select %p233, %s230, 11
      %s235 = smul.addr %s232, 12
      %s236 = sadd.s32 %s234, %s235
      %s237 = smul.addr %s236, 8
      %s238 = scalar_lea.vmem %s2, %s237
      %p239 = pneg %p109
      %p240 = pneg %p106
      %p241 = pneg %p137
      %p242 = pneg %p134
      %p243 = scmp.lt.s32.totalorder %s18, 1
      %s244 = scalar_select %p243, %s18, 1
      %p245 = scmp.lt.s32.totalorder %s19, 0
      %s246 = scalar_select %p245, %s19, 0
      %s247 = sadd.s32 %s246, %s244
      %s248 = smul.addr %s247, 8
      %s249 = scalar_lea.vmem %s3, %s248
      %s250 = smul.u32 4, %s19
      %p251 = scmp.lt.s32.totalorder %s18, 1
      %s252 = scalar_select %p251, %s18, 1
      %p253 = scmp.lt.s32.totalorder %s250, 11
      %s254 = scalar_select %p253, %s250, 11
      %s255 = smul.addr %s252, 12
      %s256 = sadd.s32 %s254, %s255
      %s257 = smul.addr %s256, 8
      %s258 = scalar_lea.vmem %s0, %s257
      %s259 = smul.u32 4, %s19
      %s260 = sadd.s32 %s19, 1
      %s261 = smul.u32 4, %s260
      %p262 = scmp.lt.s32.totalorder %s18, 1
      %s263 = scalar_select %p262, %s18, 1
      %p264 = scmp.lt.s32.totalorder %s261, 11
      %s265 = scalar_select %p264, %s261, 11
      %s266 = smul.addr %s263, 12
      %s267 = sadd.s32 %s265, %s266
      %s268 = smul.addr %s267, 8
      %s269 = scalar_lea.vmem %s1, %s268
      %s270 = sadd.s32 %s19, 1
      %s271 = smul.u32 4, %s270
      %s272 = sadd.s32 %s19, 2
      %s273 = smul.u32 4, %s272
      %p274 = scmp.lt.s32.totalorder %s18, 1
      %s275 = scalar_select %p274, %s18, 1
      %p276 = scmp.lt.s32.totalorder %s273, 11
      %s277 = scalar_select %p276, %s273, 11
      %s278 = smul.addr %s275, 12
      %s279 = sadd.s32 %s277, %s278
      %s280 = smul.addr %s279, 8
      %s281 = scalar_lea.vmem %s2, %s280
      %s282 = sadd.s32 %s19, 2
      %s283 = smul.u32 4, %s282
      %p284 = scmp.lt.s32.totalorder %s18, 1
      %s285 = scalar_select %p284, %s18, 1
      %p286 = scmp.lt.s32.totalorder %s19, 0
      %s287 = scalar_select %p286, %s19, 0
      %s288 = sadd.s32 %s287, %s285
      %s289 = smul.addr %s288, 8
      %s290 = scalar_lea.vmem %s3, %s289
      %v292 = vld [vmem:[%s258] sm:$0x1f]
      %v293 = vld [vmem:[%s258 + $0x8] sm:$0x1f]
      %v294 = vld [vmem:[%s258 + $0x10] sm:$0x1f]
      %v295 = vld [vmem:[%s258 + $0x18] sm:$0x1f]
      %v296 = vpack.c.bf16 %v292, %v292
      %v297 = vpack.c.bf16 %v293, %v293
      %v298 = vpack.c.bf16 %v294, %v294
      %v299 = vpack.c.bf16 %v295, %v295
      %v300 = vld [vmem:[%s269] sm:$0x1f]
      %v301 = vld [vmem:[%s269 + $0x8] sm:$0x1f]
      %v302 = vld [vmem:[%s269 + $0x10] sm:$0x1f]
      %v303 = vld [vmem:[%s269 + $0x18] sm:$0x1f]
      %v304 = vpack.c.bf16 %v300, %v300
      %v305 = vpack.c.bf16 %v301, %v301
      %v306 = vpack.c.bf16 %v302, %v302
      %v307 = vpack.c.bf16 %v303, %v303
      %v308 = vld [vmem:[%s281] sm:$0x1f]
      %v309 = vld [vmem:[%s281 + $0x8] sm:$0x1f]
      %v310 = vld [vmem:[%s281 + $0x10] sm:$0x1f]
      %v311 = vld [vmem:[%s281 + $0x18] sm:$0x1f]
      %v312 = vpack.c.bf16 %v308, %v308
      %v313 = vpack.c.bf16 %v309, %v309
      %v314 = vpack.c.bf16 %v310, %v310
      %v315 = vpack.c.bf16 %v311, %v311
      %vm316 = vcmask 64512
      %v318 = vsel %vm316, %v296, 0
      %v321 = vsel %vm316, %v304, 0
      %323 = vmatprep.subr.bf16.mxu0 0
      %324 = vmatpush1.bf16.xpose.msra.mxu0 %v321
      %325 = vmatprep.subr.bf16.mxu0 0
      %326 = vmatpush1.bf16.xpose.msra.mxu0 0
      %327 = vmatprep.subr.bf16.mxu0 0
      %328 = vmatpush1.bf16.xpose.msra.mxu0 0
      %329 = vmatprep.subr.bf16.mxu0 0
      %330 = vmatpush1.bf16.xpose.msra.mxu0 0
      %331 = vmatprep.subr.bf16.mxu0 0
      %332 = vmatpush1.bf16.xpose.msra.mxu0 0
      %333 = vmatprep.subr.bf16.mxu0 0
      %334 = vmatpush1.bf16.xpose.msra.mxu0 0
      %335 = vmatprep.subr.bf16.mxu0 0
      %336 = vmatpush1.bf16.xpose.msra.mxu0 0
      %337 = vmatprep.subr.bf16.mxu0 0
      %338 = vmatpush1.bf16.xpose.msra.mxu0 0
      %339 = vmatprep.subr.bf16.mxu0 0
      %340 = vmatpush1.bf16.xpose.msra.mxu0 0
      %341 = vmatprep.subr.bf16.mxu0 0
      %342 = vmatpush1.bf16.xpose.msra.mxu0 0
      %343 = vmatprep.subr.bf16.mxu0 0
      %344 = vmatpush1.bf16.xpose.msra.mxu0 0
      %345 = vmatprep.subr.bf16.mxu0 0
      %346 = vmatpush1.bf16.xpose.msra.mxu0 0
      %347 = vmatprep.subr.bf16.mxu0 0
      %348 = vmatpush1.bf16.xpose.msra.mxu0 0
      %349 = vmatprep.subr.bf16.mxu0 0
      %350 = vmatpush1.bf16.xpose.msra.mxu0 0
      %351 = vmatprep.subr.bf16.mxu0 0
      %352 = vmatpush1.bf16.xpose.msra.mxu0 0
      %353 = vmatprep.subr.bf16.mxu0 0
      %354 = vmatpush1.bf16.xpose.msra.mxu0 0
      %355 = vmatprep.mubr.bf16.mxu0 0
      %356 = vmatmul.mubr.bf16.gmra.mrb[0].mxu0 %v318
      %v357 = vpop.f32.mrb[0].mxu0
      %v358 = vadd.f32 0.0, %v357
      %v359 = vpop.f32.mrb[0].mxu0
      %v360 = vpop.f32.mrb[0].mxu0
      %v361 = vpop.f32.mrb[0].mxu0
      %362 = vdwg.mxu0
      %v364 = vsel %vm316, %v297, 0
      %v367 = vsel %vm316, %v305, 0
      %369 = vmatprep.subr.bf16.mxu0 0
      %370 = vmatpush1.bf16.xpose.msra.mxu0 %v367
      %371 = vmatprep.subr.bf16.mxu0 0
      %372 = vmatpush1.bf16.xpose.msra.mxu0 0
      %373 = vmatprep.subr.bf16.mxu0 0
      %374 = vmatpush1.bf16.xpose.msra.mxu0 0
      %375 = vmatprep.subr.bf16.mxu0 0
      %376 = vmatpush1.bf16.xpose.msra.mxu0 0
      %377 = vmatprep.subr.bf16.mxu0 0
      %378 = vmatpush1.bf16.xpose.msra.mxu0 0
      %379 = vmatprep.subr.bf16.mxu0 0
      %380 = vmatpush1.bf16.xpose.msra.mxu0 0
      %381 = vmatprep.subr.bf16.mxu0 0
      %382 = vmatpush1.bf16.xpose.msra.mxu0 0
      %383 = vmatprep.subr.bf16.mxu0 0
      %384 = vmatpush1.bf16.xpose.msra.mxu0 0
      %385 = vmatprep.subr.bf16.mxu0 0
      %386 = vmatpush1.bf16.xpose.msra.mxu0 0
      %387 = vmatprep.subr.bf16.mxu0 0
      %388 = vmatpush1.bf16.xpose.msra.mxu0 0
      %389 = vmatprep.subr.bf16.mxu0 0
      %390 = vmatpush1.bf16.xpose.msra.mxu0 0
      %391 = vmatprep.subr.bf16.mxu0 0
      %392 = vmatpush1.bf16.xpose.msra.mxu0 0
      %393 = vmatprep.subr.bf16.mxu0 0
      %394 = vmatpush1.bf16.xpose.msra.mxu0 0
      %395 = vmatprep.subr.bf16.mxu0 0
      %396 = vmatpush1.bf16.xpose.msra.mxu0 0
      %397 = vmatprep.subr.bf16.mxu0 0
      %398 = vmatpush1.bf16.xpose.msra.mxu0 0
      %399 = vmatprep.subr.bf16.mxu0 0
      %400 = vmatpush1.bf16.xpose.msra.mxu0 0
      %401 = vmatprep.mubr.bf16.mxu0 0
      %402 = vmatmul.mubr.bf16.gmra.mrb[0].mxu0 %v364
      %v403 = vpop.f32.mrb[0].mxu0
      %v404 = vadd.f32 0.0, %v403
      %v405 = vpop.f32.mrb[0].mxu0
      %v406 = vpop.f32.mrb[0].mxu0
      %v407 = vpop.f32.mrb[0].mxu0
      %408 = vdwg.mxu0
      %v410 = vsel %vm316, %v298, 0
      %v413 = vsel %vm316, %v306, 0
      %415 = vmatprep.subr.bf16.mxu0 0
      %416 = vmatpush1.bf16.xpose.msra.mxu0 %v413
      %417 = vmatprep.subr.bf16.mxu0 0
      %418 = vmatpush1.bf16.xpose.msra.mxu0 0
      %419 = vmatprep.subr.bf16.mxu0 0
      %420 = vmatpush1.bf16.xpose.msra.mxu0 0
      %421 = vmatprep.subr.bf16.mxu0 0
      %422 = vmatpush1.bf16.xpose.msra.mxu0 0
      %423 = vmatprep.subr.bf16.mxu0 0
      %424 = vmatpush1.bf16.xpose.msra.mxu0 0
      %425 = vmatprep.subr.bf16.mxu0 0
      %426 = vmatpush1.bf16.xpose.msra.mxu0 0
      %427 = vmatprep.subr.bf16.mxu0 0
      %428 = vmatpush1.bf16.xpose.msra.mxu0 0
      %429 = vmatprep.subr.bf16.mxu0 0
      %430 = vmatpush1.bf16.xpose.msra.mxu0 0
      %431 = vmatprep.subr.bf16.mxu0 0
      %432 = vmatpush1.bf16.xpose.msra.mxu0 0
      %433 = vmatprep.subr.bf16.mxu0 0
      %434 = vmatpush1.bf16.xpose.msra.mxu0 0
      %435 = vmatprep.subr.bf16.mxu0 0
      %436 = vmatpush1.bf16.xpose.msra.mxu0 0
      %437 = vmatprep.subr.bf16.mxu0 0
      %438 = vmatpush1.bf16.xpose.msra.mxu0 0
      %439 = vmatprep.subr.bf16.mxu0 0
      %440 = vmatpush1.bf16.xpose.msra.mxu0 0
      %441 = vmatprep.subr.bf16.mxu0 0
      %442 = vmatpush1.bf16.xpose.msra.mxu0 0
      %443 = vmatprep.subr.bf16.mxu0 0
      %444 = vmatpush1.bf16.xpose.msra.mxu0 0
      %445 = vmatprep.subr.bf16.mxu0 0
      %446 = vmatpush1.bf16.xpose.msra.mxu0 0
      %447 = vmatprep.mubr.bf16.mxu0 0
      %448 = vmatmul.mubr.bf16.gmra.mrb[0].mxu0 %v410
      %v449 = vpop.f32.mrb[0].mxu0
      %v450 = vadd.f32 0.0, %v449
      %v451 = vpop.f32.mrb[0].mxu0
      %v452 = vpop.f32.mrb[0].mxu0
      %v453 = vpop.f32.mrb[0].mxu0
      %454 = vdwg.mxu0
      %v456 = vsel %vm316, %v299, 0
      %v459 = vsel %vm316, %v307, 0
      %461 = vmatprep.subr.bf16.mxu0 0
      %462 = vmatpush1.bf16.xpose.msra.mxu0 %v459
      %463 = vmatprep.subr.bf16.mxu0 0
      %464 = vmatpush1.bf16.xpose.msra.mxu0 0
      %465 = vmatprep.subr.bf16.mxu0 0
      %466 = vmatpush1.bf16.xpose.msra.mxu0 0
      %467 = vmatprep.subr.bf16.mxu0 0
      %468 = vmatpush1.bf16.xpose.msra.mxu0 0
      %469 = vmatprep.subr.bf16.mxu0 0
      %470 = vmatpush1.bf16.xpose.msra.mxu0 0
      %471 = vmatprep.subr.bf16.mxu0 0
      %472 = vmatpush1.bf16.xpose.msra.mxu0 0
      %473 = vmatprep.subr.bf16.mxu0 0
      %474 = vmatpush1.bf16.xpose.msra.mxu0 0
      %475 = vmatprep.subr.bf16.mxu0 0
      %476 = vmatpush1.bf16.xpose.msra.mxu0 0
      %477 = vmatprep.subr.bf16.mxu0 0
      %478 = vmatpush1.bf16.xpose.msra.mxu0 0
      %479 = vmatprep.subr.bf16.mxu0 0
      %480 = vmatpush1.bf16.xpose.msra.mxu0 0
      %481 = vmatprep.subr.bf16.mxu0 0
      %482 = vmatpush1.bf16.xpose.msra.mxu0 0
      %483 = vmatprep.subr.bf16.mxu0 0
      %484 = vmatpush1.bf16.xpose.msra.mxu0 0
      %485 = vmatprep.subr.bf16.mxu0 0
      %486 = vmatpush1.bf16.xpose.msra.mxu0 0
      %487 = vmatprep.subr.bf16.mxu0 0
      %488 = vmatpush1.bf16.xpose.msra.mxu0 0
      %489 = vmatprep.subr.bf16.mxu0 0
      %490 = vmatpush1.bf16.xpose.msra.mxu0 0
      %491 = vmatprep.subr.bf16.mxu0 0
      %492 = vmatpush1.bf16.xpose.msra.mxu0 0
      %493 = vmatprep.mubr.bf16.mxu0 0
      %494 = vmatmul.mubr.bf16.gmra.mrb[0].mxu0 %v456
      %v495 = vpop.f32.mrb[0].mxu0
      %v496 = vadd.f32 0.0, %v495
      %v497 = vpop.f32.mrb[0].mxu0
      %v498 = vpop.f32.mrb[0].mxu0
      %v499 = vpop.f32.mrb[0].mxu0
      %500 = vdwg.mxu0
      %v501 = vmul.f32 %v358, 0.35355338
      %v502 = vmul.f32 %v404, 0.35355338
      %v503 = vmul.f32 %v450, 0.35355338
      %v504 = vmul.f32 %v496, 0.35355338
      %vm505 = vcmask 36864
      %v506 = vsel %vm505, %v501, -inf
      %507 = vmax.xlane.f32.xlu0 %v506
      %v508 = vpop.xlane.xlu0 %507
      %v509 = vsel %vm505, %v502, -inf
      %510 = vmax.xlane.f32.xlu0 %v509
      %v511 = vpop.xlane.xlu0 %510
      %v512 = vsel %vm505, %v503, -inf
      %513 = vmax.xlane.f32.xlu0 %v512
      %v514 = vpop.xlane.xlu0 %513
      %v515 = vsel %vm505, %v504, -inf
      %516 = vmax.xlane.f32.xlu0 %v515
      %v517 = vpop.xlane.xlu0 %516
      %v518 = vsub.f32 %v501, %v508
      %v519 = vsub.f32 %v502, %v511
      %v520 = vsub.f32 %v503, %v514
      %v521 = vsub.f32 %v504, %v517
      %v522 = vmul.f32 %v518, 1.442695
      %v523 = vpow.pop %v522
      %v524 = vmul.f32 %v519, 1.442695
      %v525 = vpow.pop %v524
      %v526 = vmul.f32 %v520, 1.442695
      %v527 = vpow.pop %v526
      %v528 = vmul.f32 %v521, 1.442695
      %v529 = vpow.pop %v528
      %v530 = vsel %vm505, %v523, 0.0
      %531 = vadd.xlane.f32.xlu0 %v530
      %v532 = vpop.xlane.xlu0 %531
      %v533 = vsel %vm505, %v525, 0.0
      %534 = vadd.xlane.f32.xlu0 %v533
      %v535 = vpop.xlane.xlu0 %534
      %v536 = vsel %vm505, %v527, 0.0
      %537 = vadd.xlane.f32.xlu0 %v536
      %v538 = vpop.xlane.xlu0 %537
      %v539 = vsel %vm505, %v529, 0.0
      %540 = vadd.xlane.f32.xlu0 %v539
      %v541 = vpop.xlane.xlu0 %540
      %v542 = vrcp.pop %v532
      %v543 = vmul.f32 %v523, %v542
      %v544 = vrcp.pop %v535
      %v545 = vmul.f32 %v525, %v544
      %v546 = vrcp.pop %v538
      %v547 = vmul.f32 %v527, %v546
      %v548 = vrcp.pop %v541
      %v549 = vmul.f32 %v529, %v548
      %v550 = vpack.c.bf16 %v543, %v543
      %v551 = vpack.c.bf16 %v545, %v545
      %v552 = vpack.c.bf16 %v547, %v547
      %v553 = vpack.c.bf16 %v549, %v549
      %vm554 = vcmask 39936
      %v556 = vsel %vm554, %v550, 0
      %vm558 = vcmask 1041408
      %vm559 = vcmask 1042432
      %v560 = vsel %vm558, 4294967295, 65535
      %v561 = vsel %vm559, %v560, 0
      %v563 = vand.u32 %v312, %v561
      %565 = vmatprep.subr.bf16.mxu0 0
      %566 = vmatpush1.bf16.msra.mxu0 %v563
      %567 = vmatprep.subr.bf16.mxu0 0
      %568 = vmatpush1.bf16.msra.mxu0 0
      %569 = vmatprep.subr.bf16.mxu0 0
      %570 = vmatpush1.bf16.msra.mxu0 0
      %571 = vmatprep.subr.bf16.mxu0 0
      %572 = vmatpush1.bf16.msra.mxu0 0
      %573 = vmatprep.subr.bf16.mxu0 0
      %574 = vmatpush1.bf16.msra.mxu0 0
      %575 = vmatprep.subr.bf16.mxu0 0
      %576 = vmatpush1.bf16.msra.mxu0 0
      %577 = vmatprep.subr.bf16.mxu0 0
      %578 = vmatpush1.bf16.msra.mxu0 0
      %579 = vmatprep.subr.bf16.mxu0 0
      %580 = vmatpush1.bf16.msra.mxu0 0
      %581 = vmatprep.subr.bf16.mxu0 0
      %582 = vmatpush1.bf16.msra.mxu0 0
      %583 = vmatprep.subr.bf16.mxu0 0
      %584 = vmatpush1.bf16.msra.mxu0 0
      %585 = vmatprep.subr.bf16.mxu0 0
      %586 = vmatpush1.bf16.msra.mxu0 0
      %587 = vmatprep.subr.bf16.mxu0 0
      %588 = vmatpush1.bf16.msra.mxu0 0
      %589 = vmatprep.subr.bf16.mxu0 0
      %590 = vmatpush1.bf16.msra.mxu0 0
      %591 = vmatprep.subr.bf16.mxu0 0
      %592 = vmatpush1.bf16.msra.mxu0 0
      %593 = vmatprep.subr.bf16.mxu0 0
      %594 = vmatpush1.bf16.msra.mxu0 0
      %595 = vmatprep.subr.bf16.mxu0 0
      %596 = vmatpush1.bf16.msra.mxu0 0
      %597 = vmatprep.mubr.bf16.mxu0 0
      %598 = vmatmul.mubr.bf16.gmra.mrb[0].mxu0 %v556
      %v599 = vpop.f32.mrb[0].mxu0
      %v600 = vadd.f32 0.0, %v599
      %v601 = vpop.f32.mrb[0].mxu0
      %v602 = vpop.f32.mrb[0].mxu0
      %v603 = vpop.f32.mrb[0].mxu0
      %604 = vdwg.mxu0
      %v606 = vsel %vm554, %v551, 0
      %v609 = vand.u32 %v313, %v561
      %611 = vmatprep.subr.bf16.mxu0 0
      %612 = vmatpush1.bf16.msra.mxu0 %v609
      %613 = vmatprep.subr.bf16.mxu0 0
      %614 = vmatpush1.bf16.msra.mxu0 0
      %615 = vmatprep.subr.bf16.mxu0 0
      %616 = vmatpush1.bf16.msra.mxu0 0
      %617 = vmatprep.subr.bf16.mxu0 0
      %618 = vmatpush1.bf16.msra.mxu0 0
      %619 = vmatprep.subr.bf16.mxu0 0
      %620 = vmatpush1.bf16.msra.mxu0 0
      %621 = vmatprep.subr.bf16.mxu0 0
      %622 = vmatpush1.bf16.msra.mxu0 0
      %623 = vmatprep.subr.bf16.mxu0 0
      %624 = vmatpush1.bf16.msra.mxu0 0
      %625 = vmatprep.subr.bf16.mxu0 0
      %626 = vmatpush1.bf16.msra.mxu0 0
      %627 = vmatprep.subr.bf16.mxu0 0
      %628 = vmatpush1.bf16.msra.mxu0 0
      %629 = vmatprep.subr.bf16.mxu0 0
      %630 = vmatpush1.bf16.msra.mxu0 0
      %631 = vmatprep.subr.bf16.mxu0 0
      %632 = vmatpush1.bf16.msra.mxu0 0
      %633 = vmatprep.subr.bf16.mxu0 0
      %634 = vmatpush1.bf16.msra.mxu0 0
      %635 = vmatprep.subr.bf16.mxu0 0
      %636 = vmatpush1.bf16.msra.mxu0 0
      %637 = vmatprep.subr.bf16.mxu0 0
      %638 = vmatpush1.bf16.msra.mxu0 0
      %639 = vmatprep.subr.bf16.mxu0 0
      %640 = vmatpush1.bf16.msra.mxu0 0
      %641 = vmatprep.subr.bf16.mxu0 0
      %642 = vmatpush1.bf16.msra.mxu0 0
      %643 = vmatprep.mubr.bf16.mxu0 0
      %644 = vmatmul.mubr.bf16.gmra.mrb[0].mxu0 %v606
      %v645 = vpop.f32.mrb[0].mxu0
      %v646 = vadd.f32 0.0, %v645
      %v647 = vpop.f32.mrb[0].mxu0
      %v648 = vpop.f32.mrb[0].mxu0
      %v649 = vpop.f32.mrb[0].mxu0
      %650 = vdwg.mxu0
      %v652 = vsel %vm554, %v552, 0
      %v655 = vand.u32 %v314, %v561
      %657 = vmatprep.subr.bf16.mxu0 0
      %658 = vmatpush1.bf16.msra.mxu0 %v655
      %659 = vmatprep.subr.bf16.mxu0 0
      %660 = vmatpush1.bf16.msra.mxu0 0
      %661 = vmatprep.subr.bf16.mxu0 0
      %662 = vmatpush1.bf16.msra.mxu0 0
      %663 = vmatprep.subr.bf16.mxu0 0
      %664 = vmatpush1.bf16.msra.mxu0 0
      %665 = vmatprep.subr.bf16.mxu0 0
      %666 = vmatpush1.bf16.msra.mxu0 0
      %667 = vmatprep.subr.bf16.mxu0 0
      %668 = vmatpush1.bf16.msra.mxu0 0
      %669 = vmatprep.subr.bf16.mxu0 0
      %670 = vmatpush1.bf16.msra.mxu0 0
      %671 = vmatprep.subr.bf16.mxu0 0
      %672 = vmatpush1.bf16.msra.mxu0 0
      %673 = vmatprep.subr.bf16.mxu0 0
      %674 = vmatpush1.bf16.msra.mxu0 0
      %675 = vmatprep.subr.bf16.mxu0 0
      %676 = vmatpush1.bf16.msra.mxu0 0
      %677 = vmatprep.subr.bf16.mxu0 0
      %678 = vmatpush1.bf16.msra.mxu0 0
      %679 = vmatprep.subr.bf16.mxu0 0
      %680 = vmatpush1.bf16.msra.mxu0 0
      %681 = vmatprep.subr.bf16.mxu0 0
      %682 = vmatpush1.bf16.msra.mxu0 0
      %683 = vmatprep.subr.bf16.mxu0 0
      %684 = vmatpush1.bf16.msra.mxu0 0
      %685 = vmatprep.subr.bf16.mxu0 0
      %686 = vmatpush1.bf16.msra.mxu0 0
      %687 = vmatprep.subr.bf16.mxu0 0
      %688 = vmatpush1.bf16.msra.mxu0 0
      %689 = vmatprep.mubr.bf16.mxu0 0
      %690 = vmatmul.mubr.bf16.gmra.mrb[0].mxu0 %v652
      %v691 = vpop.f32.mrb[0].mxu0
      %v692 = vadd.f32 0.0, %v691
      %v693 = vpop.f32.mrb[0].mxu0
      %v694 = vpop.f32.mrb[0].mxu0
      %v695 = vpop.f32.mrb[0].mxu0
      %696 = vdwg.mxu0
      %v698 = vsel %vm554, %v553, 0
      %v701 = vand.u32 %v315, %v561
      %703 = vmatprep.subr.bf16.mxu0 0
      %704 = vmatpush1.bf16.msra.mxu0 %v701
      %705 = vmatprep.subr.bf16.mxu0 0
      %706 = vmatpush1.bf16.msra.mxu0 0
      %707 = vmatprep.subr.bf16.mxu0 0
      %708 = vmatpush1.bf16.msra.mxu0 0
      %709 = vmatprep.subr.bf16.mxu0 0
      %710 = vmatpush1.bf16.msra.mxu0 0
      %711 = vmatprep.subr.bf16.mxu0 0
      %712 = vmatpush1.bf16.msra.mxu0 0
      %713 = vmatprep.subr.bf16.mxu0 0
      %714 = vmatpush1.bf16.msra.mxu0 0
      %715 = vmatprep.subr.bf16.mxu0 0
      %716 = vmatpush1.bf16.msra.mxu0 0
      %717 = vmatprep.subr.bf16.mxu0 0
      %718 = vmatpush1.bf16.msra.mxu0 0
      %719 = vmatprep.subr.bf16.mxu0 0
      %720 = vmatpush1.bf16.msra.mxu0 0
      %721 = vmatprep.subr.bf16.mxu0 0
      %722 = vmatpush1.bf16.msra.mxu0 0
      %723 = vmatprep.subr.bf16.mxu0 0
      %724 = vmatpush1.bf16.msra.mxu0 0
      %725 = vmatprep.subr.bf16.mxu0 0
      %726 = vmatpush1.bf16.msra.mxu0 0
      %727 = vmatprep.subr.bf16.mxu0 0
      %728 = vmatpush1.bf16.msra.mxu0 0
      %729 = vmatprep.subr.bf16.mxu0 0
      %730 = vmatpush1.bf16.msra.mxu0 0
      %731 = vmatprep.subr.bf16.mxu0 0
      %732 = vmatpush1.bf16.msra.mxu0 0
      %733 = vmatprep.subr.bf16.mxu0 0
      %734 = vmatpush1.bf16.msra.mxu0 0
      %735 = vmatprep.mubr.bf16.mxu0 0
      %736 = vmatmul.mubr.bf16.gmra.mrb[0].mxu0 %v698
      %v737 = vpop.f32.mrb[0].mxu0
      %v738 = vadd.f32 0.0, %v737
      %v739 = vpop.f32.mrb[0].mxu0
      %v740 = vpop.f32.mrb[0].mxu0
      %v741 = vpop.f32.mrb[0].mxu0
      %742 = vdwg.mxu0
      %vm743 = vcmask 61440
      %744 = vst.msk [vmem:[%s290] sm:$0x1f] %vm743, %v600
      %746 = vrot.lane.b32.xlu0 %v646, 8
      %v747 = vpop.permute.xlu0 %746
      %vm749 = vcmask 127040
      %750 = vst.msk [vmem:[%s290] sm:$0x1f] %vm749, %v747
      %752 = vrot.lane.b32.xlu0 %v692, 16
      %v753 = vpop.permute.xlu0 %752
      %vm755 = vcmask 192640
      %756 = vst.msk [vmem:[%s290] sm:$0x1f] %vm755, %v753
      %758 = vrot.lane.b32.xlu0 %v738, 24
      %v759 = vpop.permute.xlu0 %758
      %vm761 = vcmask 258240
      %762 = vst.msk [vmem:[%s290] sm:$0x1f] %vm761, %v759
      %p763 = scmp.lt.s32.totalorder %s18, 1
      %s764 = scalar_select %p763, %s18, 1
      %p765 = scmp.lt.s32.totalorder %s19, 0
      %s766 = scalar_select %p765, %s19, 0
      %s767 = sadd.s32 %s766, %s764
      %s768 = smul.addr %s767, 8
      %s769 = scalar_lea.vmem %s3, %s768
      // Predicated region
      $region33: #{_lambda_.27} parent=31 // pred_check
        %p770 = pneg %p134
      $region34: #{_lambda_.27} parent=31 // pred_check_branch
        %772 = sbr.rel (%p770) target = $region36
      $region35: #{_lambda_.27} parent=31 // pred_region
        _
      $region36: #{_lambda_.27} parent=31 // pred_fallthru
        _
    $region32: #{_lambda_.27} parent=5 // pred_fallthru
      _
    %p773 = scmp.le.s32.totalorder 2, %s9
    // Predicated region
    $region37: #{_lambda_.27} parent=5 // pred_check
      %p774 = pneg %p773
    $region38: #{_lambda_.27} parent=5 // pred_check_branch
      %776 = sbr.rel (%p774) target = $region40
    $region39: #{_lambda_.27} parent=5 // pred_region
      %s777 = ssub.s32 %s9, 2
      // Predicated region
      $region41: #{_lambda_.27} parent=39 // pred_check
        %p778 = pneg %p140
      $region42: #{_lambda_.27} parent=39 // pred_check_branch
        %780 = sbr.rel (%p778) target = $region44
      $region43: #{_lambda_.27} parent=39 // pred_region
        %p781 = scmp.lt.s32.totalorder %s20, 1
        %s782 = scalar_select %p781, %s20, 1
        %p783 = scmp.lt.s32.totalorder %s21, 0
        %s784 = scalar_select %p783, %s21, 0
        %s785 = sadd.s32 %s784, %s782
        %s786 = smul.addr %s785, 8
        %s787 = scalar_lea.vmem %s3, %s786
      $region44: #{_lambda_.27} parent=39 // pred_fallthru
        _
    $region40: #{_lambda_.27} parent=5 // pred_fallthru
      _
  $region6: #{_lambda_.27} parent=0 // loop_footer
    %s13 = sadd.s32 1, %s9
  $region7: #{_lambda_.27} parent=0 // loop_footer_branch
    %8 = sbr.rel target = $region3
  $region8: #{_lambda_.27} parent=0 // loop_exit
    _

// kernel: _lambda_.30
$region0: #{_lambda_.30}
  #allocation0 [shape = 'u32[]', space=smem, size = 0x4, offset = 0x4, fixed_abs, tag = 'smem constant byte address 0x4 - core index']
  #allocation1 [shape = 'u32[144,128]{1,0:T(1,128)}', space=vmem, size = 0x12000, scoped, tag = 'internal scratch']
  #allocation2 [shape = 'f32[16,32]{1,0:T(8,128)}', space=vmem, size = 0x2000, scoped, tag = 'scratch operand']
  %s0 = inlined_call_operand.vmem [shape: f32[16,128], index: 0, kind: input, shape index: {}]
  %s1 = inlined_call_operand.vmem [shape: bf16[128,32], index: 1, kind: input, shape index: {}]
  %s2 = inlined_call_operand.vmem [shape: f32[1,32], index: 2, kind: input, shape index: {}]
  %s3 = inlined_call_operand.vmem [shape: f32[1,32], index: 3, kind: input, shape index: {}]
  %s4 = inlined_call_operand.vmem [shape: f32[16,32], index: 4, kind: input, shape index: {}]
  %s5 = inlined_call_operand.vmem [shape: f32[16,32], index: 5, kind: output, shape index: {}]
  %s6 = sld [smem:[#allocation0]]
  $region38: #{_lambda_.30} parent=0
    _
  %s8 = ssub.s32 1, %s6
  %s9 = scalar_select 0, %s8, %s6
  // Predicated region
  $region2: #{_lambda_.30} parent=0 // pred_check
    _
  $region3: #{_lambda_.30} parent=0 // pred_check_branch
    %11 = sbr.rel (0) target = $region5
  $region4: #{_lambda_.30} parent=0 // pred_region
    _
  $region5: #{_lambda_.30} parent=0 // pred_fallthru
    _
  // Predicated region
  $region6: #{_lambda_.30} parent=0 // pred_check
    _
  $region7: #{_lambda_.30} parent=0 // pred_check_branch
    %13 = sbr.rel (0) target = $region9
  $region8: #{_lambda_.30} parent=0 // pred_region
    _
  $region9: #{_lambda_.30} parent=0 // pred_fallthru
    _
  // Predicated region
  $region10: #{_lambda_.30} parent=0 // pred_check
    _
  $region11: #{_lambda_.30} parent=0 // pred_check_branch
    %15 = sbr.rel (0) target = $region13
  $region12: #{_lambda_.30} parent=0 // pred_region
    _
  $region13: #{_lambda_.30} parent=0 // pred_fallthru
    _
  // Predicated region
  $region14: #{_lambda_.30} parent=0 // pred_check
    _
  $region15: #{_lambda_.30} parent=0 // pred_check_branch
    %17 = sbr.rel (0) target = $region17
  $region16: #{_lambda_.30} parent=0 // pred_region
    _
  $region17: #{_lambda_.30} parent=0 // pred_fallthru
    _
  // Predicated region
  $region18: #{_lambda_.30} parent=0 // pred_check
    _
  $region19: #{_lambda_.30} parent=0 // pred_check_branch
    %19 = sbr.rel (0) target = $region21
  $region20: #{_lambda_.30} parent=0 // pred_region
    _
  $region21: #{_lambda_.30} parent=0 // pred_fallthru
    _
  %p21 = scmp.eq.s32.totalorder 0, 0
  // Predicated region
  $region22: #{_lambda_.30} parent=0 // pred_check
    %p22 = pneg %p21
  $region23: #{_lambda_.30} parent=0 // pred_check_branch
    %24 = sbr.rel (%p22) target = $region25
  $region24: #{_lambda_.30} parent=0 // pred_region
    %vm25 = vcmask 261120
    %26 = vst.msk [vmem:[#allocation2] sm:$0xff] %vm25, 0.0
    %27 = vst.msk [vmem:[#allocation2 + $0x8] sm:$0xff] %vm25, 0.0
  $region25: #{_lambda_.30} parent=0 // pred_fallthru
    _
  %v28 = vld [vmem:[%s0] sm:$0xff]
  %v29 = vld [vmem:[%s0 + $0x8] sm:$0xff]
  %v30 = vld [vmem:[#allocation2] sm:$0xff]
  %v31 = vld [vmem:[#allocation2 + $0x8] sm:$0xff]
  %v32 = vpack.c.bf16 %v29, %v28
  %v33 = vld [vmem:[%s1] sm:$0xf]
  %v34 = vld [vmem:[%s1 + $0x4] sm:$0xf]
  %v35 = vld [vmem:[%s1 + $0x8] sm:$0xf]
  %v36 = vld [vmem:[%s1 + $0xc] sm:$0xf]
  %v37 = vld [vmem:[%s1 + $0x10] sm:$0xf]
  %v38 = vld [vmem:[%s1 + $0x14] sm:$0xf]
  %v39 = vld [vmem:[%s1 + $0x18] sm:$0xf]
  %v40 = vld [vmem:[%s1 + $0x1c] sm:$0xf]
  %v41 = vld [vmem:[%s1 + $0x20] sm:$0xf]
  %v42 = vld [vmem:[%s1 + $0x24] sm:$0xf]
  %v43 = vld [vmem:[%s1 + $0x28] sm:$0xf]
  %v44 = vld [vmem:[%s1 + $0x2c] sm:$0xf]
  %v45 = vld [vmem:[%s1 + $0x30] sm:$0xf]
  %v46 = vld [vmem:[%s1 + $0x34] sm:$0xf]
  %v47 = vld [vmem:[%s1 + $0x38] sm:$0xf]
  %v48 = vld [vmem:[%s1 + $0x3c] sm:$0xf]
  %v65 = vunpack.c.l.b16 %v33
  %v66 = vunpack.c.l.b16 %v34
  %v67 = vunpack.c.l.b16 %v35
  %v68 = vunpack.c.l.b16 %v36
  %v69 = vunpack.c.l.b16 %v37
  %v70 = vunpack.c.l.b16 %v38
  %v71 = vunpack.c.l.b16 %v39
  %v72 = vunpack.c.l.b16 %v40
  %v73 = vunpack.c.l.b16 %v41
  %v74 = vunpack.c.l.b16 %v42
  %v75 = vunpack.c.l.b16 %v43
  %v76 = vunpack.c.l.b16 %v44
  %v77 = vunpack.c.l.b16 %v45
  %v78 = vunpack.c.l.b16 %v46
  %v79 = vunpack.c.l.b16 %v47
  %v80 = vunpack.c.l.b16 %v48
  %v81 = vpack.c.b16 %v66, %v65
  %v82 = vpack.c.b16 %v68, %v67
  %v83 = vpack.c.b16 %v70, %v69
  %v84 = vpack.c.b16 %v72, %v71
  %v85 = vpack.c.b16 %v74, %v73
  %v86 = vpack.c.b16 %v76, %v75
  %v87 = vpack.c.b16 %v78, %v77
  %v88 = vpack.c.b16 %v80, %v79
  %97 = vmatprep.subr.bf16.mxu0 0
  %98 = vmatpush1.bf16.msra.mxu0 %v81
  %99 = vmatprep.subr.bf16.mxu0 0
  %100 = vmatpush1.bf16.msra.mxu0 %v82
  %101 = vmatprep.subr.bf16.mxu0 0
  %102 = vmatpush1.bf16.msra.mxu0 %v83
  %103 = vmatprep.subr.bf16.mxu0 0
  %104 = vmatpush1.bf16.msra.mxu0 %v84
  %105 = vmatprep.subr.bf16.mxu0 0
  %106 = vmatpush1.bf16.msra.mxu0 %v85
  %107 = vmatprep.subr.bf16.mxu0 0
  %108 = vmatpush1.bf16.msra.mxu0 %v86
  %109 = vmatprep.subr.bf16.mxu0 0
  %110 = vmatpush1.bf16.msra.mxu0 %v87
  %111 = vmatprep.subr.bf16.mxu0 0
  %112 = vmatpush1.bf16.msra.mxu0 %v88
  %113 = vmatprep.subr.bf16.mxu0 0
  %114 = vmatpush1.bf16.msra.mxu0 0
  %115 = vmatprep.subr.bf16.mxu0 0
  %116 = vmatpush1.bf16.msra.mxu0 0
  %117 = vmatprep.subr.bf16.mxu0 0
  %118 = vmatpush1.bf16.msra.mxu0 0
  %119 = vmatprep.subr.bf16.mxu0 0
  %120 = vmatpush1.bf16.msra.mxu0 0
  %121 = vmatprep.subr.bf16.mxu0 0
  %122 = vmatpush1.bf16.msra.mxu0 0
  %123 = vmatprep.subr.bf16.mxu0 0
  %124 = vmatpush1.bf16.msra.mxu0 0
  %125 = vmatprep.subr.bf16.mxu0 0
  %126 = vmatpush1.bf16.msra.mxu0 0
  %127 = vmatprep.subr.bf16.mxu0 0
  %128 = vmatpush1.bf16.msra.mxu0 0
  %129 = vmatprep.mubr.bf16.mxu0 0
  %130 = vmatmul.mubr.bf16.gmra.mrb[0].mxu0 %v32
  %v131 = vpop.f32.mrb[0].mxu0
  %v132 = vadd.f32 0.0, %v131
  %v133 = vpop.f32.mrb[0].mxu0
  %v134 = vpop.f32.mrb[0].mxu0
  %v135 = vadd.f32 0.0, %v134
  %v136 = vpop.f32.mrb[0].mxu0
  %137 = vdwg.mxu0
  %v138 = vadd.f32 %v30, %v132
  %v139 = vadd.f32 %v31, %v135
  %vm140 = vcmask 261120
  %141 = vst.msk [vmem:[#allocation2] sm:$0xff] %vm140, %v138
  %142 = vst.msk [vmem:[#allocation2 + $0x8] sm:$0xff] %vm140, %v139
  // Predicated region
  $region26: #{_lambda_.30} parent=0 // pred_check
    %p143 = pneg %p21
  $region27: #{_lambda_.30} parent=0 // pred_check_branch
    %145 = sbr.rel (%p143) target = $region29
  $region28: #{_lambda_.30} parent=0 // pred_region
    %v146 = vld [vmem:[#allocation2] sm:$0xff]
    %v147 = vld [vmem:[#allocation2 + $0x8] sm:$0xff]
    %v148 = vld [vmem:[%s2] sm:$0x1]
    %v150 = vlaneseq
    %v151 = vshrl.u32 %v150, 7
    %v152 = vsub.s32 0, %v151
    %v153 = vrot.slane %v148, %v152
    %v155 = vadd.f32 %v146, %v153
    %v156 = vadd.f32 %v147, %v153
    %v157 = vld [vmem:[%s3] sm:$0x1]
    %v159 = vlaneseq
    %v160 = vshrl.u32 %v159, 7
    %v161 = vsub.s32 0, %v160
    %v162 = vrot.slane %v157, %v161
    %v164 = vmul.f32 %v155, %v162
    %v165 = vmul.f32 %v156, %v162
    %v166 = vld [vmem:[%s4] sm:$0xff]
    %v167 = vld [vmem:[%s4 + $0x8] sm:$0xff]
    %v168 = vadd.f32 %v164, %v166
    %v169 = vadd.f32 %v165, %v167
    %170 = vst.msk [vmem:[%s5] sm:$0xff] %vm140, %v168
    %171 = vst.msk [vmem:[%s5 + $0x8] sm:$0xff] %vm140, %v169
  $region29: #{_lambda_.30} parent=0 // pred_fallthru
    _
  // Predicated region
  $region30: #{_lambda_.30} parent=0 // pred_check
    _
  $region31: #{_lambda_.30} parent=0 // pred_check_branch
    %173 = sbr.rel (0) target = $region33
  $region32: #{_lambda_.30} parent=0 // pred_region
    _
  $region33: #{_lambda_.30} parent=0 // pred_fallthru
    _
  // Predicated region
  $region34: #{_lambda_.30} parent=0 // pred_check
    _
  $region35: #{_lambda_.30} parent=0 // pred_check_branch
    %175 = sbr.rel (0) target = $region37
  $region36: #{_lambda_.30} parent=0 // pred_region
    _
  $region37: #{_lambda_.30} parent=0 // pred_fallthru
    _

// kernel: _lambda_.29
$region0: #{_lambda_.29}
  #allocation0 [shape = 'u32[]', space=smem, size = 0x4, offset = 0x4, fixed_abs, tag = 'smem constant byte address 0x4 - core index']
  #allocation1 [shape = 'u32[144,128]{1,0:T(1,128)}', space=vmem, size = 0x12000, scoped, tag = 'internal scratch']
  #allocation2 [shape = 'f32[16,128]{1,0:T(8,128)}', space=vmem, size = 0x2000, scoped, tag = 'scratch operand']
  %s0 = inlined_call_operand.vmem [shape: f32[16,32], index: 0, kind: input, shape index: {}]
  %s1 = inlined_call_operand.vmem [shape: bf16[32,128], index: 1, kind: input, shape index: {}]
  %s2 = inlined_call_operand.vmem [shape: f32[1,128], index: 2, kind: input, shape index: {}]
  %s3 = inlined_call_operand.vmem [shape: f32[1,32], index: 3, kind: input, shape index: {}]
  %s4 = inlined_call_operand.vmem [shape: f32[1,32], index: 4, kind: input, shape index: {}]
  %s5 = inlined_call_operand.vmem [shape: f32[16,128], index: 5, kind: output, shape index: {}]
  %s6 = sld [smem:[#allocation0]]
  $region38: #{_lambda_.29} parent=0
    _
  %s8 = ssub.s32 1, %s6
  %s9 = scalar_select 0, %s8, %s6
  // Predicated region
  $region2: #{_lambda_.29} parent=0 // pred_check
    _
  $region3: #{_lambda_.29} parent=0 // pred_check_branch
    %11 = sbr.rel (0) target = $region5
  $region4: #{_lambda_.29} parent=0 // pred_region
    _
  $region5: #{_lambda_.29} parent=0 // pred_fallthru
    _
  // Predicated region
  $region6: #{_lambda_.29} parent=0 // pred_check
    _
  $region7: #{_lambda_.29} parent=0 // pred_check_branch
    %13 = sbr.rel (0) target = $region9
  $region8: #{_lambda_.29} parent=0 // pred_region
    _
  $region9: #{_lambda_.29} parent=0 // pred_fallthru
    _
  // Predicated region
  $region10: #{_lambda_.29} parent=0 // pred_check
    _
  $region11: #{_lambda_.29} parent=0 // pred_check_branch
    %15 = sbr.rel (0) target = $region13
  $region12: #{_lambda_.29} parent=0 // pred_region
    _
  $region13: #{_lambda_.29} parent=0 // pred_fallthru
    _
  // Predicated region
  $region14: #{_lambda_.29} parent=0 // pred_check
    _
  $region15: #{_lambda_.29} parent=0 // pred_check_branch
    %17 = sbr.rel (0) target = $region17
  $region16: #{_lambda_.29} parent=0 // pred_region
    _
  $region17: #{_lambda_.29} parent=0 // pred_fallthru
    _
  // Predicated region
  $region18: #{_lambda_.29} parent=0 // pred_check
    _
  $region19: #{_lambda_.29} parent=0 // pred_check_branch
    %19 = sbr.rel (0) target = $region21
  $region20: #{_lambda_.29} parent=0 // pred_region
    _
  $region21: #{_lambda_.29} parent=0 // pred_fallthru
    _
  %p21 = scmp.eq.s32.totalorder 0, 0
  // Predicated region
  $region22: #{_lambda_.29} parent=0 // pred_check
    %p22 = pneg %p21
  $region23: #{_lambda_.29} parent=0 // pred_check_branch
    %24 = sbr.rel (%p22) target = $region25
  $region24: #{_lambda_.29} parent=0 // pred_region
    %25 = vst [vmem:[#allocation2] sm:$0xff] 0.0
    %26 = vst [vmem:[#allocation2 + $0x8] sm:$0xff] 0.0
  $region25: #{_lambda_.29} parent=0 // pred_fallthru
    _
  %v27 = vld [vmem:[%s0] sm:$0xff]
  %v28 = vld [vmem:[%s0 + $0x8] sm:$0xff]
  %vm29 = vcmask 261120
  %v30 = vsel %vm29, %v27, 0.0
  %31 = vadd.xlane.f32.xlu0 %v30
  %v32 = vpop.xlane.xlu0 %31
  %v33 = vsel %vm29, %v28, 0.0
  %34 = vadd.xlane.f32.xlu0 %v33
  %v35 = vpop.xlane.xlu0 %34
  %v36 = vrcp.pop 32.0
  %v37 = vmul.f32 %v32, %v36
  %v38 = vmul.f32 %v35, %v36
  %v39 = vsub.f32 %v27, %v37
  %v40 = vsub.f32 %v28, %v38
  %v41 = vmul.f32 %v39, %v39
  %v42 = vmul.f32 %v40, %v40
  %v43 = vsel %vm29, %v41, 0.0
  %44 = vadd.xlane.f32.xlu0 %v43
  %v45 = vpop.xlane.xlu0 %44
  %v46 = vsel %vm29, %v42, 0.0
  %47 = vadd.xlane.f32.xlu0 %v46
  %v48 = vpop.xlane.xlu0 %47
  %v49 = vmul.f32 %v45, %v36
  %v50 = vmul.f32 %v48, %v36
  %v51 = vadd.f32 %v49, 1e-06
  %v52 = vadd.f32 %v50, 1e-06
  %v53 = vrsqrt.pop %v51
  %v54 = vrsqrt.pop %v52
  %v55 = vmul.f32 %v39, %v53
  %v56 = vmul.f32 %v40, %v54
  %v57 = vld [vmem:[%s3] sm:$0x1]
  %v59 = vlaneseq
  %v60 = vshrl.u32 %v59, 7
  %v61 = vsub.s32 0, %v60
  %v62 = vrot.slane %v57, %v61
  %v64 = vmul.f32 %v55, %v62
  %v65 = vmul.f32 %v56, %v62
  %v66 = vld [vmem:[%s4] sm:$0x1]
  %v68 = vlaneseq
  %v69 = vshrl.u32 %v68, 7
  %v70 = vsub.s32 0, %v69
  %v71 = vrot.slane %v66, %v70
  %v73 = vadd.f32 %v64, %v71
  %v74 = vadd.f32 %v65, %v71
  %v75 = vld [vmem:[#allocation2] sm:$0xff]
  %v76 = vld [vmem:[#allocation2 + $0x8] sm:$0xff]
  %v77 = vpack.c.bf16 %v74, %v73
  %v78 = vld [vmem:[%s1] sm:$0xf]
  %v79 = vld [vmem:[%s1 + $0x4] sm:$0xf]
  %v80 = vld [vmem:[%s1 + $0x8] sm:$0xf]
  %v81 = vld [vmem:[%s1 + $0xc] sm:$0xf]
  %v86 = vunpack.c.l.b16 %v78
  %v87 = vunpack.c.l.b16 %v79
  %v88 = vunpack.c.l.b16 %v80
  %v89 = vunpack.c.l.b16 %v81
  %v90 = vpack.c.b16 %v87, %v86
  %v91 = vpack.c.b16 %v89, %v88
  %v95 = vsel %vm29, %v77, 0
  %97 = vmatprep.subr.bf16.mxu0 0
  %98 = vmatpush1.bf16.msra.mxu0 %v90
  %99 = vmatprep.subr.bf16.mxu0 0
  %100 = vmatpush1.bf16.msra.mxu0 %v91
  %101 = vmatprep.subr.bf16.mxu0 0
  %102 = vmatpush1.bf16.msra.mxu0 0
  %103 = vmatprep.subr.bf16.mxu0 0
  %104 = vmatpush1.bf16.msra.mxu0 0
  %105 = vmatprep.subr.bf16.mxu0 0
  %106 = vmatpush1.bf16.msra.mxu0 0
  %107 = vmatprep.subr.bf16.mxu0 0
  %108 = vmatpush1.bf16.msra.mxu0 0
  %109 = vmatprep.subr.bf16.mxu0 0
  %110 = vmatpush1.bf16.msra.mxu0 0
  %111 = vmatprep.subr.bf16.mxu0 0
  %112 = vmatpush1.bf16.msra.mxu0 0
  %113 = vmatprep.subr.bf16.mxu0 0
  %114 = vmatpush1.bf16.msra.mxu0 0
  %115 = vmatprep.subr.bf16.mxu0 0
  %116 = vmatpush1.bf16.msra.mxu0 0
  %117 = vmatprep.subr.bf16.mxu0 0
  %118 = vmatpush1.bf16.msra.mxu0 0
  %119 = vmatprep.subr.bf16.mxu0 0
  %120 = vmatpush1.bf16.msra.mxu0 0
  %121 = vmatprep.subr.bf16.mxu0 0
  %122 = vmatpush1.bf16.msra.mxu0 0
  %123 = vmatprep.subr.bf16.mxu0 0
  %124 = vmatpush1.bf16.msra.mxu0 0
  %125 = vmatprep.subr.bf16.mxu0 0
  %126 = vmatpush1.bf16.msra.mxu0 0
  %127 = vmatprep.subr.bf16.mxu0 0
  %128 = vmatpush1.bf16.msra.mxu0 0
  %129 = vmatprep.mubr.bf16.mxu0 0
  %130 = vmatmul.mubr.bf16.gmra.mrb[0].mxu0 %v95
  %v131 = vpop.f32.mrb[0].mxu0
  %v132 = vadd.f32 0.0, %v131
  %v133 = vpop.f32.mrb[0].mxu0
  %v134 = vpop.f32.mrb[0].mxu0
  %v135 = vadd.f32 0.0, %v134
  %v136 = vpop.f32.mrb[0].mxu0
  %137 = vdwg.mxu0
  %v138 = vadd.f32 %v75, %v132
  %v139 = vadd.f32 %v76, %v135
  %140 = vst [vmem:[#allocation2] sm:$0xff] %v138
  %141 = vst [vmem:[#allocation2 + $0x8] sm:$0xff] %v139
  // Predicated region
  $region26: #{_lambda_.29} parent=0 // pred_check
    %p142 = pneg %p21
  $region27: #{_lambda_.29} parent=0 // pred_check_branch
    %144 = sbr.rel (%p142) target = $region29
  $region28: #{_lambda_.29} parent=0 // pred_region
    %v145 = vld [vmem:[#allocation2] sm:$0xff]
    %v146 = vld [vmem:[#allocation2 + $0x8] sm:$0xff]
    %v147 = vld [vmem:[%s2] sm:$0x1]
    %v149 = vlaneseq
    %v150 = vshrl.u32 %v149, 7
    %v151 = vsub.s32 0, %v150
    %v152 = vrot.slane %v147, %v151
    %v154 = vadd.f32 %v145, %v152
    %v155 = vadd.f32 %v146, %v152
    %v156 = vmul.f32 %v154, 0.5
    %v157 = vmul.f32 %v155, 0.5
    %v158 = vmul.f32 %v154, 0.70710677
    %v159 = vmul.f32 %v155, 0.70710677
    %v160 = verf.f32.pop %v158
    %v161 = verf.f32.pop %v159
    %v162 = vadd.f32 %v160, 1.0
    %v163 = vadd.f32 %v161, 1.0
    %v164 = vmul.f32 %v156, %v162
    %v165 = vmul.f32 %v157, %v163
    %166 = vst [vmem:[%s5] sm:$0xff] %v164
    %167 = vst [vmem:[%s5 + $0x8] sm:$0xff] %v165
  $region29: #{_lambda_.29} parent=0 // pred_fallthru
    _
  // Predicated region
  $region30: #{_lambda_.29} parent=0 // pred_check
    _
  $region31: #{_lambda_.29} parent=0 // pred_check_branch
    %169 = sbr.rel (0) target = $region33
  $region32: #{_lambda_.29} parent=0 // pred_region
    _
  $region33: #{_lambda_.29} parent=0 // pred_fallthru
    _
  // Predicated region
  $region34: #{_lambda_.29} parent=0 // pred_check
    _
  $region35: #{_lambda_.29} parent=0 // pred_check_branch
    %171 = sbr.rel (0) target = $region37
  $region36: #{_lambda_.29} parent=0 // pred_region
    _
  $region37: #{_lambda_.29} parent=0 // pred_fallthru
    _

// kernel: _lambda_.36
$region0: #{_lambda_.36}
  #allocation0 [shape = 'u32[]', space=smem, size = 0x4, offset = 0x4, fixed_abs, tag = 'smem constant byte address 0x4 - core index']
  #allocation1 [shape = 'u32[144,128]{1,0:T(1,128)}', space=vmem, size = 0x12000, scoped, tag = 'internal scratch']
  %s0 = inlined_call_operand.vmem [shape: f32[16,32], index: 0, kind: input, shape index: {}]
  %s1 = inlined_call_operand.vmem [shape: f32[1,32], index: 1, kind: input, shape index: {}]
  %s2 = inlined_call_operand.vmem [shape: f32[1,32], index: 2, kind: input, shape index: {}]
  %s3 = inlined_call_operand.vmem [shape: f32[16,32], index: 3, kind: output, shape index: {}]
  %s4 = sld [smem:[#allocation0]]
  $region22: #{_lambda_.36} parent=0
    _
  %s6 = ssub.s32 1, %s4
  %s7 = scalar_select 0, %s6, %s4
  // Predicated region
  $region2: #{_lambda_.36} parent=0 // pred_check
    _
  $region3: #{_lambda_.36} parent=0 // pred_check_branch
    %9 = sbr.rel (0) target = $region5
  $region4: #{_lambda_.36} parent=0 // pred_region
    _
  $region5: #{_lambda_.36} parent=0 // pred_fallthru
    _
  // Predicated region
  $region6: #{_lambda_.36} parent=0 // pred_check
    _
  $region7: #{_lambda_.36} parent=0 // pred_check_branch
    %11 = sbr.rel (0) target = $region9
  $region8: #{_lambda_.36} parent=0 // pred_region
    _
  $region9: #{_lambda_.36} parent=0 // pred_fallthru
    _
  // Predicated region
  $region10: #{_lambda_.36} parent=0 // pred_check
    _
  $region11: #{_lambda_.36} parent=0 // pred_check_branch
    %13 = sbr.rel (0) target = $region13
  $region12: #{_lambda_.36} parent=0 // pred_region
    _
  $region13: #{_lambda_.36} parent=0 // pred_fallthru
    _
  %v14 = vld [vmem:[%s0] sm:$0xff]
  %v15 = vld [vmem:[%s0 + $0x8] sm:$0xff]
  %vm16 = vcmask 261120
  %v17 = vsel %vm16, %v14, 0.0
  %18 = vadd.xlane.f32.xlu0 %v17
  %v19 = vpop.xlane.xlu0 %18
  %v20 = vsel %vm16, %v15, 0.0
  %21 = vadd.xlane.f32.xlu0 %v20
  %v22 = vpop.xlane.xlu0 %21
  %v23 = vrcp.pop 32.0
  %v24 = vmul.f32 %v19, %v23
  %v25 = vmul.f32 %v22, %v23
  %v26 = vsub.f32 %v14, %v24
  %v27 = vsub.f32 %v15, %v25
  %v28 = vmul.f32 %v26, %v26
  %v29 = vmul.f32 %v27, %v27
  %v30 = vsel %vm16, %v28, 0.0
  %31 = vadd.xlane.f32.xlu0 %v30
  %v32 = vpop.xlane.xlu0 %31
  %v33 = vsel %vm16, %v29, 0.0
  %34 = vadd.xlane.f32.xlu0 %v33
  %v35 = vpop.xlane.xlu0 %34
  %v36 = vmul.f32 %v32, %v23
  %v37 = vmul.f32 %v35, %v23
  %v38 = vadd.f32 %v36, 1e-06
  %v39 = vadd.f32 %v37, 1e-06
  %v40 = vrsqrt.pop %v38
  %v41 = vrsqrt.pop %v39
  %v42 = vmul.f32 %v26, %v40
  %v43 = vmul.f32 %v27, %v41
  %v44 = vld [vmem:[%s1] sm:$0x1]
  %v46 = vlaneseq
  %v47 = vshrl.u32 %v46, 7
  %v48 = vsub.s32 0, %v47
  %v49 = vrot.slane %v44, %v48
  %v51 = vmul.f32 %v42, %v49
  %v52 = vmul.f32 %v43, %v49
  %v53 = vld [vmem:[%s2] sm:$0x1]
  %v55 = vlaneseq
  %v56 = vshrl.u32 %v55, 7
  %v57 = vsub.s32 0, %v56
  %v58 = vrot.slane %v53, %v57
  %v60 = vadd.f32 %v51, %v58
  %v61 = vadd.f32 %v52, %v58
  %62 = vst.msk [vmem:[%s3] sm:$0xff] %vm16, %v60
  %63 = vst.msk [vmem:[%s3 + $0x8] sm:$0xff] %vm16, %v61
  // Predicated region
  $region14: #{_lambda_.36} parent=0 // pred_check
    _
  $region15: #{_lambda_.36} parent=0 // pred_check_branch
    %65 = sbr.rel (0) target = $region17
  $region16: #{_lambda_.36} parent=0 // pred_region
    _
  $region17: #{_lambda_.36} parent=0 // pred_fallthru
    _
  // Predicated region
  $region18: #{_lambda_.36} parent=0 // pred_check
    _
  $region19: #{_lambda_.36} parent=0 // pred_check_branch
    %67 = sbr.rel (0) target = $region21
  $region20: #{_lambda_.36} parent=0 // pred_region
    _
  $region21: #{_lambda_.36} parent=0 // pred_fallthru
    _

</llo_original>
